<compile_context>
chip_gen: v7x
topology: tpu7x:2x2x1
jax: 0.10.0
libtpu: 0.0.40
codegen_flags: <defaults>
</compile_context>

<pallas_src>
import math

import numpy as np
import jax
import jax.numpy as jnp
from jax import lax
from jax.experimental import pallas as pl
from jax.experimental.pallas import tpu as pltpu


def _round_up(x, m):
    return ((x + m - 1) // m) * m


def _vmem_capacity_bytes():
    """Per-core VMEM capacity; conservative fallback if the query fails."""
    try:
        info = pltpu.get_tpu_info()
        cap = getattr(info, "vmem_capacity_bytes", None)
        if cap:
            return int(cap)
    except Exception:
        pass
    return 64 << 20  # v7x-sized conservative default


def _gru_dense_kernel(gx_ref, whh_ref, bhn_ref, wd_ref, bd_ref,
                      out_ref, h_ref, hall_ref):
    """Grid = (T_tiles + 1, V_tiles).

    gx_ref : (t_tile, Bp, 3*Hp) f32   precomputed gate pre-activations
    whh_ref: (Hp, 3*Hp)        bf16   recurrent weights (gate-blocked)
    bhn_ref: (1, Hp)           f32    b_hh for the n gate
    wd_ref : (Hp, v_tile)      bf16   dense projection chunk (W_dense^T)
    bd_ref : (1, v_tile)       f32    dense bias chunk
    out_ref: (t_tile, Bp, v_tile) f32 logits chunk
    h_ref  : (Bp, Hp)          f32    hidden state (persists across grid steps)
    hall_ref: (2*t_tile, Bp, Hp) f32  2-slot per-tile hidden history
    """
    t_tile, bp, _ = gx_ref.shape
    hp = h_ref.shape[1]
    v_tile = out_ref.shape[2]

    i = pl.program_id(0)
    j = pl.program_id(1)
    n_t = pl.num_programs(0) - 1   # real T tiles; the last grid row only drains

    # h0 = zeros (PyTorch default when states=None); only on the very first step.
    @pl.when(jnp.logical_and(i == 0, j == 0))
    def _init():
        h_ref[...] = jnp.zeros_like(h_ref)

    # ---- Dense projection, pipelined one step behind the recurrence.
    # At (i, 0): chunk (n_v-1) of tile i-1.  At (i, j>=1): chunk j-1 of tile i.
    # (The wd/bd/out index maps in the wrapper select the matching blocks.)
    # Placed BEFORE the recurrence so its hall loads are not ordered after the
    # recurrence's hall stores (different slots, but may-alias to the compiler).
    proj_tile = i - jnp.where(j == 0, 1, 0)

    @pl.when(jnp.logical_and(proj_tile >= 0, proj_tile < n_t))
    def _project():
        slot = lax.rem(proj_tile, 2)
        base = pl.multiple_of(slot * t_tile, t_tile)
        h_all = hall_ref[pl.ds(base, t_tile)]                 # (t_tile, Bp, Hp) f32
        h_all = h_all.reshape(t_tile * bp, hp).astype(jnp.bfloat16)
        logits = jnp.dot(h_all, wd_ref[...],
                         preferred_element_type=jnp.float32) + bd_ref[...]
        out_ref[...] = logits.reshape(t_tile, bp, v_tile)

    # ---- GRU recurrence for T-tile i (runs once per tile, at j == 0).
    @pl.when(jnp.logical_and(j == 0, i < n_t))
    def _recurrence():
        slot = lax.rem(i, 2)
        base = slot * t_tile
        bhn = jnp.broadcast_to(bhn_ref[...], (bp, hp))        # hoisted broadcast

        def step(t, h):
            gx = gx_ref[t]                                    # (Bp, 3Hp) f32
            gh = jnp.dot(h.astype(jnp.bfloat16), whh_ref[...],
                         preferred_element_type=jnp.float32)  # (Bp, 3Hp) f32
            # PyTorch GRU gate order [r, z, n]; slices are 128-aligned views.
            r = jax.nn.sigmoid(gx[:, 0:hp] + gh[:, 0:hp])
            z = jax.nn.sigmoid(gx[:, hp:2 * hp] + gh[:, hp:2 * hp])
            n = jnp.tanh(gx[:, 2 * hp:3 * hp] + r * (gh[:, 2 * hp:3 * hp] + bhn))
            h_new = (1.0 - z) * n + z * h
            hall_ref[base + t] = h_new
            return h_new

        h_ref[...] = lax.fori_loop(0, t_tile, step, h_ref[...],
                                   unroll=min(8, t_tile))


def nextnet_forward(token_ids, params, *, t_tile=None, v_tile=None):
    """Pallas implementation of NextNet.forward (GRU path, states=None)."""
    emb = params["embedding"].astype(jnp.float32)   # (V, E)
    w_ih = params["w_ih"]                           # (3H, E)
    w_hh = params["w_hh"]                           # (3H, H)
    b_ih = params["b_ih"]                           # (3H,)
    b_hh = params["b_hh"]                           # (3H,)
    w_d = params["w_dense"]                         # (V, H)
    b_d = params["b_dense"]                         # (V,)

    V = emb.shape[0]
    H = w_hh.shape[1]
    T, B = token_ids.shape

    Hp = _round_up(H, 128)    # lane-aligned gate blocks
    Bp = _round_up(B, 8)      # sublane-aligned batch

    # ---- Generation-aware tile selection (VMEM differs: 128 MiB v5e/v6e, 64 MiB v7x).
    vmem_cap = _vmem_capacity_bytes()
    budget = max(int(0.40 * vmem_cap), 16 << 20)

    def vmem_est(tt, vt):
        gx_t = tt * Bp * 3 * Hp * 4          # f32 streamed input tile
        out_t = tt * Bp * vt * 4             # f32 streamed output tile
        wd_t = Hp * vt * 2                   # bf16 streamed weight chunk
        whh_t = Hp * 3 * Hp * 2              # bf16 resident recurrent weights
        small = (Hp + vt) * 4 * 2
        scratch = Bp * Hp * 4 + 2 * tt * Bp * Hp * 4
        temps = tt * Bp * vt * 4 + tt * Bp * Hp * 2   # logits / h_all live values
        return 2 * (gx_t + out_t + wd_t + whh_t + small) + scratch + temps

    if t_tile is None or v_tile is None:
        t_cands = [t for t in (64, 32, 16, 8) if t <= max(8, _round_up(T, 8))]
        v_cands = [v for v in (2048, 1024, 512, 256, 128)
                   if v <= max(128, _round_up(V, 128))]
        combos = sorted(((t, v) for t in t_cands for v in v_cands),
                        key=lambda tv: (tv[0] * tv[1], tv[1]), reverse=True)
        sel = (t_cands[-1], v_cands[-1])
        for t, v in combos:
            if vmem_est(t, v) <= budget:
                sel = (t, v)
                break
        if t_tile is None:
            t_tile = sel[0]
        if v_tile is None:
            v_tile = sel[1]

    Vp = _round_up(V, v_tile)
    Tp = _round_up(T, t_tile)
    n_t = Tp // t_tile
    n_v = Vp // v_tile

    # ---- Fused input-transform lookup table (glue, plain JAX): (V, 3*Hp).
    # Gate g occupies columns [g*Hp, g*Hp + H); padded columns stay zero so the
    # padded hidden lanes remain exactly zero through the recurrence.
    gx_tab = emb @ w_ih.T + b_ih
    gx_tab = gx_tab.at[:, 0:H].add(b_hh[0:H])          # fold b_hr into r
    gx_tab = gx_tab.at[:, H:2 * H].add(b_hh[H:2 * H])  # fold b_hz into z
    gx_packed = jnp.zeros((V, 3 * Hp), jnp.float32)
    for g in range(3):
        gx_packed = gx_packed.at[:, g * Hp:g * Hp + H].set(
            gx_tab[:, g * H:(g + 1) * H])

    # Embedding gather fused with the input transform (no in-kernel x matmul).
    gx = gx_packed[token_ids]                           # (T, B, 3Hp) f32
    # One extra T-tile of zeros for the pipeline-drain grid row.
    gx = jnp.pad(gx, ((0, Tp + t_tile - T), (0, Bp - B), (0, 0)))

    # ---- Recurrent weights, gate-blocked, lane-aligned, bf16.
    whh = jnp.zeros((Hp, 3 * Hp), jnp.float32)
    for g in range(3):
        whh = whh.at[:H, g * Hp:g * Hp + H].set(w_hh[g * H:(g + 1) * H, :].T)
    whh = whh.astype(jnp.bfloat16)
    bhn = jnp.zeros((1, Hp), jnp.float32).at[0, :H].set(b_hh[2 * H:3 * H])

    # ---- Dense projection weights, padded, bf16 (streamed in v_tile chunks).
    wd = jnp.zeros((Hp, Vp), jnp.float32).at[:H, :V].set(w_d.T).astype(jnp.bfloat16)
    bd = jnp.zeros((1, Vp), jnp.float32).at[0, :V].set(b_d)

    grid = (n_t + 1, n_v)   # extra T row drains the one-tile-behind projection

    # wd/bd chunk used at step (i, j): chunk n_v-1 when j == 0 (previous tile's
    # last chunk), else chunk j-1.
    def wd_index(i, j):
        return (0, (j + n_v - 1) % n_v)

    # Output block written at (i, j): tile i-1 chunk n_v-1 when j == 0 (i > 0),
    # tile i chunk j-1 otherwise.  At (0, 0) nothing is written; the index is
    # aliased to (0, 0, 0) so the untouched buffer is overwritten at (0, 1)
    # before any writeback (blocks are only ever visited consecutively).
    def out_index(i, j):
        i_out = jnp.where(j == 0, jnp.maximum(i - 1, 0), i)
        j_out = jnp.where(j == 0, jnp.where(i == 0, 0, n_v - 1), j - 1)
        return (i_out, 0, j_out)

    est = vmem_est(t_tile, v_tile)
    vmem_limit = int(min(int(0.90 * vmem_cap), max(2 * est, 32 << 20)))

    cost = pl.CostEstimate(
        flops=int(2 * Tp * Bp * Hp * 3 * Hp + 2 * Tp * Bp * Hp * Vp),
        transcendentals=int(3 * Tp * Bp * Hp),
        bytes_accessed=int(4 * (Tp + t_tile) * Bp * 3 * Hp
                           + 4 * (Tp + t_tile) * Bp * Vp
                           + 2 * (n_t + 1) * Hp * Vp + 2 * Hp * 3 * Hp),
    )

    kernel = pl.pallas_call(
        _gru_dense_kernel,
        out_shape=jax.ShapeDtypeStruct(((n_t + 1) * t_tile, Bp, Vp), jnp.float32),
        grid_spec=pltpu.PrefetchScalarGridSpec(
            num_scalar_prefetch=0,
            grid=grid,
            in_specs=[
                pl.BlockSpec((t_tile, Bp, 3 * Hp), lambda i, j: (i, 0, 0)),   # gx
                pl.BlockSpec((Hp, 3 * Hp), lambda i, j: (0, 0)),              # whh
                pl.BlockSpec((1, Hp), lambda i, j: (0, 0)),                   # bhn
                pl.BlockSpec((Hp, v_tile), wd_index),                         # wd
                pl.BlockSpec((1, v_tile), wd_index),                          # bd
            ],
            out_specs=pl.BlockSpec((t_tile, Bp, v_tile), out_index),
            scratch_shapes=[
                pltpu.VMEM((Bp, Hp), jnp.float32),               # hidden state
                pltpu.VMEM((2 * t_tile, Bp, Hp), jnp.float32),   # 2-slot h history
            ],
        ),
        compiler_params=pltpu.CompilerParams(
            dimension_semantics=("arbitrary", "arbitrary"),
            vmem_limit_bytes=vmem_limit,
        ),
        cost_estimate=cost,
    )
    out = kernel(gx, whh, bhn, wd, bd)
    return out[:T, :B, :V]


def reference_forward(token_ids, params):
    """Pure-JAX f32 reference (same math as torch Embedding + GRU + Linear)."""
    x = params["embedding"][token_ids].astype(jnp.float32)   # (T, B, E)
    H = params["w_hh"].shape[1]
    w_ih_t = params["w_ih"].T
    w_hh_t = params["w_hh"].T
    w_d_t = params["w_dense"].T

    def step(h, x_t):
        gx = x_t @ w_ih_t + params["b_ih"]
        gh = h @ w_hh_t + params["b_hh"]
        r = jax.nn.sigmoid(gx[:, :H] + gh[:, :H])
        z = jax.nn.sigmoid(gx[:, H:2 * H] + gh[:, H:2 * H])
        n = jnp.tanh(gx[:, 2 * H:] + r * gh[:, 2 * H:])
        h_new = (1.0 - z) * n + z * h
        return h_new, h_new @ w_d_t + params["b_dense"]

    h0 = jnp.zeros((x.shape[1], H), jnp.float32)
    _, out = lax.scan(step, h0, x)
    return out                                                # (T, B, V)


def init_params(key, vocab_size, hidden_nodes):
    """Deterministic init mirroring the PyTorch module's parameter shapes."""
    n_embed = math.ceil(vocab_size ** 0.25)
    k = 1.0 / math.sqrt(hidden_nodes)
    keys = jax.random.split(key, 7)
    return {
        "embedding": jax.random.normal(keys[0], (vocab_size, n_embed), jnp.float32),
        "w_ih": jax.random.uniform(keys[1], (3 * hidden_nodes, n_embed),
                                   jnp.float32, -k, k),
        "w_hh": jax.random.uniform(keys[2], (3 * hidden_nodes, hidden_nodes),
                                   jnp.float32, -k, k),
        "b_ih": jax.random.uniform(keys[3], (3 * hidden_nodes,), jnp.float32, -k, k),
        "b_hh": jax.random.uniform(keys[4], (3 * hidden_nodes,), jnp.float32, -k, k),
        "w_dense": jax.random.uniform(keys[5], (vocab_size, hidden_nodes),
                                      jnp.float32, -k, k),
        "b_dense": jax.random.uniform(keys[6], (vocab_size,), jnp.float32, -k, k),
    }


def _run_case(key, vocab_size, hidden_nodes, T, B, **tile_kwargs):
    pkey, ikey = jax.random.split(key)
    params = init_params(pkey, vocab_size, hidden_nodes)
    token_ids = jax.random.randint(ikey, (T, B), 0, vocab_size, dtype=jnp.int32)

    out = jax.block_until_ready(nextnet_forward(token_ids, params, **tile_kwargs))
    ref = reference_forward(token_ids, params)
    # bf16 MXU operands vs f32 reference -> loosened tolerance (per review note).
    np.testing.assert_allclose(np.asarray(out), np.asarray(ref),
                               rtol=5e-2, atol=5e-2)


if __name__ == "__main__":
    root = jax.random.PRNGKey(0)

    # Case 1: tiny single-tile config (grid (2, 1)); auto tile selection.
    _run_case(jax.random.fold_in(root, 0),
              vocab_size=64, hidden_nodes=32, T=8, B=2)

    # Case 2: multi-tile config exercising the T-pipeline (2-slot history),
    # V streaming, and T/B/V padding (grid (3, 3) with t_tile=8, v_tile=128).
    _run_case(jax.random.fold_in(root, 1),
              vocab_size=300, hidden_nodes=32, T=13, B=3,
              t_tile=8, v_tile=128)

    print("KERNEL_OK")
</pallas_src>

<mosaic_0001>
module attributes {stable_mosaic.version = 11 : i64} {
  func.func @_gru_dense_kernel(%arg0: i32, %arg1: i32, %arg2: memref<8x8x384xf32, #tpu.memory_space<vmem>>, %arg3: memref<128x384xbf16, #tpu.memory_space<vmem>>, %arg4: memref<1x128xf32, #tpu.memory_space<vmem>>, %arg5: memref<128x128xbf16, #tpu.memory_space<vmem>>, %arg6: memref<1x128xf32, #tpu.memory_space<vmem>>, %arg7: memref<8x8x128xf32, #tpu.memory_space<vmem>>, %arg8: memref<8x128xf32, #tpu.memory_space<vmem>>, %arg9: memref<16x8x128xf32, #tpu.memory_space<vmem>>) attributes {dimension_semantics = [#tpu.dimension_semantics<arbitrary>, #tpu.dimension_semantics<arbitrary>], iteration_bounds = array<i64: 2, 1>, scalar_prefetch = 0 : i64, scratch_operands = 2 : i64, tpu.core_type = #tpu.core_type<tc>, window_params = [{transform_indices = @transform_0, window_bounds = array<i64: 8, 8, 384>}, {pipeline_mode = #tpu.pipeline_mode<synchronous>, transform_indices = @transform_1, window_bounds = array<i64: 128, 384>}, {pipeline_mode = #tpu.pipeline_mode<synchronous>, transform_indices = @transform_2, window_bounds = array<i64: 1, 128>}, {transform_indices = @transform_3, window_bounds = array<i64: 128, 128>}, {transform_indices = @transform_4, window_bounds = array<i64: 1, 128>}, {transform_indices = @transform_5, window_bounds = array<i64: 8, 8, 128>}]} {
    %c0_i32 = arith.constant 0 : i32
    %0 = arith.cmpi eq, %arg0, %c0_i32 : i32
    %c0_i32_0 = arith.constant 0 : i32
    %1 = arith.cmpi eq, %arg1, %c0_i32_0 : i32
    %2 = arith.andi %0, %1 : i1
    %3 = arith.extui %2 : i1 to i32
    %c0_i32_1 = arith.constant 0 : i32
    %4 = arith.cmpi ne, %3, %c0_i32_1 : i32
    scf.if %4 {
      %cst = arith.constant 0.000000e+00 : f32
      %18 = vector.broadcast %cst : f32 to vector<8x128xf32>
      %c0 = arith.constant 0 : index
      %c0_10 = arith.constant 0 : index
      %19 = vector.load %arg8[%c0, %c0_10] : memref<8x128xf32, #tpu.memory_space<vmem>>, vector<8x128xf32>
      tpu.vector_store %arg8[%c0, %c0_10], %18 {strides = array<i32>} : memref<8x128xf32, #tpu.memory_space<vmem>>, vector<8x128xf32>,
    } else {
    }
    %c0_i32_2 = arith.constant 0 : i32
    %5 = arith.cmpi eq, %arg1, %c0_i32_2 : i32
    %c1_i32 = arith.constant 1 : i32
    %c0_i32_3 = arith.constant 0 : i32
    %6 = arith.select %5, %c1_i32, %c0_i32_3 : i32
    %7 = arith.subi %arg0, %6 : i32
    %c0_i32_4 = arith.constant 0 : i32
    %8 = arith.cmpi sge, %7, %c0_i32_4 : i32
    %c1_i32_5 = arith.constant 1 : i32
    %9 = arith.cmpi slt, %7, %c1_i32_5 : i32
    %10 = arith.andi %8, %9 : i1
    %11 = arith.extui %10 : i1 to i32
    %c0_i32_6 = arith.constant 0 : i32
    %12 = arith.cmpi ne, %11, %c0_i32_6 : i32
    scf.if %12 {
      %c2_i32 = arith.constant 2 : i32
      %18 = arith.remsi %7, %c2_i32 : i32
      %c8_i32 = arith.constant 8 : i32
      %19 = arith.muli %18, %c8_i32 : i32
      %20 = tpu.assume_multiple %19, 8 : i32
      %21 = arith.index_cast %20 : i32 to index
      %c0 = arith.constant 0 : index
      %c0_10 = arith.constant 0 : index
      %22 = vector.load %arg9[%21, %c0, %c0_10] : memref<16x8x128xf32, #tpu.memory_space<vmem>>, vector<8x8x128xf32>
      %23 = vector.shape_cast %22 : vector<8x8x128xf32> to vector<64x128xf32>
      %24 = arith.truncf %23 : vector<64x128xf32> to vector<64x128xbf16>
      %c0_11 = arith.constant 0 : index
      %c0_12 = arith.constant 0 : index
      %25 = vector.load %arg5[%c0_11, %c0_12] : memref<128x128xbf16, #tpu.memory_space<vmem>>, vector<128x128xbf16>
      %cst = arith.constant dense<0.000000e+00> : vector<64x128xf32>
      %26 = tpu.matmul %24, %25, %cst {dimension_numbers = #tpu.dot_dimension_numbers<[1], [0], [0], [1], [0, 0, 1, 1], [], []>} : vector<64x128xbf16>, vector<128x128xbf16>, vector<64x128xf32> -> vector<64x128xf32>
      %c0_13 = arith.constant 0 : index
      %c0_14 = arith.constant 0 : index
      %27 = vector.load %arg6[%c0_13, %c0_14] : memref<1x128xf32, #tpu.memory_space<vmem>>, vector<1x128xf32>
      %28 = vector.broadcast %27 : vector<1x128xf32> to vector<64x128xf32>
      %29 = arith.addf %26, %28 : vector<64x128xf32>
      %30 = vector.shape_cast %29 : vector<64x128xf32> to vector<8x8x128xf32>
      %c0_15 = arith.constant 0 : index
      %c0_16 = arith.constant 0 : index
      %c0_17 = arith.constant 0 : index
      %31 = vector.load %arg7[%c0_15, %c0_16, %c0_17] : memref<8x8x128xf32, #tpu.memory_space<vmem>>, vector<8x8x128xf32>
      tpu.vector_store %arg7[%c0_15, %c0_16, %c0_17], %30 {strides = array<i32>} : memref<8x8x128xf32, #tpu.memory_space<vmem>>, vector<8x8x128xf32>,
    } else {
    }
    %c0_i32_7 = arith.constant 0 : i32
    %13 = arith.cmpi eq, %arg1, %c0_i32_7 : i32
    %c1_i32_8 = arith.constant 1 : i32
    %14 = arith.cmpi slt, %arg0, %c1_i32_8 : i32
    %15 = arith.andi %13, %14 : i1
    %16 = arith.extui %15 : i1 to i32
    %c0_i32_9 = arith.constant 0 : i32
    %17 = arith.cmpi ne, %16, %c0_i32_9 : i32
    scf.if %17 {
      %c2_i32 = arith.constant 2 : i32
      %18 = arith.remsi %arg0, %c2_i32 : i32
      %c8_i32 = arith.constant 8 : i32
      %19 = arith.muli %18, %c8_i32 : i32
      %c0 = arith.constant 0 : index
      %c0_10 = arith.constant 0 : index
      %20 = vector.load %arg4[%c0, %c0_10] : memref<1x128xf32, #tpu.memory_space<vmem>>, vector<1x128xf32>
      %21 = vector.shape_cast %20 : vector<1x128xf32> to vector<1x128xf32>
      %22 = vector.broadcast %21 : vector<1x128xf32> to vector<8x128xf32>
      %c0_11 = arith.constant 0 : index
      %c0_12 = arith.constant 0 : index
      %23 = vector.load %arg8[%c0_11, %c0_12] : memref<8x128xf32, #tpu.memory_space<vmem>>, vector<8x128xf32>
      %c0_i32_13 = arith.constant 0 : i32
      %24 = arith.index_cast %c0_i32_13 : i32 to index
      %c0_14 = arith.constant 0 : index
      %c0_15 = arith.constant 0 : index
      %25 = vector.load %arg2[%24, %c0_14, %c0_15] : memref<8x8x384xf32, #tpu.memory_space<vmem>>, vector<1x8x384xf32>
      %26 = vector.shape_cast %25 : vector<1x8x384xf32> to vector<8x384xf32>
      %27 = arith.truncf %23 : vector<8x128xf32> to vector<8x128xbf16>
      %c0_16 = arith.constant 0 : index
      %c0_17 = arith.constant 0 : index
      %28 = vector.load %arg3[%c0_16, %c0_17] : memref<128x384xbf16, #tpu.memory_space<vmem>>, vector<128x384xbf16>
      %cst = arith.constant dense<0.000000e+00> : vector<8x384xf32>
      %29 = tpu.matmul %27, %28, %cst {dimension_numbers = #tpu.dot_dimension_numbers<[1], [0], [0], [1], [0, 0, 1, 1], [], []>} : vector<8x128xbf16>, vector<128x384xbf16>, vector<8x384xf32> -> vector<8x384xf32>
      %30 = vector.extract_strided_slice %26 {offsets = [0, 0], sizes = [8, 128], strides = [1, 1]} : vector<8x384xf32> to vector<8x128xf32>
      %31 = vector.extract_strided_slice %29 {offsets = [0, 0], sizes = [8, 128], strides = [1, 1]} : vector<8x384xf32> to vector<8x128xf32>
      %32 = arith.addf %30, %31 : vector<8x128xf32>
      %33 = arith.negf %32 : vector<8x128xf32>
      %34 = math.exp %33 : vector<8x128xf32>
      %cst_18 = arith.constant 1.000000e+00 : f32
      %35 = vector.broadcast %cst_18 : f32 to vector<8x128xf32>
      %36 = arith.addf %35, %34 : vector<8x128xf32>
      %37 = arith.divf %35, %36 : vector<8x128xf32>
      %38 = vector.extract_strided_slice %26 {offsets = [0, 128], sizes = [8, 128], strides = [1, 1]} : vector<8x384xf32> to vector<8x128xf32>
      %39 = vector.extract_strided_slice %29 {offsets = [0, 128], sizes = [8, 128], strides = [1, 1]} : vector<8x384xf32> to vector<8x128xf32>
      %40 = arith.addf %38, %39 : vector<8x128xf32>
      %41 = arith.negf %40 : vector<8x128xf32>
      %42 = math.exp %41 : vector<8x128xf32>
      %cst_19 = arith.constant 1.000000e+00 : f32
      %43 = vector.broadcast %cst_19 : f32 to vector<8x128xf32>
      %44 = arith.addf %43, %42 : vector<8x128xf32>
      %45 = arith.divf %43, %44 : vector<8x128xf32>
      %46 = vector.extract_strided_slice %26 {offsets = [0, 256], sizes = [8, 128], strides = [1, 1]} : vector<8x384xf32> to vector<8x128xf32>
      %47 = vector.extract_strided_slice %29 {offsets = [0, 256], sizes = [8, 128], strides = [1, 1]} : vector<8x384xf32> to vector<8x128xf32>
      %48 = arith.addf %47, %22 : vector<8x128xf32>
      %49 = arith.mulf %37, %48 : vector<8x128xf32>
      %50 = arith.addf %46, %49 : vector<8x128xf32>
      %51 = math.tanh %50 : vector<8x128xf32>
      %cst_20 = arith.constant 1.000000e+00 : f32
      %52 = vector.broadcast %cst_20 : f32 to vector<8x128xf32>
      %53 = arith.subf %52, %45 : vector<8x128xf32>
      %54 = arith.mulf %53, %51 : vector<8x128xf32>
      %55 = arith.mulf %45, %23 : vector<8x128xf32>
      %56 = arith.addf %54, %55 : vector<8x128xf32>
      %57 = arith.addi %19, %c0_i32_13 : i32
      %58 = arith.index_cast %57 : i32 to index
      %c0_21 = arith.constant 0 : index
      %c0_22 = arith.constant 0 : index
      %59 = vector.load %arg9[%58, %c0_21, %c0_22] : memref<16x8x128xf32, #tpu.memory_space<vmem>>, vector<1x8x128xf32>
      %60 = vector.shape_cast %59 : vector<1x8x128xf32> to vector<8x128xf32>
      %61 = vector.shape_cast %56 : vector<8x128xf32> to vector<1x8x128xf32>
      tpu.vector_store %arg9[%58, %c0_21, %c0_22], %61 {strides = array<i32>} : memref<16x8x128xf32, #tpu.memory_space<vmem>>, vector<1x8x128xf32>,
      %c1_i32_23 = arith.constant 1 : i32
      %62 = arith.index_cast %c1_i32_23 : i32 to index
      %c0_24 = arith.constant 0 : index
      %c0_25 = arith.constant 0 : index
      %63 = vector.load %arg2[%62, %c0_24, %c0_25] : memref<8x8x384xf32, #tpu.memory_space<vmem>>, vector<1x8x384xf32>
      %64 = vector.shape_cast %63 : vector<1x8x384xf32> to vector<8x384xf32>
      %65 = arith.truncf %56 : vector<8x128xf32> to vector<8x128xbf16>
      %c0_26 = arith.constant 0 : index
      %c0_27 = arith.constant 0 : index
      %66 = vector.load %arg3[%c0_26, %c0_27] : memref<128x384xbf16, #tpu.memory_space<vmem>>, vector<128x384xbf16>
      %cst_28 = arith.constant dense<0.000000e+00> : vector<8x384xf32>
      %67 = tpu.matmul %65, %66, %cst_28 {dimension_numbers = #tpu.dot_dimension_numbers<[1], [0], [0], [1], [0, 0, 1, 1], [], []>} : vector<8x128xbf16>, vector<128x384xbf16>, vector<8x384xf32> -> vector<8x384xf32>
      %68 = vector.extract_strided_slice %64 {offsets = [0, 0], sizes = [8, 128], strides = [1, 1]} : vector<8x384xf32> to vector<8x128xf32>
      %69 = vector.extract_strided_slice %67 {offsets = [0, 0], sizes = [8, 128], strides = [1, 1]} : vector<8x384xf32> to vector<8x128xf32>
      %70 = arith.addf %68, %69 : vector<8x128xf32>
      %71 = arith.negf %70 : vector<8x128xf32>
      %72 = math.exp %71 : vector<8x128xf32>
      %cst_29 = arith.constant 1.000000e+00 : f32
      %73 = vector.broadcast %cst_29 : f32 to vector<8x128xf32>
      %74 = arith.addf %73, %72 : vector<8x128xf32>
      %75 = arith.divf %73, %74 : vector<8x128xf32>
      %76 = vector.extract_strided_slice %64 {offsets = [0, 128], sizes = [8, 128], strides = [1, 1]} : vector<8x384xf32> to vector<8x128xf32>
      %77 = vector.extract_strided_slice %67 {offsets = [0, 128], sizes = [8, 128], strides = [1, 1]} : vector<8x384xf32> to vector<8x128xf32>
      %78 = arith.addf %76, %77 : vector<8x128xf32>
      %79 = arith.negf %78 : vector<8x128xf32>
      %80 = math.exp %79 : vector<8x128xf32>
      %cst_30 = arith.constant 1.000000e+00 : f32
      %81 = vector.broadcast %cst_30 : f32 to vector<8x128xf32>
      %82 = arith.addf %81, %80 : vector<8x128xf32>
      %83 = arith.divf %81, %82 : vector<8x128xf32>
      %84 = vector.extract_strided_slice %64 {offsets = [0, 256], sizes = [8, 128], strides = [1, 1]} : vector<8x384xf32> to vector<8x128xf32>
      %85 = vector.extract_strided_slice %67 {offsets = [0, 256], sizes = [8, 128], strides = [1, 1]} : vector<8x384xf32> to vector<8x128xf32>
      %86 = arith.addf %85, %22 : vector<8x128xf32>
      %87 = arith.mulf %75, %86 : vector<8x128xf32>
      %88 = arith.addf %84, %87 : vector<8x128xf32>
      %89 = math.tanh %88 : vector<8x128xf32>
      %cst_31 = arith.constant 1.000000e+00 : f32
      %90 = vector.broadcast %cst_31 : f32 to vector<8x128xf32>
      %91 = arith.subf %90, %83 : vector<8x128xf32>
      %92 = arith.mulf %91, %89 : vector<8x128xf32>
      %93 = arith.mulf %83, %56 : vector<8x128xf32>
      %94 = arith.addf %92, %93 : vector<8x128xf32>
      %95 = arith.addi %19, %c1_i32_23 : i32
      %96 = arith.index_cast %95 : i32 to index
      %c0_32 = arith.constant 0 : index
      %c0_33 = arith.constant 0 : index
      %97 = vector.load %arg9[%96, %c0_32, %c0_33] : memref<16x8x128xf32, #tpu.memory_space<vmem>>, vector<1x8x128xf32>
      %98 = vector.shape_cast %97 : vector<1x8x128xf32> to vector<8x128xf32>
      %99 = vector.shape_cast %94 : vector<8x128xf32> to vector<1x8x128xf32>
      tpu.vector_store %arg9[%96, %c0_32, %c0_33], %99 {strides = array<i32>} : memref<16x8x128xf32, #tpu.memory_space<vmem>>, vector<1x8x128xf32>,
      %c2_i32_34 = arith.constant 2 : i32
      %100 = arith.index_cast %c2_i32_34 : i32 to index
      %c0_35 = arith.constant 0 : index
      %c0_36 = arith.constant 0 : index
      %101 = vector.load %arg2[%100, %c0_35, %c0_36] : memref<8x8x384xf32, #tpu.memory_space<vmem>>, vector<1x8x384xf32>
      %102 = vector.shape_cast %101 : vector<1x8x384xf32> to vector<8x384xf32>
      %103 = arith.truncf %94 : vector<8x128xf32> to vector<8x128xbf16>
      %c0_37 = arith.constant 0 : index
      %c0_38 = arith.constant 0 : index
      %104 = vector.load %arg3[%c0_37, %c0_38] : memref<128x384xbf16, #tpu.memory_space<vmem>>, vector<128x384xbf16>
      %cst_39 = arith.constant dense<0.000000e+00> : vector<8x384xf32>
      %105 = tpu.matmul %103, %104, %cst_39 {dimension_numbers = #tpu.dot_dimension_numbers<[1], [0], [0], [1], [0, 0, 1, 1], [], []>} : vector<8x128xbf16>, vector<128x384xbf16>, vector<8x384xf32> -> vector<8x384xf32>
      %106 = vector.extract_strided_slice %102 {offsets = [0, 0], sizes = [8, 128], strides = [1, 1]} : vector<8x384xf32> to vector<8x128xf32>
      %107 = vector.extract_strided_slice %105 {offsets = [0, 0], sizes = [8, 128], strides = [1, 1]} : vector<8x384xf32> to vector<8x128xf32>
      %108 = arith.addf %106, %107 : vector<8x128xf32>
      %109 = arith.negf %108 : vector<8x128xf32>
      %110 = math.exp %109 : vector<8x128xf32>
      %cst_40 = arith.constant 1.000000e+00 : f32
      %111 = vector.broadcast %cst_40 : f32 to vector<8x128xf32>
      %112 = arith.addf %111, %110 : vector<8x128xf32>
      %113 = arith.divf %111, %112 : vector<8x128xf32>
      %114 = vector.extract_strided_slice %102 {offsets = [0, 128], sizes = [8, 128], strides = [1, 1]} : vector<8x384xf32> to vector<8x128xf32>
      %115 = vector.extract_strided_slice %105 {offsets = [0, 128], sizes = [8, 128], strides = [1, 1]} : vector<8x384xf32> to vector<8x128xf32>
      %116 = arith.addf %114, %115 : vector<8x128xf32>
      %117 = arith.negf %116 : vector<8x128xf32>
      %118 = math.exp %117 : vector<8x128xf32>
      %cst_41 = arith.constant 1.000000e+00 : f32
      %119 = vector.broadcast %cst_41 : f32 to vector<8x128xf32>
      %120 = arith.addf %119, %118 : vector<8x128xf32>
      %121 = arith.divf %119, %120 : vector<8x128xf32>
      %122 = vector.extract_strided_slice %102 {offsets = [0, 256], sizes = [8, 128], strides = [1, 1]} : vector<8x384xf32> to vector<8x128xf32>
      %123 = vector.extract_strided_slice %105 {offsets = [0, 256], sizes = [8, 128], strides = [1, 1]} : vector<8x384xf32> to vector<8x128xf32>
      %124 = arith.addf %123, %22 : vector<8x128xf32>
      %125 = arith.mulf %113, %124 : vector<8x128xf32>
      %126 = arith.addf %122, %125 : vector<8x128xf32>
      %127 = math.tanh %126 : vector<8x128xf32>
      %cst_42 = arith.constant 1.000000e+00 : f32
      %128 = vector.broadcast %cst_42 : f32 to vector<8x128xf32>
      %129 = arith.subf %128, %121 : vector<8x128xf32>
      %130 = arith.mulf %129, %127 : vector<8x128xf32>
      %131 = arith.mulf %121, %94 : vector<8x128xf32>
      %132 = arith.addf %130, %131 : vector<8x128xf32>
      %133 = arith.addi %19, %c2_i32_34 : i32
      %134 = arith.index_cast %133 : i32 to index
      %c0_43 = arith.constant 0 : index
      %c0_44 = arith.constant 0 : index
      %135 = vector.load %arg9[%134, %c0_43, %c0_44] : memref<16x8x128xf32, #tpu.memory_space<vmem>>, vector<1x8x128xf32>
      %136 = vector.shape_cast %135 : vector<1x8x128xf32> to vector<8x128xf32>
      %137 = vector.shape_cast %132 : vector<8x128xf32> to vector<1x8x128xf32>
      tpu.vector_store %arg9[%134, %c0_43, %c0_44], %137 {strides = array<i32>} : memref<16x8x128xf32, #tpu.memory_space<vmem>>, vector<1x8x128xf32>,
      %c3_i32 = arith.constant 3 : i32
      %138 = arith.index_cast %c3_i32 : i32 to index
      %c0_45 = arith.constant 0 : index
      %c0_46 = arith.constant 0 : index
      %139 = vector.load %arg2[%138, %c0_45, %c0_46] : memref<8x8x384xf32, #tpu.memory_space<vmem>>, vector<1x8x384xf32>
      %140 = vector.shape_cast %139 : vector<1x8x384xf32> to vector<8x384xf32>
      %141 = arith.truncf %132 : vector<8x128xf32> to vector<8x128xbf16>
      %c0_47 = arith.constant 0 : index
      %c0_48 = arith.constant 0 : index
      %142 = vector.load %arg3[%c0_47, %c0_48] : memref<128x384xbf16, #tpu.memory_space<vmem>>, vector<128x384xbf16>
      %cst_49 = arith.constant dense<0.000000e+00> : vector<8x384xf32>
      %143 = tpu.matmul %141, %142, %cst_49 {dimension_numbers = #tpu.dot_dimension_numbers<[1], [0], [0], [1], [0, 0, 1, 1], [], []>} : vector<8x128xbf16>, vector<128x384xbf16>, vector<8x384xf32> -> vector<8x384xf32>
      %144 = vector.extract_strided_slice %140 {offsets = [0, 0], sizes = [8, 128], strides = [1, 1]} : vector<8x384xf32> to vector<8x128xf32>
      %145 = vector.extract_strided_slice %143 {offsets = [0, 0], sizes = [8, 128], strides = [1, 1]} : vector<8x384xf32> to vector<8x128xf32>
      %146 = arith.addf %144, %145 : vector<8x128xf32>
      %147 = arith.negf %146 : vector<8x128xf32>
      %148 = math.exp %147 : vector<8x128xf32>
      %cst_50 = arith.constant 1.000000e+00 : f32
      %149 = vector.broadcast %cst_50 : f32 to vector<8x128xf32>
      %150 = arith.addf %149, %148 : vector<8x128xf32>
      %151 = arith.divf %149, %150 : vector<8x128xf32>
      %152 = vector.extract_strided_slice %140 {offsets = [0, 128], sizes = [8, 128], strides = [1, 1]} : vector<8x384xf32> to vector<8x128xf32>
      %153 = vector.extract_strided_slice %143 {offsets = [0, 128], sizes = [8, 128], strides = [1, 1]} : vector<8x384xf32> to vector<8x128xf32>
      %154 = arith.addf %152, %153 : vector<8x128xf32>
      %155 = arith.negf %154 : vector<8x128xf32>
      %156 = math.exp %155 : vector<8x128xf32>
      %cst_51 = arith.constant 1.000000e+00 : f32
      %157 = vector.broadcast %cst_51 : f32 to vector<8x128xf32>
      %158 = arith.addf %157, %156 : vector<8x128xf32>
      %159 = arith.divf %157, %158 : vector<8x128xf32>
      %160 = vector.extract_strided_slice %140 {offsets = [0, 256], sizes = [8, 128], strides = [1, 1]} : vector<8x384xf32> to vector<8x128xf32>
      %161 = vector.extract_strided_slice %143 {offsets = [0, 256], sizes = [8, 128], strides = [1, 1]} : vector<8x384xf32> to vector<8x128xf32>
      %162 = arith.addf %161, %22 : vector<8x128xf32>
      %163 = arith.mulf %151, %162 : vector<8x128xf32>
      %164 = arith.addf %160, %163 : vector<8x128xf32>
      %165 = math.tanh %164 : vector<8x128xf32>
      %cst_52 = arith.constant 1.000000e+00 : f32
      %166 = vector.broadcast %cst_52 : f32 to vector<8x128xf32>
      %167 = arith.subf %166, %159 : vector<8x128xf32>
      %168 = arith.mulf %167, %165 : vector<8x128xf32>
      %169 = arith.mulf %159, %132 : vector<8x128xf32>
      %170 = arith.addf %168, %169 : vector<8x128xf32>
      %171 = arith.addi %19, %c3_i32 : i32
      %172 = arith.index_cast %171 : i32 to index
      %c0_53 = arith.constant 0 : index
      %c0_54 = arith.constant 0 : index
      %173 = vector.load %arg9[%172, %c0_53, %c0_54] : memref<16x8x128xf32, #tpu.memory_space<vmem>>, vector<1x8x128xf32>
      %174 = vector.shape_cast %173 : vector<1x8x128xf32> to vector<8x128xf32>
      %175 = vector.shape_cast %170 : vector<8x128xf32> to vector<1x8x128xf32>
      tpu.vector_store %arg9[%172, %c0_53, %c0_54], %175 {strides = array<i32>} : memref<16x8x128xf32, #tpu.memory_space<vmem>>, vector<1x8x128xf32>,
      %c4_i32 = arith.constant 4 : i32
      %176 = arith.index_cast %c4_i32 : i32 to index
      %c0_55 = arith.constant 0 : index
      %c0_56 = arith.constant 0 : index
      %177 = vector.load %arg2[%176, %c0_55, %c0_56] : memref<8x8x384xf32, #tpu.memory_space<vmem>>, vector<1x8x384xf32>
      %178 = vector.shape_cast %177 : vector<1x8x384xf32> to vector<8x384xf32>
      %179 = arith.truncf %170 : vector<8x128xf32> to vector<8x128xbf16>
      %c0_57 = arith.constant 0 : index
      %c0_58 = arith.constant 0 : index
      %180 = vector.load %arg3[%c0_57, %c0_58] : memref<128x384xbf16, #tpu.memory_space<vmem>>, vector<128x384xbf16>
      %cst_59 = arith.constant dense<0.000000e+00> : vector<8x384xf32>
      %181 = tpu.matmul %179, %180, %cst_59 {dimension_numbers = #tpu.dot_dimension_numbers<[1], [0], [0], [1], [0, 0, 1, 1], [], []>} : vector<8x128xbf16>, vector<128x384xbf16>, vector<8x384xf32> -> vector<8x384xf32>
      %182 = vector.extract_strided_slice %178 {offsets = [0, 0], sizes = [8, 128], strides = [1, 1]} : vector<8x384xf32> to vector<8x128xf32>
      %183 = vector.extract_strided_slice %181 {offsets = [0, 0], sizes = [8, 128], strides = [1, 1]} : vector<8x384xf32> to vector<8x128xf32>
      %184 = arith.addf %182, %183 : vector<8x128xf32>
      %185 = arith.negf %184 : vector<8x128xf32>
      %186 = math.exp %185 : vector<8x128xf32>
      %cst_60 = arith.constant 1.000000e+00 : f32
      %187 = vector.broadcast %cst_60 : f32 to vector<8x128xf32>
      %188 = arith.addf %187, %186 : vector<8x128xf32>
      %189 = arith.divf %187, %188 : vector<8x128xf32>
      %190 = vector.extract_strided_slice %178 {offsets = [0, 128], sizes = [8, 128], strides = [1, 1]} : vector<8x384xf32> to vector<8x128xf32>
      %191 = vector.extract_strided_slice %181 {offsets = [0, 128], sizes = [8, 128], strides = [1, 1]} : vector<8x384xf32> to vector<8x128xf32>
      %192 = arith.addf %190, %191 : vector<8x128xf32>
      %193 = arith.negf %192 : vector<8x128xf32>
      %194 = math.exp %193 : vector<8x128xf32>
      %cst_61 = arith.constant 1.000000e+00 : f32
      %195 = vector.broadcast %cst_61 : f32 to vector<8x128xf32>
      %196 = arith.addf %195, %194 : vector<8x128xf32>
      %197 = arith.divf %195, %196 : vector<8x128xf32>
      %198 = vector.extract_strided_slice %178 {offsets = [0, 256], sizes = [8, 128], strides = [1, 1]} : vector<8x384xf32> to vector<8x128xf32>
      %199 = vector.extract_strided_slice %181 {offsets = [0, 256], sizes = [8, 128], strides = [1, 1]} : vector<8x384xf32> to vector<8x128xf32>
      %200 = arith.addf %199, %22 : vector<8x128xf32>
      %201 = arith.mulf %189, %200 : vector<8x128xf32>
      %202 = arith.addf %198, %201 : vector<8x128xf32>
      %203 = math.tanh %202 : vector<8x128xf32>
      %cst_62 = arith.constant 1.000000e+00 : f32
      %204 = vector.broadcast %cst_62 : f32 to vector<8x128xf32>
      %205 = arith.subf %204, %197 : vector<8x128xf32>
      %206 = arith.mulf %205, %203 : vector<8x128xf32>
      %207 = arith.mulf %197, %170 : vector<8x128xf32>
      %208 = arith.addf %206, %207 : vector<8x128xf32>
      %209 = arith.addi %19, %c4_i32 : i32
      %210 = arith.index_cast %209 : i32 to index
      %c0_63 = arith.constant 0 : index
      %c0_64 = arith.constant 0 : index
      %211 = vector.load %arg9[%210, %c0_63, %c0_64] : memref<16x8x128xf32, #tpu.memory_space<vmem>>, vector<1x8x128xf32>
      %212 = vector.shape_cast %211 : vector<1x8x128xf32> to vector<8x128xf32>
      %213 = vector.shape_cast %208 : vector<8x128xf32> to vector<1x8x128xf32>
      tpu.vector_store %arg9[%210, %c0_63, %c0_64], %213 {strides = array<i32>} : memref<16x8x128xf32, #tpu.memory_space<vmem>>, vector<1x8x128xf32>,
      %c5_i32 = arith.constant 5 : i32
      %214 = arith.index_cast %c5_i32 : i32 to index
      %c0_65 = arith.constant 0 : index
      %c0_66 = arith.constant 0 : index
      %215 = vector.load %arg2[%214, %c0_65, %c0_66] : memref<8x8x384xf32, #tpu.memory_space<vmem>>, vector<1x8x384xf32>
      %216 = vector.shape_cast %215 : vector<1x8x384xf32> to vector<8x384xf32>
      %217 = arith.truncf %208 : vector<8x128xf32> to vector<8x128xbf16>
      %c0_67 = arith.constant 0 : index
      %c0_68 = arith.constant 0 : index
      %218 = vector.load %arg3[%c0_67, %c0_68] : memref<128x384xbf16, #tpu.memory_space<vmem>>, vector<128x384xbf16>
      %cst_69 = arith.constant dense<0.000000e+00> : vector<8x384xf32>
      %219 = tpu.matmul %217, %218, %cst_69 {dimension_numbers = #tpu.dot_dimension_numbers<[1], [0], [0], [1], [0, 0, 1, 1], [], []>} : vector<8x128xbf16>, vector<128x384xbf16>, vector<8x384xf32> -> vector<8x384xf32>
      %220 = vector.extract_strided_slice %216 {offsets = [0, 0], sizes = [8, 128], strides = [1, 1]} : vector<8x384xf32> to vector<8x128xf32>
      %221 = vector.extract_strided_slice %219 {offsets = [0, 0], sizes = [8, 128], strides = [1, 1]} : vector<8x384xf32> to vector<8x128xf32>
      %222 = arith.addf %220, %221 : vector<8x128xf32>
      %223 = arith.negf %222 : vector<8x128xf32>
      %224 = math.exp %223 : vector<8x128xf32>
      %cst_70 = arith.constant 1.000000e+00 : f32
      %225 = vector.broadcast %cst_70 : f32 to vector<8x128xf32>
      %226 = arith.addf %225, %224 : vector<8x128xf32>
      %227 = arith.divf %225, %226 : vector<8x128xf32>
      %228 = vector.extract_strided_slice %216 {offsets = [0, 128], sizes = [8, 128], strides = [1, 1]} : vector<8x384xf32> to vector<8x128xf32>
      %229 = vector.extract_strided_slice %219 {offsets = [0, 128], sizes = [8, 128], strides = [1, 1]} : vector<8x384xf32> to vector<8x128xf32>
      %230 = arith.addf %228, %229 : vector<8x128xf32>
      %231 = arith.negf %230 : vector<8x128xf32>
      %232 = math.exp %231 : vector<8x128xf32>
      %cst_71 = arith.constant 1.000000e+00 : f32
      %233 = vector.broadcast %cst_71 : f32 to vector<8x128xf32>
      %234 = arith.addf %233, %232 : vector<8x128xf32>
      %235 = arith.divf %233, %234 : vector<8x128xf32>
      %236 = vector.extract_strided_slice %216 {offsets = [0, 256], sizes = [8, 128], strides = [1, 1]} : vector<8x384xf32> to vector<8x128xf32>
      %237 = vector.extract_strided_slice %219 {offsets = [0, 256], sizes = [8, 128], strides = [1, 1]} : vector<8x384xf32> to vector<8x128xf32>
      %238 = arith.addf %237, %22 : vector<8x128xf32>
      %239 = arith.mulf %227, %238 : vector<8x128xf32>
      %240 = arith.addf %236, %239 : vector<8x128xf32>
      %241 = math.tanh %240 : vector<8x128xf32>
      %cst_72 = arith.constant 1.000000e+00 : f32
      %242 = vector.broadcast %cst_72 : f32 to vector<8x128xf32>
      %243 = arith.subf %242, %235 : vector<8x128xf32>
      %244 = arith.mulf %243, %241 : vector<8x128xf32>
      %245 = arith.mulf %235, %208 : vector<8x128xf32>
      %246 = arith.addf %244, %245 : vector<8x128xf32>
      %247 = arith.addi %19, %c5_i32 : i32
      %248 = arith.index_cast %247 : i32 to index
      %c0_73 = arith.constant 0 : index
      %c0_74 = arith.constant 0 : index
      %249 = vector.load %arg9[%248, %c0_73, %c0_74] : memref<16x8x128xf32, #tpu.memory_space<vmem>>, vector<1x8x128xf32>
      %250 = vector.shape_cast %249 : vector<1x8x128xf32> to vector<8x128xf32>
      %251 = vector.shape_cast %246 : vector<8x128xf32> to vector<1x8x128xf32>
      tpu.vector_store %arg9[%248, %c0_73, %c0_74], %251 {strides = array<i32>} : memref<16x8x128xf32, #tpu.memory_space<vmem>>, vector<1x8x128xf32>,
      %c6_i32 = arith.constant 6 : i32
      %252 = arith.index_cast %c6_i32 : i32 to index
      %c0_75 = arith.constant 0 : index
      %c0_76 = arith.constant 0 : index
      %253 = vector.load %arg2[%252, %c0_75, %c0_76] : memref<8x8x384xf32, #tpu.memory_space<vmem>>, vector<1x8x384xf32>
      %254 = vector.shape_cast %253 : vector<1x8x384xf32> to vector<8x384xf32>
      %255 = arith.truncf %246 : vector<8x128xf32> to vector<8x128xbf16>
      %c0_77 = arith.constant 0 : index
      %c0_78 = arith.constant 0 : index
      %256 = vector.load %arg3[%c0_77, %c0_78] : memref<128x384xbf16, #tpu.memory_space<vmem>>, vector<128x384xbf16>
      %cst_79 = arith.constant dense<0.000000e+00> : vector<8x384xf32>
      %257 = tpu.matmul %255, %256, %cst_79 {dimension_numbers = #tpu.dot_dimension_numbers<[1], [0], [0], [1], [0, 0, 1, 1], [], []>} : vector<8x128xbf16>, vector<128x384xbf16>, vector<8x384xf32> -> vector<8x384xf32>
      %258 = vector.extract_strided_slice %254 {offsets = [0, 0], sizes = [8, 128], strides = [1, 1]} : vector<8x384xf32> to vector<8x128xf32>
      %259 = vector.extract_strided_slice %257 {offsets = [0, 0], sizes = [8, 128], strides = [1, 1]} : vector<8x384xf32> to vector<8x128xf32>
      %260 = arith.addf %258, %259 : vector<8x128xf32>
      %261 = arith.negf %260 : vector<8x128xf32>
      %262 = math.exp %261 : vector<8x128xf32>
      %cst_80 = arith.constant 1.000000e+00 : f32
      %263 = vector.broadcast %cst_80 : f32 to vector<8x128xf32>
      %264 = arith.addf %263, %262 : vector<8x128xf32>
      %265 = arith.divf %263, %264 : vector<8x128xf32>
      %266 = vector.extract_strided_slice %254 {offsets = [0, 128], sizes = [8, 128], strides = [1, 1]} : vector<8x384xf32> to vector<8x128xf32>
      %267 = vector.extract_strided_slice %257 {offsets = [0, 128], sizes = [8, 128], strides = [1, 1]} : vector<8x384xf32> to vector<8x128xf32>
      %268 = arith.addf %266, %267 : vector<8x128xf32>
      %269 = arith.negf %268 : vector<8x128xf32>
      %270 = math.exp %269 : vector<8x128xf32>
      %cst_81 = arith.constant 1.000000e+00 : f32
      %271 = vector.broadcast %cst_81 : f32 to vector<8x128xf32>
      %272 = arith.addf %271, %270 : vector<8x128xf32>
      %273 = arith.divf %271, %272 : vector<8x128xf32>
      %274 = vector.extract_strided_slice %254 {offsets = [0, 256], sizes = [8, 128], strides = [1, 1]} : vector<8x384xf32> to vector<8x128xf32>
      %275 = vector.extract_strided_slice %257 {offsets = [0, 256], sizes = [8, 128], strides = [1, 1]} : vector<8x384xf32> to vector<8x128xf32>
      %276 = arith.addf %275, %22 : vector<8x128xf32>
      %277 = arith.mulf %265, %276 : vector<8x128xf32>
      %278 = arith.addf %274, %277 : vector<8x128xf32>
      %279 = math.tanh %278 : vector<8x128xf32>
      %cst_82 = arith.constant 1.000000e+00 : f32
      %280 = vector.broadcast %cst_82 : f32 to vector<8x128xf32>
      %281 = arith.subf %280, %273 : vector<8x128xf32>
      %282 = arith.mulf %281, %279 : vector<8x128xf32>
      %283 = arith.mulf %273, %246 : vector<8x128xf32>
      %284 = arith.addf %282, %283 : vector<8x128xf32>
      %285 = arith.addi %19, %c6_i32 : i32
      %286 = arith.index_cast %285 : i32 to index
      %c0_83 = arith.constant 0 : index
      %c0_84 = arith.constant 0 : index
      %287 = vector.load %arg9[%286, %c0_83, %c0_84] : memref<16x8x128xf32, #tpu.memory_space<vmem>>, vector<1x8x128xf32>
      %288 = vector.shape_cast %287 : vector<1x8x128xf32> to vector<8x128xf32>
      %289 = vector.shape_cast %284 : vector<8x128xf32> to vector<1x8x128xf32>
      tpu.vector_store %arg9[%286, %c0_83, %c0_84], %289 {strides = array<i32>} : memref<16x8x128xf32, #tpu.memory_space<vmem>>, vector<1x8x128xf32>,
      %c7_i32 = arith.constant 7 : i32
      %290 = arith.index_cast %c7_i32 : i32 to index
      %c0_85 = arith.constant 0 : index
      %c0_86 = arith.constant 0 : index
      %291 = vector.load %arg2[%290, %c0_85, %c0_86] : memref<8x8x384xf32, #tpu.memory_space<vmem>>, vector<1x8x384xf32>
      %292 = vector.shape_cast %291 : vector<1x8x384xf32> to vector<8x384xf32>
      %293 = arith.truncf %284 : vector<8x128xf32> to vector<8x128xbf16>
      %c0_87 = arith.constant 0 : index
      %c0_88 = arith.constant 0 : index
      %294 = vector.load %arg3[%c0_87, %c0_88] : memref<128x384xbf16, #tpu.memory_space<vmem>>, vector<128x384xbf16>
      %cst_89 = arith.constant dense<0.000000e+00> : vector<8x384xf32>
      %295 = tpu.matmul %293, %294, %cst_89 {dimension_numbers = #tpu.dot_dimension_numbers<[1], [0], [0], [1], [0, 0, 1, 1], [], []>} : vector<8x128xbf16>, vector<128x384xbf16>, vector<8x384xf32> -> vector<8x384xf32>
      %296 = vector.extract_strided_slice %292 {offsets = [0, 0], sizes = [8, 128], strides = [1, 1]} : vector<8x384xf32> to vector<8x128xf32>
      %297 = vector.extract_strided_slice %295 {offsets = [0, 0], sizes = [8, 128], strides = [1, 1]} : vector<8x384xf32> to vector<8x128xf32>
      %298 = arith.addf %296, %297 : vector<8x128xf32>
      %299 = arith.negf %298 : vector<8x128xf32>
      %300 = math.exp %299 : vector<8x128xf32>
      %cst_90 = arith.constant 1.000000e+00 : f32
      %301 = vector.broadcast %cst_90 : f32 to vector<8x128xf32>
      %302 = arith.addf %301, %300 : vector<8x128xf32>
      %303 = arith.divf %301, %302 : vector<8x128xf32>
      %304 = vector.extract_strided_slice %292 {offsets = [0, 128], sizes = [8, 128], strides = [1, 1]} : vector<8x384xf32> to vector<8x128xf32>
      %305 = vector.extract_strided_slice %295 {offsets = [0, 128], sizes = [8, 128], strides = [1, 1]} : vector<8x384xf32> to vector<8x128xf32>
      %306 = arith.addf %304, %305 : vector<8x128xf32>
      %307 = arith.negf %306 : vector<8x128xf32>
      %308 = math.exp %307 : vector<8x128xf32>
      %cst_91 = arith.constant 1.000000e+00 : f32
      %309 = vector.broadcast %cst_91 : f32 to vector<8x128xf32>
      %310 = arith.addf %309, %308 : vector<8x128xf32>
      %311 = arith.divf %309, %310 : vector<8x128xf32>
      %312 = vector.extract_strided_slice %292 {offsets = [0, 256], sizes = [8, 128], strides = [1, 1]} : vector<8x384xf32> to vector<8x128xf32>
      %313 = vector.extract_strided_slice %295 {offsets = [0, 256], sizes = [8, 128], strides = [1, 1]} : vector<8x384xf32> to vector<8x128xf32>
      %314 = arith.addf %313, %22 : vector<8x128xf32>
      %315 = arith.mulf %303, %314 : vector<8x128xf32>
      %316 = arith.addf %312, %315 : vector<8x128xf32>
      %317 = math.tanh %316 : vector<8x128xf32>
      %cst_92 = arith.constant 1.000000e+00 : f32
      %318 = vector.broadcast %cst_92 : f32 to vector<8x128xf32>
      %319 = arith.subf %318, %311 : vector<8x128xf32>
      %320 = arith.mulf %319, %317 : vector<8x128xf32>
      %321 = arith.mulf %311, %284 : vector<8x128xf32>
      %322 = arith.addf %320, %321 : vector<8x128xf32>
      %323 = arith.addi %19, %c7_i32 : i32
      %324 = arith.index_cast %323 : i32 to index
      %c0_93 = arith.constant 0 : index
      %c0_94 = arith.constant 0 : index
      %325 = vector.load %arg9[%324, %c0_93, %c0_94] : memref<16x8x128xf32, #tpu.memory_space<vmem>>, vector<1x8x128xf32>
      %326 = vector.shape_cast %325 : vector<1x8x128xf32> to vector<8x128xf32>
      %327 = vector.shape_cast %322 : vector<8x128xf32> to vector<1x8x128xf32>
      tpu.vector_store %arg9[%324, %c0_93, %c0_94], %327 {strides = array<i32>} : memref<16x8x128xf32, #tpu.memory_space<vmem>>, vector<1x8x128xf32>,
      %c8_i32_95 = arith.constant 8 : i32
      %c0_96 = arith.constant 0 : index
      %c0_97 = arith.constant 0 : index
      %328 = vector.load %arg8[%c0_96, %c0_97] : memref<8x128xf32, #tpu.memory_space<vmem>>, vector<8x128xf32>
      tpu.vector_store %arg8[%c0_96, %c0_97], %322 {strides = array<i32>} : memref<8x128xf32, #tpu.memory_space<vmem>>, vector<8x128xf32>,
    } else {
    }
    return
  }
  func.func @transform_0(%arg0: i32, %arg1: i32) -> (i32, i32, i32) {
    %c0_i32 = arith.constant 0 : i32
    %c0_i32_0 = arith.constant 0 : i32
    %c0_i32_1 = arith.constant 0 : i32
    return %arg0, %c0_i32, %c0_i32_0 : i32, i32, i32
  }
  func.func @transform_1(%arg0: i32, %arg1: i32) -> (i32, i32) {
    %c0_i32 = arith.constant 0 : i32
    %c0_i32_0 = arith.constant 0 : i32
    %c0_i32_1 = arith.constant 0 : i32
    return %c0_i32, %c0_i32_0 : i32, i32
  }
  func.func @transform_2(%arg0: i32, %arg1: i32) -> (i32, i32) {
    %c0_i32 = arith.constant 0 : i32
    %c0_i32_0 = arith.constant 0 : i32
    %c0_i32_1 = arith.constant 0 : i32
    return %c0_i32, %c0_i32_0 : i32, i32
  }
  func.func @transform_3(%arg0: i32, %arg1: i32) -> (i32, i32) {
    %c1_i32 = arith.constant 1 : i32
    %0 = arith.addi %arg1, %c1_i32 : i32
    %c1_i32_0 = arith.constant 1 : i32
    %1 = arith.subi %0, %c1_i32_0 : i32
    %c1_i32_1 = arith.constant 1 : i32
    %c0_i32 = arith.constant 0 : i32
    %2 = arith.cmpi eq, %c1_i32_1, %c0_i32 : i32
    %c1_i32_2 = arith.constant 1 : i32
    %3 = arith.select %2, %c1_i32_2, %c1_i32_1 : i32
    %4 = arith.remsi %1, %3 : i32
    %c0_i32_3 = arith.constant 0 : i32
    %5 = arith.cmpi ne, %4, %c0_i32_3 : i32
    %c0_i32_4 = arith.constant 0 : i32
    %6 = arith.cmpi slt, %4, %c0_i32_4 : i32
    %c0_i32_5 = arith.constant 0 : i32
    %7 = arith.cmpi slt, %3, %c0_i32_5 : i32
    %8 = arith.xori %6, %7 : i1
    %9 = arith.andi %8, %5 : i1
    %10 = arith.addi %4, %3 : i32
    %11 = arith.select %9, %10, %4 : i32
    %c0_i32_6 = arith.constant 0 : i32
    %c0_i32_7 = arith.constant 0 : i32
    return %c0_i32_6, %11 : i32, i32
  }
  func.func @transform_4(%arg0: i32, %arg1: i32) -> (i32, i32) {
    %c1_i32 = arith.constant 1 : i32
    %0 = arith.addi %arg1, %c1_i32 : i32
    %c1_i32_0 = arith.constant 1 : i32
    %1 = arith.subi %0, %c1_i32_0 : i32
    %c1_i32_1 = arith.constant 1 : i32
    %c0_i32 = arith.constant 0 : i32
    %2 = arith.cmpi eq, %c1_i32_1, %c0_i32 : i32
    %c1_i32_2 = arith.constant 1 : i32
    %3 = arith.select %2, %c1_i32_2, %c1_i32_1 : i32
    %4 = arith.remsi %1, %3 : i32
    %c0_i32_3 = arith.constant 0 : i32
    %5 = arith.cmpi ne, %4, %c0_i32_3 : i32
    %c0_i32_4 = arith.constant 0 : i32
    %6 = arith.cmpi slt, %4, %c0_i32_4 : i32
    %c0_i32_5 = arith.constant 0 : i32
    %7 = arith.cmpi slt, %3, %c0_i32_5 : i32
    %8 = arith.xori %6, %7 : i1
    %9 = arith.andi %8, %5 : i1
    %10 = arith.addi %4, %3 : i32
    %11 = arith.select %9, %10, %4 : i32
    %c0_i32_6 = arith.constant 0 : i32
    %c0_i32_7 = arith.constant 0 : i32
    return %c0_i32_6, %11 : i32, i32
  }
  func.func @transform_5(%arg0: i32, %arg1: i32) -> (i32, i32, i32) {
    %c0_i32 = arith.constant 0 : i32
    %0 = arith.cmpi eq, %arg1, %c0_i32 : i32
    %c1_i32 = arith.constant 1 : i32
    %1 = arith.subi %arg0, %c1_i32 : i32
    %c0_i32_0 = arith.constant 0 : i32
    %2 = arith.maxsi %1, %c0_i32_0 : i32
    %3 = arith.select %0, %2, %arg0 : i32
    %c0_i32_1 = arith.constant 0 : i32
    %4 = arith.cmpi eq, %arg1, %c0_i32_1 : i32
    %c0_i32_2 = arith.constant 0 : i32
    %5 = arith.cmpi eq, %arg0, %c0_i32_2 : i32
    %c0_i32_3 = arith.constant 0 : i32
    %c0_i32_4 = arith.constant 0 : i32
    %6 = arith.select %5, %c0_i32_3, %c0_i32_4 : i32
    %c1_i32_5 = arith.constant 1 : i32
    %7 = arith.subi %arg1, %c1_i32_5 : i32
    %8 = arith.select %4, %6, %7 : i32
    %c0_i32_6 = arith.constant 0 : i32
    %c0_i32_7 = arith.constant 0 : i32
    return %3, %c0_i32_6, %8 : i32, i32, i32
  }
}

</mosaic_0001>

<llo_original>
// kernel: tpu_custom_call.1
$region0: #{tpu_custom_call.1}
  #allocation0 [shape = 'u32[]', space=smem, size = 0x4, offset = 0x4, fixed_abs, tag = 'smem constant byte address 0x4 - core index']
  #allocation1 [shape = 'u32[144,128]{1,0:T(1,128)}', space=vmem, size = 0x12000, scoped, tag = 'internal scratch']
  #allocation2 [shape = 'f32[8,128]{1,0:T(8,128)}', space=vmem, size = 0x1000, scoped, tag = 'scratch operand']
  #allocation3 [shape = 'f32[16,8,128]{2,1,0:T(8,128)}', space=vmem, size = 0x10000, scoped, tag = 'scratch operand']
  %s0 = inlined_call_operand.hbm [shape: f32[16,8,384], index: 0, kind: input, shape index: {}]
  %s1 = inlined_call_operand.hbm [shape: bf16[128,384], index: 1, kind: input, shape index: {}]
  %s2 = inlined_call_operand.vmem [shape: f32[1,128], index: 2, kind: input, shape index: {}]
  %s3 = inlined_call_operand.hbm [shape: bf16[128,128], index: 3, kind: input, shape index: {}]
  %s4 = inlined_call_operand.vmem [shape: f32[1,128], index: 4, kind: input, shape index: {}]
  %s5 = inlined_call_operand.hbm [shape: f32[16,8,128], index: 5, kind: output, shape index: {}]
  %s6 = sld [smem:[#allocation0]]
  $region77: #{tpu_custom_call.1} parent=0
    _
  %s8 = ssub.s32 1, %s6
  %s9 = scalar_select 0, %s8, %s6
  $region1: #{tpu_custom_call.1} parent=0
    #allocation4 [shape = 'u8[196608]{0}', space=vmem, size = 0x30000, scoped, tag = 'input window, operand 0']
    #allocation5 [shape = 's32[2]{0}', space=sflag, size = 0x8, scoped, tag = 'scoped memory for tpu_custom_call.1']
    #allocation6 [shape = 's32[2]{0}', space=sflag, size = 0x8, scoped, tag = 'scoped memory for tpu_custom_call.1']
    #allocation7 [shape = 'u8[98304]{0}', space=vmem, size = 0x18000, scoped, tag = 'input window, operand 1, single buffered']
    #allocation8 [shape = 's32[1]{0}', space=sflag, size = 0x4, scoped, tag = 'scoped memory for tpu_custom_call.1']
    #allocation9 [shape = 'u8[32768]{0}', space=vmem, size = 0x8000, scoped, tag = 'input window, operand 3, single buffered']
    #allocation10 [shape = 'u8[65536]{0}', space=vmem, size = 0x10000, scoped, tag = 'output window, operand 0']
    %10 = vsyncpa [#allocation5], 0
    %s11 = scalar_lea.sflag [#allocation5], 1
    %12 = vsyncpa %s11, 0
    %13 = vsyncpa [#allocation8], 0
    %14 = vsyncpa [#allocation6], 0
    %s15 = scalar_lea.sflag [#allocation6], 1
    %16 = vsyncpa %s15, 0
    loop: start=0, step=1, limit=4
    $region2: #{tpu_custom_call.1} parent=1 // loop_pre_header
      _
    $region3: #{tpu_custom_call.1} parent=1 // loop_header
      %s18 = sphi 0, %s22
      %p19 = scmp.ge.s32.totalorder %s18, 4
      %s25 = sphi 0, %s37
      %s26 = sphi 0, %s33
      %s27 = sphi 0, %s25
      %s28 = sphi 0, %s26
      %s29 = sphi 0, %s27
      %s30 = sphi 0, %s28
      %s40 = sphi 0, %s42
      %s43 = sphi 0, %s40
      %s44 = sphi 0, %s43
      %s60 = sphi 0, %s44
      %s64 = sphi 0, %s64
      %s66 = sphi 0, %s64
      %s67 = sphi 0, %s66
      %s81 = sphi 0, %s67
      %s85 = sphi 0, %s85
      %s87 = sphi 0, %s85
      %s88 = sphi 0, %s87
      %s102 = sphi 0, %s88
      %s106 = sphi 0, %s106
      %s108 = sphi 0, %s106
      %s109 = sphi 0, %s108
      %s123 = sphi 0, %s109
      %s127 = sphi 0, %s127
      %s129 = sphi 0, %s127
      %s130 = sphi 0, %s129
      %s144 = sphi 0, %s130
      %s166 = sphi 0, %s168
      %s169 = sphi 0, %s166
      %s170 = sphi 0, %s169
      %s186 = sphi 0, %s170
    $region4: #{tpu_custom_call.1} parent=1 // loop_header_branch
      %21 = sbr.rel (%p19) target = $region8
    $region5: #{tpu_custom_call.1} parent=1 // loop_body
      %s23 = ssub.s32 %s18, 1
      %s24 = ssub.s32 %s18, 2
      %s31 = sadd.s32 1, %s26
      %p32 = scmp.ge.s32.totalorder %s31, 1
      %s33 = scalar_select %p32, 0, %s31
      %s34 = sadd.s32 1, %s25
      %s35 = scalar_select %p32, %s34, %s25
      %p36 = scmp.ge.s32.totalorder %s35, 2
      %s37 = scalar_select %p36, 0, %s35
      %s38 = ssub.s32 %s25, %s37
      %p39 = scmp.eq.s32.totalorder %s38, 0
      %s41 = sadd.s32 %s40, 1
      %s42 = scalar_select %p39, %s40, %s41
      %p45 = pneg %p39
      %p46 = scmp.eq.s32.totalorder %s18, 1
      %p47 = por %p45, %p46
      %p48 = scmp.ne.s32.totalorder %s40, %s43
      %p49 = scmp.eq.s32.totalorder %s18, 0
      %p50 = por %p48, %p49
      %p51 = scmp.ne.s32.totalorder %s40, %s43
      %p52 = scmp.eq.s32.totalorder %s23, 1
      %p53 = por %p51, %p52
      %p54 = scmp.ne.s32.totalorder %s43, %s44
      %p55 = scmp.eq.s32.totalorder %s23, 0
      %p56 = por %p54, %p55
      %p57 = scmp.ne.s32.totalorder %s43, %s44
      %p58 = scmp.eq.s32.totalorder %s24, 1
      %p59 = por %p57, %p58
      %p61 = scmp.ne.s32.totalorder %s44, %s60
      %p62 = scmp.eq.s32.totalorder %s24, 0
      %p63 = por %p61, %p62
      %s65 = sadd.s32 %s64, 1
      %p68 = scmp.eq.s32.totalorder %s18, 1
      %p69 = scmp.ne.s32.totalorder %s64, %s66
      %p70 = scmp.eq.s32.totalorder %s18, 0
      %p71 = por %p69, %p70
      %p72 = scmp.ne.s32.totalorder %s64, %s66
      %p73 = scmp.eq.s32.totalorder %s23, 1
      %p74 = por %p72, %p73
      %p75 = scmp.ne.s32.totalorder %s66, %s67
      %p76 = scmp.eq.s32.totalorder %s23, 0
      %p77 = por %p75, %p76
      %p78 = scmp.ne.s32.totalorder %s66, %s67
      %p79 = scmp.eq.s32.totalorder %s24, 1
      %p80 = por %p78, %p79
      %p82 = scmp.ne.s32.totalorder %s67, %s81
      %p83 = scmp.eq.s32.totalorder %s24, 0
      %p84 = por %p82, %p83
      %s86 = sadd.s32 %s85, 1
      %p89 = scmp.eq.s32.totalorder %s18, 1
      %p90 = scmp.ne.s32.totalorder %s85, %s87
      %p91 = scmp.eq.s32.totalorder %s18, 0
      %p92 = por %p90, %p91
      %p93 = scmp.ne.s32.totalorder %s85, %s87
      %p94 = scmp.eq.s32.totalorder %s23, 1
      %p95 = por %p93, %p94
      %p96 = scmp.ne.s32.totalorder %s87, %s88
      %p97 = scmp.eq.s32.totalorder %s23, 0
      %p98 = por %p96, %p97
      %p99 = scmp.ne.s32.totalorder %s87, %s88
      %p100 = scmp.eq.s32.totalorder %s24, 1
      %p101 = por %p99, %p100
      %p103 = scmp.ne.s32.totalorder %s88, %s102
      %p104 = scmp.eq.s32.totalorder %s24, 0
      %p105 = por %p103, %p104
      %s107 = sadd.s32 %s106, 1
      %p110 = scmp.eq.s32.totalorder %s18, 1
      %p111 = scmp.ne.s32.totalorder %s106, %s108
      %p112 = scmp.eq.s32.totalorder %s18, 0
      %p113 = por %p111, %p112
      %p114 = scmp.ne.s32.totalorder %s106, %s108
      %p115 = scmp.eq.s32.totalorder %s23, 1
      %p116 = por %p114, %p115
      %p117 = scmp.ne.s32.totalorder %s108, %s109
      %p118 = scmp.eq.s32.totalorder %s23, 0
      %p119 = por %p117, %p118
      %p120 = scmp.ne.s32.totalorder %s108, %s109
      %p121 = scmp.eq.s32.totalorder %s24, 1
      %p122 = por %p120, %p121
      %p124 = scmp.ne.s32.totalorder %s109, %s123
      %p125 = scmp.eq.s32.totalorder %s24, 0
      %p126 = por %p124, %p125
      %s128 = sadd.s32 %s127, 1
      %p131 = scmp.eq.s32.totalorder %s18, 1
      %p132 = scmp.ne.s32.totalorder %s127, %s129
      %p133 = scmp.eq.s32.totalorder %s18, 0
      %p134 = por %p132, %p133
      %p135 = scmp.ne.s32.totalorder %s127, %s129
      %p136 = scmp.eq.s32.totalorder %s23, 1
      %p137 = por %p135, %p136
      %p138 = scmp.ne.s32.totalorder %s129, %s130
      %p139 = scmp.eq.s32.totalorder %s23, 0
      %p140 = por %p138, %p139
      %p141 = scmp.ne.s32.totalorder %s129, %s130
      %p142 = scmp.eq.s32.totalorder %s24, 1
      %p143 = por %p141, %p142
      %p145 = scmp.ne.s32.totalorder %s130, %s144
      %p146 = scmp.eq.s32.totalorder %s24, 0
      %p147 = por %p145, %p146
      %p148 = scmp.eq.s32.totalorder %s26, 0
      %s149 = ssub.s32 %s25, 1
      %p150 = scmp.gt.s32.totalorder %s149, 0
      %s151 = scalar_select %p150, %s149, 0
      %s152 = scalar_select %p148, %s151, %s25
      %s153 = ssub.s32 %s26, 1
      %s154 = scalar_select %p148, 0, %s153
      %p155 = scmp.eq.s32.totalorder %s33, 0
      %s156 = ssub.s32 %s37, 1
      %p157 = scmp.gt.s32.totalorder %s156, 0
      %s158 = scalar_select %p157, %s156, 0
      %s159 = scalar_select %p155, %s158, %s37
      %s160 = ssub.s32 %s33, 1
      %s161 = scalar_select %p155, 0, %s160
      %s162 = ssub.s32 %s152, %s159
      %s163 = ssub.s32 %s154, %s161
      %s164 = sor.u32 %s162, %s163
      %p165 = scmp.eq.s32.totalorder %s164, 0
      %s167 = sadd.s32 %s166, 1
      %s168 = scalar_select %p165, %s166, %s167
      %p171 = pneg %p165
      %p172 = scmp.eq.s32.totalorder %s18, 1
      %p173 = por %p171, %p172
      %p174 = scmp.ne.s32.totalorder %s166, %s169
      %p175 = scmp.eq.s32.totalorder %s18, 0
      %p176 = por %p174, %p175
      %p177 = scmp.ne.s32.totalorder %s166, %s169
      %p178 = scmp.eq.s32.totalorder %s23, 1
      %p179 = por %p177, %p178
      %p180 = scmp.ne.s32.totalorder %s169, %s170
      %p181 = scmp.eq.s32.totalorder %s23, 0
      %p182 = por %p180, %p181
      %p183 = scmp.ne.s32.totalorder %s169, %s170
      %p184 = scmp.eq.s32.totalorder %s24, 1
      %p185 = por %p183, %p184
      %p187 = scmp.ne.s32.totalorder %s170, %s186
      %p188 = scmp.eq.s32.totalorder %s24, 0
      %p189 = por %p187, %p188
      %p190 = scmp.le.s32.totalorder 1, %s18
      %p191 = scmp.lt.s32.totalorder %s18, 3
      %p192 = pnand %p190, %p191
      %p193 = pneg %p192
      // Predicated region
      $region9: #{tpu_custom_call.1} parent=5 // pred_check
        _
      $region10: #{tpu_custom_call.1} parent=5 // pred_check_branch
        %195 = sbr.rel (%p192) target = $region12
      $region11: #{tpu_custom_call.1} parent=5 // pred_region
        %s196 = ssub.s32 %s18, 1
        // Predicated region
        $region13: #{tpu_custom_call.1} parent=11 // pred_check
          %p197 = pneg %p77
        $region14: #{tpu_custom_call.1} parent=11 // pred_check_branch
          %199 = sbr.rel (%p197) target = $region16
        $region15: #{tpu_custom_call.1} parent=11 // pred_region
          %s201 = ssub.s32 3072, 3072
          %202 = vsyncadd [#allocation8], %s201
          %s203 = sshll.u32 [#allocation7], 4
          %s204 = int_to_ptr.vmem [resolvable:$true] %s203
          %209 = dma.hbm_to_vmem [thread:$0]  %s1, 3072, %s204, [#allocation8], 192, 192, 12
        $region16: #{tpu_custom_call.1} parent=11 // pred_fallthru
          _
        // Predicated region
        $region17: #{tpu_custom_call.1} parent=11 // pred_check
          %p210 = pneg %p98
        $region18: #{tpu_custom_call.1} parent=11 // pred_check_branch
          %212 = sbr.rel (%p210) target = $region20
        $region19: #{tpu_custom_call.1} parent=11 // pred_region
          _
        $region20: #{tpu_custom_call.1} parent=11 // pred_fallthru
          _
        // Predicated region
        $region21: #{tpu_custom_call.1} parent=11 // pred_check
          %p213 = pneg %p119
        $region22: #{tpu_custom_call.1} parent=11 // pred_check_branch
          %215 = sbr.rel (%p213) target = $region24
        $region23: #{tpu_custom_call.1} parent=11 // pred_region
          %s217 = ssub.s32 1024, 1024
          %218 = vsyncadd [#allocation8], %s217
          %s219 = sshll.u32 [#allocation9], 4
          %s220 = int_to_ptr.vmem [resolvable:$true] %s219
          %225 = dma.hbm_to_vmem [thread:$0]  %s3, 1024, %s220, [#allocation8], 64, 64, 4
        $region24: #{tpu_custom_call.1} parent=11 // pred_fallthru
          _
        // Predicated region
        $region25: #{tpu_custom_call.1} parent=11 // pred_check
          %p226 = pneg %p140
        $region26: #{tpu_custom_call.1} parent=11 // pred_check_branch
          %228 = sbr.rel (%p226) target = $region28
        $region27: #{tpu_custom_call.1} parent=11 // pred_region
          _
        $region28: #{tpu_custom_call.1} parent=11 // pred_fallthru
          _
      $region12: #{tpu_custom_call.1} parent=5 // pred_fallthru
        _
      %p229 = scmp.lt.s32.totalorder %s18, 2
      // Predicated region
      $region29: #{tpu_custom_call.1} parent=5 // pred_check
        %p230 = pneg %p229
      $region30: #{tpu_custom_call.1} parent=5 // pred_check_branch
        %232 = sbr.rel (%p230) target = $region32
      $region31: #{tpu_custom_call.1} parent=5 // pred_region
        // Predicated region
        $region33: #{tpu_custom_call.1} parent=31 // pred_check
          %p233 = pneg %p50
        $region34: #{tpu_custom_call.1} parent=31 // pred_check_branch
          %235 = sbr.rel (%p233) target = $region36
        $region35: #{tpu_custom_call.1} parent=31 // pred_region
          %s236 = sand.u32 %s40, 1
          %s237 = scalar_lea.sflag [#allocation5], %s236
          %s238 = sand.u32 %s40, 1
          %s239 = smul.addr %s238, 192
          %s240 = scalar_lea.vmem [#allocation4], %s239
          %s241 = smul.u32 8, %s25
          %s243 = ssub.s32 3072, 3072
          %244 = vsyncadd %s237, %s243
          %s245 = smul.addr %s241, 3
          %s246 = smul.addr %s245, 128
          %s247 = scalar_lea.hbm %s0, %s246
          %s248 = sshll.u32 %s240, 4
          %s249 = int_to_ptr.vmem [resolvable:$true] %s248
          %254 = dma.hbm_to_vmem [thread:$0]  %s247, 3072, %s249, %s237, 384, 384, 24
        $region36: #{tpu_custom_call.1} parent=31 // pred_fallthru
          _
      $region32: #{tpu_custom_call.1} parent=5 // pred_fallthru
        _
      %p255 = scmp.le.s32.totalorder 1, %s18
      %p256 = scmp.lt.s32.totalorder %s18, 3
      %p257 = pnand %p255, %p256
      %p258 = pneg %p257
      // Predicated region
      $region37: #{tpu_custom_call.1} parent=5 // pred_check
        _
      $region38: #{tpu_custom_call.1} parent=5 // pred_check_branch
        %260 = sbr.rel (%p257) target = $region40
      $region39: #{tpu_custom_call.1} parent=5 // pred_region
        %s261 = ssub.s32 %s18, 1
        %s262 = sand.u32 %s43, 1
        %s263 = scalar_lea.sflag [#allocation5], %s262
        %s264 = sand.u32 %s43, 1
        %s265 = smul.addr %s264, 192
        %s266 = scalar_lea.vmem [#allocation4], %s265
        // Predicated region
        $region41: #{tpu_custom_call.1} parent=39 // pred_check
          %p267 = pneg %p56
        $region42: #{tpu_custom_call.1} parent=39 // pred_check_branch
          %269 = sbr.rel (%p267) target = $region44
        $region43: #{tpu_custom_call.1} parent=39 // pred_region
          %270 = dma.done %s263, 3072
        $region44: #{tpu_custom_call.1} parent=39 // pred_fallthru
          _
        // Predicated region
        $region45: #{tpu_custom_call.1} parent=39 // pred_check
          %p271 = pneg %p77
        $region46: #{tpu_custom_call.1} parent=39 // pred_check_branch
          %273 = sbr.rel (%p271) target = $region48
        $region47: #{tpu_custom_call.1} parent=39 // pred_region
          %274 = dma.done [#allocation8], 3072
        $region48: #{tpu_custom_call.1} parent=39 // pred_fallthru
          _
        // Predicated region
        $region49: #{tpu_custom_call.1} parent=39 // pred_check
          %p275 = pneg %p119
        $region50: #{tpu_custom_call.1} parent=39 // pred_check_branch
          %277 = sbr.rel (%p275) target = $region52
        $region51: #{tpu_custom_call.1} parent=39 // pred_region
          %278 = dma.done [#allocation8], 1024
        $region52: #{tpu_custom_call.1} parent=39 // pred_fallthru
          _
        %s279 = sand.u32 %s43, 1
        %s280 = scalar_lea.sflag [#allocation5], %s279
        %s281 = sand.u32 %s43, 1
        %s282 = smul.addr %s281, 192
        %s283 = scalar_lea.vmem [#allocation4], %s282
        %p284 = pneg %p56
        %p285 = pneg %p53
        %p286 = pneg %p77
        %p287 = pneg %p74
        %p288 = pneg %p98
        %p289 = pneg %p95
        %p290 = pneg %p119
        %p291 = pneg %p116
        %p292 = pneg %p140
        %p293 = pneg %p137
        %p294 = pneg %p182
        %p295 = pneg %p179
        %s296 = sand.u32 %s169, 1
        %s297 = scalar_lea.sflag [#allocation6], %s296
        %s298 = sand.u32 %s169, 1
        %s299 = smul.addr %s298, 64
        %s300 = scalar_lea.vmem [#allocation10], %s299
        %s301 = smul.u32 8, %s27
        %p302 = scmp.eq.s32.totalorder %s28, 0
        %s303 = ssub.s32 %s27, 1
        %p304 = scmp.gt.s32.totalorder %s303, 0
        %s305 = scalar_select %p304, %s303, 0
        %s306 = scalar_select %p302, %s305, %s27
        %s307 = ssub.s32 %s28, 1
        %s308 = scalar_select %p302, 0, %s307
        %s309 = smul.u32 8, %s306
        %p311 = scmp.eq.s32.totalorder %s27, 0
        %p312 = scmp.eq.s32.totalorder %s28, 0
        %p313 = pnand %p311, %p312
        %p314 = pneg %p313
        // Predicated region
        $region53: #{tpu_custom_call.1} parent=39 // pred_check
          _
        $region54: #{tpu_custom_call.1} parent=39 // pred_check_branch
          %316 = sbr.rel (%p313) target = $region56
        $region55: #{tpu_custom_call.1} parent=39 // pred_region
          %317 = vst [vmem:[#allocation2] sm:$0xff] 0.0
        $region56: #{tpu_custom_call.1} parent=39 // pred_fallthru
          _
        %s318 = scalar_select %p312, 1, 0
        %s319 = ssub.s32 %s27, %s318
        %p320 = scmp.ge.s32.totalorder %s319, 0
        %p321 = scmp.lt.s32.totalorder %s319, 1
        %p322 = pnand %p320, %p321
        %p323 = pneg %p322
        // Predicated region
        $region57: #{tpu_custom_call.1} parent=39 // pred_check
          _
        $region58: #{tpu_custom_call.1} parent=39 // pred_check_branch
          %325 = sbr.rel (%p322) target = $region60
        $region59: #{tpu_custom_call.1} parent=39 // pred_region
          %p326 = scmp.lt.s32.totalorder %s319, 0
          %s327 = ssub.s32 0, %s319
          %s328 = scalar_select %p326, %s327, %s319
          %s329 = sand.u32 %s328, 1
          %s330 = ssub.s32 0, %s329
          %s331 = scalar_select %p326, %s330, %s329
          %s332 = smul.u32 %s331, 8
          %s333 = smul.u32 %s332, 8
          %s334 = scalar_lea.vmem [#allocation3], %s333
          %v335 = vld [vmem:[%s334] sm:$0xff]
          %v336 = vld [vmem:[%s334 + $0x8] sm:$0xff]
          %v337 = vld [vmem:[%s334 + $0x10] sm:$0xff]
          %v338 = vld [vmem:[%s334 + $0x18] sm:$0xff]
          %v339 = vld [vmem:[%s334 + $0x20] sm:$0xff]
          %v340 = vld [vmem:[%s334 + $0x28] sm:$0xff]
          %v341 = vld [vmem:[%s334 + $0x30] sm:$0xff]
          %v342 = vld [vmem:[%s334 + $0x38] sm:$0xff]
          %v343 = vpack.c.bf16 %v336, %v335
          %v344 = vpack.c.bf16 %v338, %v337
          %v345 = vpack.c.bf16 %v340, %v339
          %v346 = vpack.c.bf16 %v342, %v341
          %v347 = vld [vmem:[#allocation9] sm:$0xf]
          %v348 = vld [vmem:[#allocation9 + $0x4] sm:$0xf]
          %v349 = vld [vmem:[#allocation9 + $0x8] sm:$0xf]
          %v350 = vld [vmem:[#allocation9 + $0xc] sm:$0xf]
          %v351 = vld [vmem:[#allocation9 + $0x10] sm:$0xf]
          %v352 = vld [vmem:[#allocation9 + $0x14] sm:$0xf]
          %v353 = vld [vmem:[#allocation9 + $0x18] sm:$0xf]
          %v354 = vld [vmem:[#allocation9 + $0x1c] sm:$0xf]
          %v355 = vld [vmem:[#allocation9 + $0x20] sm:$0xf]
          %v356 = vld [vmem:[#allocation9 + $0x24] sm:$0xf]
          %v357 = vld [vmem:[#allocation9 + $0x28] sm:$0xf]
          %v358 = vld [vmem:[#allocation9 + $0x2c] sm:$0xf]
          %v359 = vld [vmem:[#allocation9 + $0x30] sm:$0xf]
          %v360 = vld [vmem:[#allocation9 + $0x34] sm:$0xf]
          %v361 = vld [vmem:[#allocation9 + $0x38] sm:$0xf]
          %v362 = vld [vmem:[#allocation9 + $0x3c] sm:$0xf]
          %v363 = vld [vmem:[%s4] sm:$0x1]
          %v365 = vlaneseq
          %v366 = vshrl.u32 %v365, 7
          %v367 = vsub.s32 0, %v366
          %v368 = vrot.slane %v363, %v367
          %v386 = vunpack.c.l.b16 %v347
          %v387 = vunpack.c.l.b16 %v348
          %v388 = vunpack.c.l.b16 %v349
          %v389 = vunpack.c.l.b16 %v350
          %v390 = vunpack.c.l.b16 %v351
          %v391 = vunpack.c.l.b16 %v352
          %v392 = vunpack.c.l.b16 %v353
          %v393 = vunpack.c.l.b16 %v354
          %v394 = vunpack.c.l.b16 %v355
          %v395 = vunpack.c.l.b16 %v356
          %v396 = vunpack.c.l.b16 %v357
          %v397 = vunpack.c.l.b16 %v358
          %v398 = vunpack.c.l.b16 %v359
          %v399 = vunpack.c.l.b16 %v360
          %v400 = vunpack.c.l.b16 %v361
          %v401 = vunpack.c.l.b16 %v362
          %v402 = vpack.c.b16 %v387, %v386
          %v403 = vpack.c.b16 %v389, %v388
          %v404 = vpack.c.b16 %v391, %v390
          %v405 = vpack.c.b16 %v393, %v392
          %v406 = vpack.c.b16 %v395, %v394
          %v407 = vpack.c.b16 %v397, %v396
          %v408 = vpack.c.b16 %v399, %v398
          %v409 = vpack.c.b16 %v401, %v400
          %418 = vmatprep.subr.bf16.mxu0 0
          %419 = vmatpush1.bf16.msra.mxu0 %v402
          %420 = vmatprep.subr.bf16.mxu0 0
          %421 = vmatpush1.bf16.msra.mxu0 %v403
          %422 = vmatprep.subr.bf16.mxu0 0
          %423 = vmatpush1.bf16.msra.mxu0 %v404
          %424 = vmatprep.subr.bf16.mxu0 0
          %425 = vmatpush1.bf16.msra.mxu0 %v405
          %426 = vmatprep.subr.bf16.mxu0 0
          %427 = vmatpush1.bf16.msra.mxu0 %v406
          %428 = vmatprep.subr.bf16.mxu0 0
          %429 = vmatpush1.bf16.msra.mxu0 %v407
          %430 = vmatprep.subr.bf16.mxu0 0
          %431 = vmatpush1.bf16.msra.mxu0 %v408
          %432 = vmatprep.subr.bf16.mxu0 0
          %433 = vmatpush1.bf16.msra.mxu0 %v409
          %434 = vmatprep.subr.bf16.mxu0 0
          %435 = vmatpush1.bf16.msra.mxu0 0
          %436 = vmatprep.subr.bf16.mxu0 0
          %437 = vmatpush1.bf16.msra.mxu0 0
          %438 = vmatprep.subr.bf16.mxu0 0
          %439 = vmatpush1.bf16.msra.mxu0 0
          %440 = vmatprep.subr.bf16.mxu0 0
          %441 = vmatpush1.bf16.msra.mxu0 0
          %442 = vmatprep.subr.bf16.mxu0 0
          %443 = vmatpush1.bf16.msra.mxu0 0
          %444 = vmatprep.subr.bf16.mxu0 0
          %445 = vmatpush1.bf16.msra.mxu0 0
          %446 = vmatprep.subr.bf16.mxu0 0
          %447 = vmatpush1.bf16.msra.mxu0 0
          %448 = vmatprep.subr.bf16.mxu0 0
          %449 = vmatpush1.bf16.msra.mxu0 0
          %450 = vmatprep.mubr.bf16.mxu0 0
          %451 = vmatmul.mubr.bf16.gmra.mrb[0].mxu0 %v343
          %v452 = vpop.f32.mrb[0].mxu0
          %v453 = vadd.f32 %v368, %v452
          %v454 = vpop.f32.mrb[0].mxu0
          %v455 = vpop.f32.mrb[0].mxu0
          %v456 = vadd.f32 %v368, %v455
          %v457 = vpop.f32.mrb[0].mxu0
          %458 = vmatprep.mubr.bf16.mxu0 0
          %459 = vmatmul.mubr.bf16.gmra.mrb[0].mxu0 %v344
          %v460 = vpop.f32.mrb[0].mxu0
          %v461 = vadd.f32 %v368, %v460
          %v462 = vpop.f32.mrb[0].mxu0
          %v463 = vpop.f32.mrb[0].mxu0
          %v464 = vadd.f32 %v368, %v463
          %v465 = vpop.f32.mrb[0].mxu0
          %466 = vmatprep.mubr.bf16.mxu0 0
          %467 = vmatmul.mubr.bf16.gmra.mrb[0].mxu0 %v345
          %v468 = vpop.f32.mrb[0].mxu0
          %v469 = vadd.f32 %v368, %v468
          %v470 = vpop.f32.mrb[0].mxu0
          %v471 = vpop.f32.mrb[0].mxu0
          %v472 = vadd.f32 %v368, %v471
          %v473 = vpop.f32.mrb[0].mxu0
          %474 = vmatprep.mubr.bf16.mxu0 0
          %475 = vmatmul.mubr.bf16.gmra.mrb[0].mxu0 %v346
          %v476 = vpop.f32.mrb[0].mxu0
          %v477 = vadd.f32 %v368, %v476
          %v478 = vpop.f32.mrb[0].mxu0
          %v479 = vpop.f32.mrb[0].mxu0
          %v480 = vadd.f32 %v368, %v479
          %v481 = vpop.f32.mrb[0].mxu0
          %482 = vdwg.mxu0
          %483 = vst [vmem:[%s300] sm:$0xff] %v453
          %484 = vst [vmem:[%s300 + $0x8] sm:$0xff] %v456
          %485 = vst [vmem:[%s300 + $0x10] sm:$0xff] %v461
          %486 = vst [vmem:[%s300 + $0x18] sm:$0xff] %v464
          %487 = vst [vmem:[%s300 + $0x20] sm:$0xff] %v469
          %488 = vst [vmem:[%s300 + $0x28] sm:$0xff] %v472
          %489 = vst [vmem:[%s300 + $0x30] sm:$0xff] %v477
          %490 = vst [vmem:[%s300 + $0x38] sm:$0xff] %v480
        $region60: #{tpu_custom_call.1} parent=39 // pred_fallthru
          _
        %p491 = scmp.lt.s32.totalorder %s27, 1
        %p492 = pnand %p312, %p491
        %p493 = pneg %p492
        // Predicated region
        $region61: #{tpu_custom_call.1} parent=39 // pred_check
          _
        $region62: #{tpu_custom_call.1} parent=39 // pred_check_branch
          %495 = sbr.rel (%p492) target = $region64
        $region63: #{tpu_custom_call.1} parent=39 // pred_region
          %p496 = scmp.lt.s32.totalorder %s27, 0
          %s497 = ssub.s32 0, %s27
          %s498 = scalar_select %p496, %s497, %s27
          %s499 = sand.u32 %s498, 1
          %s500 = ssub.s32 0, %s499
          %s501 = scalar_select %p496, %s500, %s499
          %s502 = smul.u32 %s501, 8
          %v503 = vld [vmem:[%s2] sm:$0x1]
          %v505 = vlaneseq
          %v506 = vshrl.u32 %v505, 7
          %v507 = vsub.s32 0, %v506
          %v508 = vrot.slane %v503, %v507
          %v510 = vld [vmem:[#allocation2] sm:$0xff]
          %v511 = vld [vmem:[%s266] sm:$0xff]
          %v512 = vld [vmem:[%s266 + $0x8] sm:$0xff]
          %v513 = vld [vmem:[%s266 + $0x10] sm:$0xff]
          %v514 = vpack.c.bf16 %v510, %v510
          %v515 = vld [vmem:[#allocation7] sm:$0xff]
          %v516 = vld [vmem:[#allocation7 + $0x8] sm:$0xf]
          %v517 = vld [vmem:[#allocation7 + $0xc] sm:$0xff]
          %v518 = vld [vmem:[#allocation7 + $0x14] sm:$0xf]
          %v519 = vld [vmem:[#allocation7 + $0x18] sm:$0xff]
          %v520 = vld [vmem:[#allocation7 + $0x20] sm:$0xf]
          %v521 = vld [vmem:[#allocation7 + $0x24] sm:$0xff]
          %v522 = vld [vmem:[#allocation7 + $0x2c] sm:$0xf]
          %v523 = vld [vmem:[#allocation7 + $0x30] sm:$0xff]
          %v524 = vld [vmem:[#allocation7 + $0x38] sm:$0xf]
          %v525 = vld [vmem:[#allocation7 + $0x3c] sm:$0xff]
          %v526 = vld [vmem:[#allocation7 + $0x44] sm:$0xf]
          %v527 = vld [vmem:[#allocation7 + $0x48] sm:$0xff]
          %v528 = vld [vmem:[#allocation7 + $0x50] sm:$0xf]
          %v529 = vld [vmem:[#allocation7 + $0x54] sm:$0xff]
          %v530 = vld [vmem:[#allocation7 + $0x5c] sm:$0xf]
          %v531 = vld [vmem:[#allocation7 + $0x60] sm:$0xff]
          %v532 = vld [vmem:[#allocation7 + $0x68] sm:$0xf]
          %v533 = vld [vmem:[#allocation7 + $0x6c] sm:$0xff]
          %v534 = vld [vmem:[#allocation7 + $0x74] sm:$0xf]
          %v535 = vld [vmem:[#allocation7 + $0x78] sm:$0xff]
          %v536 = vld [vmem:[#allocation7 + $0x80] sm:$0xf]
          %v537 = vld [vmem:[#allocation7 + $0x84] sm:$0xff]
          %v538 = vld [vmem:[#allocation7 + $0x8c] sm:$0xf]
          %v539 = vld [vmem:[#allocation7 + $0x90] sm:$0xff]
          %v540 = vld [vmem:[#allocation7 + $0x98] sm:$0xf]
          %v541 = vld [vmem:[#allocation7 + $0x9c] sm:$0xff]
          %v542 = vld [vmem:[#allocation7 + $0xa4] sm:$0xf]
          %v543 = vld [vmem:[#allocation7 + $0xa8] sm:$0xff]
          %v544 = vld [vmem:[#allocation7 + $0xb0] sm:$0xf]
          %v545 = vld [vmem:[#allocation7 + $0xb4] sm:$0xff]
          %v546 = vld [vmem:[#allocation7 + $0xbc] sm:$0xf]
          %v579 = vunpack.c.l.b16 %v515
          %v580 = vunpack.c.h.b16 %v515
          %v581 = vunpack.c.l.b16 %v516
          %v582 = vunpack.c.l.b16 %v517
          %v583 = vunpack.c.h.b16 %v517
          %v584 = vunpack.c.l.b16 %v518
          %v585 = vunpack.c.l.b16 %v519
          %v586 = vunpack.c.h.b16 %v519
          %v587 = vunpack.c.l.b16 %v520
          %v588 = vunpack.c.l.b16 %v521
          %v589 = vunpack.c.h.b16 %v521
          %v590 = vunpack.c.l.b16 %v522
          %v591 = vunpack.c.l.b16 %v523
          %v592 = vunpack.c.h.b16 %v523
          %v593 = vunpack.c.l.b16 %v524
          %v594 = vunpack.c.l.b16 %v525
          %v595 = vunpack.c.h.b16 %v525
          %v596 = vunpack.c.l.b16 %v526
          %v597 = vunpack.c.l.b16 %v527
          %v598 = vunpack.c.h.b16 %v527
          %v599 = vunpack.c.l.b16 %v528
          %v600 = vunpack.c.l.b16 %v529
          %v601 = vunpack.c.h.b16 %v529
          %v602 = vunpack.c.l.b16 %v530
          %v603 = vunpack.c.l.b16 %v531
          %v604 = vunpack.c.h.b16 %v531
          %v605 = vunpack.c.l.b16 %v532
          %v606 = vunpack.c.l.b16 %v533
          %v607 = vunpack.c.h.b16 %v533
          %v608 = vunpack.c.l.b16 %v534
          %v609 = vunpack.c.l.b16 %v535
          %v610 = vunpack.c.h.b16 %v535
          %v611 = vunpack.c.l.b16 %v536
          %v612 = vunpack.c.l.b16 %v537
          %v613 = vunpack.c.h.b16 %v537
          %v614 = vunpack.c.l.b16 %v538
          %v615 = vunpack.c.l.b16 %v539
          %v616 = vunpack.c.h.b16 %v539
          %v617 = vunpack.c.l.b16 %v540
          %v618 = vunpack.c.l.b16 %v541
          %v619 = vunpack.c.h.b16 %v541
          %v620 = vunpack.c.l.b16 %v542
          %v621 = vunpack.c.l.b16 %v543
          %v622 = vunpack.c.h.b16 %v543
          %v623 = vunpack.c.l.b16 %v544
          %v624 = vunpack.c.l.b16 %v545
          %v625 = vunpack.c.h.b16 %v545
          %v626 = vunpack.c.l.b16 %v546
          %v627 = vpack.c.b16 %v582, %v579
          %v628 = vpack.c.b16 %v583, %v580
          %v629 = vpack.c.b16 %v584, %v581
          %v630 = vpack.c.b16 %v588, %v585
          %v631 = vpack.c.b16 %v589, %v586
          %v632 = vpack.c.b16 %v590, %v587
          %v633 = vpack.c.b16 %v594, %v591
          %v634 = vpack.c.b16 %v595, %v592
          %v635 = vpack.c.b16 %v596, %v593
          %v636 = vpack.c.b16 %v600, %v597
          %v637 = vpack.c.b16 %v601, %v598
          %v638 = vpack.c.b16 %v602, %v599
          %v639 = vpack.c.b16 %v606, %v603
          %v640 = vpack.c.b16 %v607, %v604
          %v641 = vpack.c.b16 %v608, %v605
          %v642 = vpack.c.b16 %v612, %v609
          %v643 = vpack.c.b16 %v613, %v610
          %v644 = vpack.c.b16 %v614, %v611
          %v645 = vpack.c.b16 %v618, %v615
          %v646 = vpack.c.b16 %v619, %v616
          %v647 = vpack.c.b16 %v620, %v617
          %v648 = vpack.c.b16 %v624, %v621
          %v649 = vpack.c.b16 %v625, %v622
          %v650 = vpack.c.b16 %v626, %v623
          %675 = vmatprep.subr.bf16.mxu0 %v628
          %676 = vmatpush1.bf16.msra.mxu0 %v627
          %677 = vmatprep.subr.bf16.mxu0 %v631
          %678 = vmatpush1.bf16.msra.mxu0 %v630
          %679 = vmatprep.subr.bf16.mxu0 %v634
          %680 = vmatpush1.bf16.msra.mxu0 %v633
          %681 = vmatprep.subr.bf16.mxu0 %v637
          %682 = vmatpush1.bf16.msra.mxu0 %v636
          %683 = vmatprep.subr.bf16.mxu0 %v640
          %684 = vmatpush1.bf16.msra.mxu0 %v639
          %685 = vmatprep.subr.bf16.mxu0 %v643
          %686 = vmatpush1.bf16.msra.mxu0 %v642
          %687 = vmatprep.subr.bf16.mxu0 %v646
          %688 = vmatpush1.bf16.msra.mxu0 %v645
          %689 = vmatprep.subr.bf16.mxu0 %v649
          %690 = vmatpush1.bf16.msra.mxu0 %v648
          %691 = vmatprep.subr.bf16.mxu0 0
          %692 = vmatpush1.bf16.msra.mxu0 0
          %693 = vmatprep.subr.bf16.mxu0 0
          %694 = vmatpush1.bf16.msra.mxu0 0
          %695 = vmatprep.subr.bf16.mxu0 0
          %696 = vmatpush1.bf16.msra.mxu0 0
          %697 = vmatprep.subr.bf16.mxu0 0
          %698 = vmatpush1.bf16.msra.mxu0 0
          %699 = vmatprep.subr.bf16.mxu0 0
          %700 = vmatpush1.bf16.msra.mxu0 0
          %701 = vmatprep.subr.bf16.mxu0 0
          %702 = vmatpush1.bf16.msra.mxu0 0
          %703 = vmatprep.subr.bf16.mxu0 0
          %704 = vmatpush1.bf16.msra.mxu0 0
          %705 = vmatprep.subr.bf16.mxu0 0
          %706 = vmatpush1.bf16.msra.mxu0 0
          %707 = vmatprep.mubr.bf16.mxu0 0
          %708 = vmatmul.mubr.bf16.gmra.mrb[0].mxu0 %v514
          %v709 = vpop.f32.mrb[0].mxu0
          %v710 = vadd.f32 0.0, %v709
          %v711 = vpop.f32.mrb[0].mxu0
          %v712 = vadd.f32 0.0, %v711
          %v713 = vpop.f32.mrb[0].mxu0
          %v714 = vpop.f32.mrb[0].mxu0
          %715 = vdwg.mxu0
          %716 = vmatprep.subr.bf16.mxu0 0
          %717 = vmatpush1.bf16.msra.mxu0 %v629
          %718 = vmatprep.subr.bf16.mxu0 0
          %719 = vmatpush1.bf16.msra.mxu0 %v632
          %720 = vmatprep.subr.bf16.mxu0 0
          %721 = vmatpush1.bf16.msra.mxu0 %v635
          %722 = vmatprep.subr.bf16.mxu0 0
          %723 = vmatpush1.bf16.msra.mxu0 %v638
          %724 = vmatprep.subr.bf16.mxu0 0
          %725 = vmatpush1.bf16.msra.mxu0 %v641
          %726 = vmatprep.subr.bf16.mxu0 0
          %727 = vmatpush1.bf16.msra.mxu0 %v644
          %728 = vmatprep.subr.bf16.mxu0 0
          %729 = vmatpush1.bf16.msra.mxu0 %v647
          %730 = vmatprep.subr.bf16.mxu0 0
          %731 = vmatpush1.bf16.msra.mxu0 %v650
          %732 = vmatprep.subr.bf16.mxu0 0
          %733 = vmatpush1.bf16.msra.mxu0 0
          %734 = vmatprep.subr.bf16.mxu0 0
          %735 = vmatpush1.bf16.msra.mxu0 0
          %736 = vmatprep.subr.bf16.mxu0 0
          %737 = vmatpush1.bf16.msra.mxu0 0
          %738 = vmatprep.subr.bf16.mxu0 0
          %739 = vmatpush1.bf16.msra.mxu0 0
          %740 = vmatprep.subr.bf16.mxu0 0
          %741 = vmatpush1.bf16.msra.mxu0 0
          %742 = vmatprep.subr.bf16.mxu0 0
          %743 = vmatpush1.bf16.msra.mxu0 0
          %744 = vmatprep.subr.bf16.mxu0 0
          %745 = vmatpush1.bf16.msra.mxu0 0
          %746 = vmatprep.subr.bf16.mxu0 0
          %747 = vmatpush1.bf16.msra.mxu0 0
          %748 = vmatprep.mubr.bf16.mxu0 0
          %749 = vmatmul.mubr.bf16.gmra.mrb[0].mxu0 %v514
          %v750 = vpop.f32.mrb[0].mxu0
          %v751 = vadd.f32 0.0, %v750
          %v752 = vpop.f32.mrb[0].mxu0
          %v753 = vpop.f32.mrb[0].mxu0
          %v754 = vpop.f32.mrb[0].mxu0
          %755 = vdwg.mxu0
          %v756 = vadd.f32 %v511, %v710
          %v757 = vxor.u32 %v756, 2147483648
          %v758 = vmul.f32 %v757, 1.442695
          %v759 = vpow.pop %v758
          %v760 = vadd.f32 %v759, 1.0
          %v761 = vrcp.pop %v760
          %v762 = vmul.f32 1.0, %v761
          %v763 = vadd.f32 %v512, %v712
          %v764 = vxor.u32 %v763, 2147483648
          %v765 = vmul.f32 %v764, 1.442695
          %v766 = vpow.pop %v765
          %v767 = vadd.f32 %v766, 1.0
          %v768 = vrcp.pop %v767
          %v769 = vmul.f32 1.0, %v768
          %v770 = vadd.f32 %v751, %v508
          %v771 = vmul.f32 %v762, %v770
          %v772 = vadd.f32 %v513, %v771
          %v773 = vtanh.pop %v772
          %v774 = vsub.f32 1.0, %v769
          %v775 = vmul.f32 %v774, %v773
          %v776 = vmul.f32 %v769, %v510
          %v777 = vadd.f32 %v775, %v776
          %s778 = smul.u32 %s502, 8
          %s779 = scalar_lea.vmem [#allocation3], %s778
          %780 = vst [vmem:[%s779] sm:$0xff] %v777
          %s781 = scalar_lea.vmem %s266, 24 [#allocation4]
          %v782 = vld [vmem:[%s781] sm:$0xff]
          %v783 = vld [vmem:[%s781 + $0x8] sm:$0xff]
          %v784 = vld [vmem:[%s781 + $0x10] sm:$0xff]
          %v785 = vpack.c.bf16 %v777, %v777
          %v786 = vld [vmem:[#allocation7] sm:$0xff]
          %v787 = vld [vmem:[#allocation7 + $0x8] sm:$0xf]
          %v788 = vld [vmem:[#allocation7 + $0xc] sm:$0xff]
          %v789 = vld [vmem:[#allocation7 + $0x14] sm:$0xf]
          %v790 = vld [vmem:[#allocation7 + $0x18] sm:$0xff]
          %v791 = vld [vmem:[#allocation7 + $0x20] sm:$0xf]
          %v792 = vld [vmem:[#allocation7 + $0x24] sm:$0xff]
          %v793 = vld [vmem:[#allocation7 + $0x2c] sm:$0xf]
          %v794 = vld [vmem:[#allocation7 + $0x30] sm:$0xff]
          %v795 = vld [vmem:[#allocation7 + $0x38] sm:$0xf]
          %v796 = vld [vmem:[#allocation7 + $0x3c] sm:$0xff]
          %v797 = vld [vmem:[#allocation7 + $0x44] sm:$0xf]
          %v798 = vld [vmem:[#allocation7 + $0x48] sm:$0xff]
          %v799 = vld [vmem:[#allocation7 + $0x50] sm:$0xf]
          %v800 = vld [vmem:[#allocation7 + $0x54] sm:$0xff]
          %v801 = vld [vmem:[#allocation7 + $0x5c] sm:$0xf]
          %v802 = vld [vmem:[#allocation7 + $0x60] sm:$0xff]
          %v803 = vld [vmem:[#allocation7 + $0x68] sm:$0xf]
          %v804 = vld [vmem:[#allocation7 + $0x6c] sm:$0xff]
          %v805 = vld [vmem:[#allocation7 + $0x74] sm:$0xf]
          %v806 = vld [vmem:[#allocation7 + $0x78] sm:$0xff]
          %v807 = vld [vmem:[#allocation7 + $0x80] sm:$0xf]
          %v808 = vld [vmem:[#allocation7 + $0x84] sm:$0xff]
          %v809 = vld [vmem:[#allocation7 + $0x8c] sm:$0xf]
          %v810 = vld [vmem:[#allocation7 + $0x90] sm:$0xff]
          %v811 = vld [vmem:[#allocation7 + $0x98] sm:$0xf]
          %v812 = vld [vmem:[#allocation7 + $0x9c] sm:$0xff]
          %v813 = vld [vmem:[#allocation7 + $0xa4] sm:$0xf]
          %v814 = vld [vmem:[#allocation7 + $0xa8] sm:$0xff]
          %v815 = vld [vmem:[#allocation7 + $0xb0] sm:$0xf]
          %v816 = vld [vmem:[#allocation7 + $0xb4] sm:$0xff]
          %v817 = vld [vmem:[#allocation7 + $0xbc] sm:$0xf]
          %v850 = vunpack.c.l.b16 %v786
          %v851 = vunpack.c.h.b16 %v786
          %v852 = vunpack.c.l.b16 %v787
          %v853 = vunpack.c.l.b16 %v788
          %v854 = vunpack.c.h.b16 %v788
          %v855 = vunpack.c.l.b16 %v789
          %v856 = vunpack.c.l.b16 %v790
          %v857 = vunpack.c.h.b16 %v790
          %v858 = vunpack.c.l.b16 %v791
          %v859 = vunpack.c.l.b16 %v792
          %v860 = vunpack.c.h.b16 %v792
          %v861 = vunpack.c.l.b16 %v793
          %v862 = vunpack.c.l.b16 %v794
          %v863 = vunpack.c.h.b16 %v794
          %v864 = vunpack.c.l.b16 %v795
          %v865 = vunpack.c.l.b16 %v796
          %v866 = vunpack.c.h.b16 %v796
          %v867 = vunpack.c.l.b16 %v797
          %v868 = vunpack.c.l.b16 %v798
          %v869 = vunpack.c.h.b16 %v798
          %v870 = vunpack.c.l.b16 %v799
          %v871 = vunpack.c.l.b16 %v800
          %v872 = vunpack.c.h.b16 %v800
          %v873 = vunpack.c.l.b16 %v801
          %v874 = vunpack.c.l.b16 %v802
          %v875 = vunpack.c.h.b16 %v802
          %v876 = vunpack.c.l.b16 %v803
          %v877 = vunpack.c.l.b16 %v804
          %v878 = vunpack.c.h.b16 %v804
          %v879 = vunpack.c.l.b16 %v805
          %v880 = vunpack.c.l.b16 %v806
          %v881 = vunpack.c.h.b16 %v806
          %v882 = vunpack.c.l.b16 %v807
          %v883 = vunpack.c.l.b16 %v808
          %v884 = vunpack.c.h.b16 %v808
          %v885 = vunpack.c.l.b16 %v809
          %v886 = vunpack.c.l.b16 %v810
          %v887 = vunpack.c.h.b16 %v810
          %v888 = vunpack.c.l.b16 %v811
          %v889 = vunpack.c.l.b16 %v812
          %v890 = vunpack.c.h.b16 %v812
          %v891 = vunpack.c.l.b16 %v813
          %v892 = vunpack.c.l.b16 %v814
          %v893 = vunpack.c.h.b16 %v814
          %v894 = vunpack.c.l.b16 %v815
          %v895 = vunpack.c.l.b16 %v816
          %v896 = vunpack.c.h.b16 %v816
          %v897 = vunpack.c.l.b16 %v817
          %v898 = vpack.c.b16 %v853, %v850
          %v899 = vpack.c.b16 %v854, %v851
          %v900 = vpack.c.b16 %v855, %v852
          %v901 = vpack.c.b16 %v859, %v856
          %v902 = vpack.c.b16 %v860, %v857
          %v903 = vpack.c.b16 %v861, %v858
          %v904 = vpack.c.b16 %v865, %v862
          %v905 = vpack.c.b16 %v866, %v863
          %v906 = vpack.c.b16 %v867, %v864
          %v907 = vpack.c.b16 %v871, %v868
          %v908 = vpack.c.b16 %v872, %v869
          %v909 = vpack.c.b16 %v873, %v870
          %v910 = vpack.c.b16 %v877, %v874
          %v911 = vpack.c.b16 %v878, %v875
          %v912 = vpack.c.b16 %v879, %v876
          %v913 = vpack.c.b16 %v883, %v880
          %v914 = vpack.c.b16 %v884, %v881
          %v915 = vpack.c.b16 %v885, %v882
          %v916 = vpack.c.b16 %v889, %v886
          %v917 = vpack.c.b16 %v890, %v887
          %v918 = vpack.c.b16 %v891, %v888
          %v919 = vpack.c.b16 %v895, %v892
          %v920 = vpack.c.b16 %v896, %v893
          %v921 = vpack.c.b16 %v897, %v894
          %946 = vmatprep.subr.bf16.mxu0 %v899
          %947 = vmatpush1.bf16.msra.mxu0 %v898
          %948 = vmatprep.subr.bf16.mxu0 %v902
          %949 = vmatpush1.bf16.msra.mxu0 %v901
          %950 = vmatprep.subr.bf16.mxu0 %v905
          %951 = vmatpush1.bf16.msra.mxu0 %v904
          %952 = vmatprep.subr.bf16.mxu0 %v908
          %953 = vmatpush1.bf16.msra.mxu0 %v907
          %954 = vmatprep.subr.bf16.mxu0 %v911
          %955 = vmatpush1.bf16.msra.mxu0 %v910
          %956 = vmatprep.subr.bf16.mxu0 %v914
          %957 = vmatpush1.bf16.msra.mxu0 %v913
          %958 = vmatprep.subr.bf16.mxu0 %v917
          %959 = vmatpush1.bf16.msra.mxu0 %v916
          %960 = vmatprep.subr.bf16.mxu0 %v920
          %961 = vmatpush1.bf16.msra.mxu0 %v919
          %962 = vmatprep.subr.bf16.mxu0 0
          %963 = vmatpush1.bf16.msra.mxu0 0
          %964 = vmatprep.subr.bf16.mxu0 0
          %965 = vmatpush1.bf16.msra.mxu0 0
          %966 = vmatprep.subr.bf16.mxu0 0
          %967 = vmatpush1.bf16.msra.mxu0 0
          %968 = vmatprep.subr.bf16.mxu0 0
          %969 = vmatpush1.bf16.msra.mxu0 0
          %970 = vmatprep.subr.bf16.mxu0 0
          %971 = vmatpush1.bf16.msra.mxu0 0
          %972 = vmatprep.subr.bf16.mxu0 0
          %973 = vmatpush1.bf16.msra.mxu0 0
          %974 = vmatprep.subr.bf16.mxu0 0
          %975 = vmatpush1.bf16.msra.mxu0 0
          %976 = vmatprep.subr.bf16.mxu0 0
          %977 = vmatpush1.bf16.msra.mxu0 0
          %978 = vmatprep.mubr.bf16.mxu0 0
          %979 = vmatmul.mubr.bf16.gmra.mrb[0].mxu0 %v785
          %v980 = vpop.f32.mrb[0].mxu0
          %v981 = vadd.f32 0.0, %v980
          %v982 = vpop.f32.mrb[0].mxu0
          %v983 = vadd.f32 0.0, %v982
          %v984 = vpop.f32.mrb[0].mxu0
          %v985 = vpop.f32.mrb[0].mxu0
          %986 = vdwg.mxu0
          %987 = vmatprep.subr.bf16.mxu0 0
          %988 = vmatpush1.bf16.msra.mxu0 %v900
          %989 = vmatprep.subr.bf16.mxu0 0
          %990 = vmatpush1.bf16.msra.mxu0 %v903
          %991 = vmatprep.subr.bf16.mxu0 0
          %992 = vmatpush1.bf16.msra.mxu0 %v906
          %993 = vmatprep.subr.bf16.mxu0 0
          %994 = vmatpush1.bf16.msra.mxu0 %v909
          %995 = vmatprep.subr.bf16.mxu0 0
          %996 = vmatpush1.bf16.msra.mxu0 %v912
          %997 = vmatprep.subr.bf16.mxu0 0
          %998 = vmatpush1.bf16.msra.mxu0 %v915
          %999 = vmatprep.subr.bf16.mxu0 0
          %1000 = vmatpush1.bf16.msra.mxu0 %v918
          %1001 = vmatprep.subr.bf16.mxu0 0
          %1002 = vmatpush1.bf16.msra.mxu0 %v921
          %1003 = vmatprep.subr.bf16.mxu0 0
          %1004 = vmatpush1.bf16.msra.mxu0 0
          %1005 = vmatprep.subr.bf16.mxu0 0
          %1006 = vmatpush1.bf16.msra.mxu0 0
          %1007 = vmatprep.subr.bf16.mxu0 0
          %1008 = vmatpush1.bf16.msra.mxu0 0
          %1009 = vmatprep.subr.bf16.mxu0 0
          %1010 = vmatpush1.bf16.msra.mxu0 0
          %1011 = vmatprep.subr.bf16.mxu0 0
          %1012 = vmatpush1.bf16.msra.mxu0 0
          %1013 = vmatprep.subr.bf16.mxu0 0
          %1014 = vmatpush1.bf16.msra.mxu0 0
          %1015 = vmatprep.subr.bf16.mxu0 0
          %1016 = vmatpush1.bf16.msra.mxu0 0
          %1017 = vmatprep.subr.bf16.mxu0 0
          %1018 = vmatpush1.bf16.msra.mxu0 0
          %1019 = vmatprep.mubr.bf16.mxu0 0
          %1020 = vmatmul.mubr.bf16.gmra.mrb[0].mxu0 %v785
          %v1021 = vpop.f32.mrb[0].mxu0
          %v1022 = vadd.f32 0.0, %v1021
          %v1023 = vpop.f32.mrb[0].mxu0
          %v1024 = vpop.f32.mrb[0].mxu0
          %v1025 = vpop.f32.mrb[0].mxu0
          %1026 = vdwg.mxu0
          %v1027 = vadd.f32 %v782, %v981
          %v1028 = vxor.u32 %v1027, 2147483648
          %v1029 = vmul.f32 %v1028, 1.442695
          %v1030 = vpow.pop %v1029
          %v1031 = vadd.f32 %v1030, 1.0
          %v1032 = vrcp.pop %v1031
          %v1033 = vmul.f32 1.0, %v1032
          %v1034 = vadd.f32 %v783, %v983
          %v1035 = vxor.u32 %v1034, 2147483648
          %v1036 = vmul.f32 %v1035, 1.442695
          %v1037 = vpow.pop %v1036
          %v1038 = vadd.f32 %v1037, 1.0
          %v1039 = vrcp.pop %v1038
          %v1040 = vmul.f32 1.0, %v1039
          %v1041 = vadd.f32 %v1022, %v508
          %v1042 = vmul.f32 %v1033, %v1041
          %v1043 = vadd.f32 %v784, %v1042
          %v1044 = vtanh.pop %v1043
          %v1045 = vsub.f32 1.0, %v1040
          %v1046 = vmul.f32 %v1045, %v1044
          %v1047 = vmul.f32 %v1040, %v777
          %v1048 = vadd.f32 %v1046, %v1047
          %s1049 = sadd.s32 %s502, 1
          %s1050 = smul.u32 %s1049, 8
          %s1051 = scalar_lea.vmem [#allocation3], %s1050
          %1052 = vst [vmem:[%s1051] sm:$0xff] %v1048
          %s1053 = scalar_lea.vmem %s266, 48 [#allocation4]
          %v1054 = vld [vmem:[%s1053] sm:$0xff]
          %v1055 = vld [vmem:[%s1053 + $0x8] sm:$0xff]
          %v1056 = vld [vmem:[%s1053 + $0x10] sm:$0xff]
          %v1057 = vpack.c.bf16 %v1048, %v1048
          %v1058 = vld [vmem:[#allocation7] sm:$0xff]
          %v1059 = vld [vmem:[#allocation7 + $0x8] sm:$0xf]
          %v1060 = vld [vmem:[#allocation7 + $0xc] sm:$0xff]
          %v1061 = vld [vmem:[#allocation7 + $0x14] sm:$0xf]
          %v1062 = vld [vmem:[#allocation7 + $0x18] sm:$0xff]
          %v1063 = vld [vmem:[#allocation7 + $0x20] sm:$0xf]
          %v1064 = vld [vmem:[#allocation7 + $0x24] sm:$0xff]
          %v1065 = vld [vmem:[#allocation7 + $0x2c] sm:$0xf]
          %v1066 = vld [vmem:[#allocation7 + $0x30] sm:$0xff]
          %v1067 = vld [vmem:[#allocation7 + $0x38] sm:$0xf]
          %v1068 = vld [vmem:[#allocation7 + $0x3c] sm:$0xff]
          %v1069 = vld [vmem:[#allocation7 + $0x44] sm:$0xf]
          %v1070 = vld [vmem:[#allocation7 + $0x48] sm:$0xff]
          %v1071 = vld [vmem:[#allocation7 + $0x50] sm:$0xf]
          %v1072 = vld [vmem:[#allocation7 + $0x54] sm:$0xff]
          %v1073 = vld [vmem:[#allocation7 + $0x5c] sm:$0xf]
          %v1074 = vld [vmem:[#allocation7 + $0x60] sm:$0xff]
          %v1075 = vld [vmem:[#allocation7 + $0x68] sm:$0xf]
          %v1076 = vld [vmem:[#allocation7 + $0x6c] sm:$0xff]
          %v1077 = vld [vmem:[#allocation7 + $0x74] sm:$0xf]
          %v1078 = vld [vmem:[#allocation7 + $0x78] sm:$0xff]
          %v1079 = vld [vmem:[#allocation7 + $0x80] sm:$0xf]
          %v1080 = vld [vmem:[#allocation7 + $0x84] sm:$0xff]
          %v1081 = vld [vmem:[#allocation7 + $0x8c] sm:$0xf]
          %v1082 = vld [vmem:[#allocation7 + $0x90] sm:$0xff]
          %v1083 = vld [vmem:[#allocation7 + $0x98] sm:$0xf]
          %v1084 = vld [vmem:[#allocation7 + $0x9c] sm:$0xff]
          %v1085 = vld [vmem:[#allocation7 + $0xa4] sm:$0xf]
          %v1086 = vld [vmem:[#allocation7 + $0xa8] sm:$0xff]
          %v1087 = vld [vmem:[#allocation7 + $0xb0] sm:$0xf]
          %v1088 = vld [vmem:[#allocation7 + $0xb4] sm:$0xff]
          %v1089 = vld [vmem:[#allocation7 + $0xbc] sm:$0xf]
          %v1122 = vunpack.c.l.b16 %v1058
          %v1123 = vunpack.c.h.b16 %v1058
          %v1124 = vunpack.c.l.b16 %v1059
          %v1125 = vunpack.c.l.b16 %v1060
          %v1126 = vunpack.c.h.b16 %v1060
          %v1127 = vunpack.c.l.b16 %v1061
          %v1128 = vunpack.c.l.b16 %v1062
          %v1129 = vunpack.c.h.b16 %v1062
          %v1130 = vunpack.c.l.b16 %v1063
          %v1131 = vunpack.c.l.b16 %v1064
          %v1132 = vunpack.c.h.b16 %v1064
          %v1133 = vunpack.c.l.b16 %v1065
          %v1134 = vunpack.c.l.b16 %v1066
          %v1135 = vunpack.c.h.b16 %v1066
          %v1136 = vunpack.c.l.b16 %v1067
          %v1137 = vunpack.c.l.b16 %v1068
          %v1138 = vunpack.c.h.b16 %v1068
          %v1139 = vunpack.c.l.b16 %v1069
          %v1140 = vunpack.c.l.b16 %v1070
          %v1141 = vunpack.c.h.b16 %v1070
          %v1142 = vunpack.c.l.b16 %v1071
          %v1143 = vunpack.c.l.b16 %v1072
          %v1144 = vunpack.c.h.b16 %v1072
          %v1145 = vunpack.c.l.b16 %v1073
          %v1146 = vunpack.c.l.b16 %v1074
          %v1147 = vunpack.c.h.b16 %v1074
          %v1148 = vunpack.c.l.b16 %v1075
          %v1149 = vunpack.c.l.b16 %v1076
          %v1150 = vunpack.c.h.b16 %v1076
          %v1151 = vunpack.c.l.b16 %v1077
          %v1152 = vunpack.c.l.b16 %v1078
          %v1153 = vunpack.c.h.b16 %v1078
          %v1154 = vunpack.c.l.b16 %v1079
          %v1155 = vunpack.c.l.b16 %v1080
          %v1156 = vunpack.c.h.b16 %v1080
          %v1157 = vunpack.c.l.b16 %v1081
          %v1158 = vunpack.c.l.b16 %v1082
          %v1159 = vunpack.c.h.b16 %v1082
          %v1160 = vunpack.c.l.b16 %v1083
          %v1161 = vunpack.c.l.b16 %v1084
          %v1162 = vunpack.c.h.b16 %v1084
          %v1163 = vunpack.c.l.b16 %v1085
          %v1164 = vunpack.c.l.b16 %v1086
          %v1165 = vunpack.c.h.b16 %v1086
          %v1166 = vunpack.c.l.b16 %v1087
          %v1167 = vunpack.c.l.b16 %v1088
          %v1168 = vunpack.c.h.b16 %v1088
          %v1169 = vunpack.c.l.b16 %v1089
          %v1170 = vpack.c.b16 %v1125, %v1122
          %v1171 = vpack.c.b16 %v1126, %v1123
          %v1172 = vpack.c.b16 %v1127, %v1124
          %v1173 = vpack.c.b16 %v1131, %v1128
          %v1174 = vpack.c.b16 %v1132, %v1129
          %v1175 = vpack.c.b16 %v1133, %v1130
          %v1176 = vpack.c.b16 %v1137, %v1134
          %v1177 = vpack.c.b16 %v1138, %v1135
          %v1178 = vpack.c.b16 %v1139, %v1136
          %v1179 = vpack.c.b16 %v1143, %v1140
          %v1180 = vpack.c.b16 %v1144, %v1141
          %v1181 = vpack.c.b16 %v1145, %v1142
          %v1182 = vpack.c.b16 %v1149, %v1146
          %v1183 = vpack.c.b16 %v1150, %v1147
          %v1184 = vpack.c.b16 %v1151, %v1148
          %v1185 = vpack.c.b16 %v1155, %v1152
          %v1186 = vpack.c.b16 %v1156, %v1153
          %v1187 = vpack.c.b16 %v1157, %v1154
          %v1188 = vpack.c.b16 %v1161, %v1158
          %v1189 = vpack.c.b16 %v1162, %v1159
          %v1190 = vpack.c.b16 %v1163, %v1160
          %v1191 = vpack.c.b16 %v1167, %v1164
          %v1192 = vpack.c.b16 %v1168, %v1165
          %v1193 = vpack.c.b16 %v1169, %v1166
          %1218 = vmatprep.subr.bf16.mxu0 %v1171
          %1219 = vmatpush1.bf16.msra.mxu0 %v1170
          %1220 = vmatprep.subr.bf16.mxu0 %v1174
          %1221 = vmatpush1.bf16.msra.mxu0 %v1173
          %1222 = vmatprep.subr.bf16.mxu0 %v1177
          %1223 = vmatpush1.bf16.msra.mxu0 %v1176
          %1224 = vmatprep.subr.bf16.mxu0 %v1180
          %1225 = vmatpush1.bf16.msra.mxu0 %v1179
          %1226 = vmatprep.subr.bf16.mxu0 %v1183
          %1227 = vmatpush1.bf16.msra.mxu0 %v1182
          %1228 = vmatprep.subr.bf16.mxu0 %v1186
          %1229 = vmatpush1.bf16.msra.mxu0 %v1185
          %1230 = vmatprep.subr.bf16.mxu0 %v1189
          %1231 = vmatpush1.bf16.msra.mxu0 %v1188
          %1232 = vmatprep.subr.bf16.mxu0 %v1192
          %1233 = vmatpush1.bf16.msra.mxu0 %v1191
          %1234 = vmatprep.subr.bf16.mxu0 0
          %1235 = vmatpush1.bf16.msra.mxu0 0
          %1236 = vmatprep.subr.bf16.mxu0 0
          %1237 = vmatpush1.bf16.msra.mxu0 0
          %1238 = vmatprep.subr.bf16.mxu0 0
          %1239 = vmatpush1.bf16.msra.mxu0 0
          %1240 = vmatprep.subr.bf16.mxu0 0
          %1241 = vmatpush1.bf16.msra.mxu0 0
          %1242 = vmatprep.subr.bf16.mxu0 0
          %1243 = vmatpush1.bf16.msra.mxu0 0
          %1244 = vmatprep.subr.bf16.mxu0 0
          %1245 = vmatpush1.bf16.msra.mxu0 0
          %1246 = vmatprep.subr.bf16.mxu0 0
          %1247 = vmatpush1.bf16.msra.mxu0 0
          %1248 = vmatprep.subr.bf16.mxu0 0
          %1249 = vmatpush1.bf16.msra.mxu0 0
          %1250 = vmatprep.mubr.bf16.mxu0 0
          %1251 = vmatmul.mubr.bf16.gmra.mrb[0].mxu0 %v1057
          %v1252 = vpop.f32.mrb[0].mxu0
          %v1253 = vadd.f32 0.0, %v1252
          %v1254 = vpop.f32.mrb[0].mxu0
          %v1255 = vadd.f32 0.0, %v1254
          %v1256 = vpop.f32.mrb[0].mxu0
          %v1257 = vpop.f32.mrb[0].mxu0
          %1258 = vdwg.mxu0
          %1259 = vmatprep.subr.bf16.mxu0 0
          %1260 = vmatpush1.bf16.msra.mxu0 %v1172
          %1261 = vmatprep.subr.bf16.mxu0 0
          %1262 = vmatpush1.bf16.msra.mxu0 %v1175
          %1263 = vmatprep.subr.bf16.mxu0 0
          %1264 = vmatpush1.bf16.msra.mxu0 %v1178
          %1265 = vmatprep.subr.bf16.mxu0 0
          %1266 = vmatpush1.bf16.msra.mxu0 %v1181
          %1267 = vmatprep.subr.bf16.mxu0 0
          %1268 = vmatpush1.bf16.msra.mxu0 %v1184
          %1269 = vmatprep.subr.bf16.mxu0 0
          %1270 = vmatpush1.bf16.msra.mxu0 %v1187
          %1271 = vmatprep.subr.bf16.mxu0 0
          %1272 = vmatpush1.bf16.msra.mxu0 %v1190
          %1273 = vmatprep.subr.bf16.mxu0 0
          %1274 = vmatpush1.bf16.msra.mxu0 %v1193
          %1275 = vmatprep.subr.bf16.mxu0 0
          %1276 = vmatpush1.bf16.msra.mxu0 0
          %1277 = vmatprep.subr.bf16.mxu0 0
          %1278 = vmatpush1.bf16.msra.mxu0 0
          %1279 = vmatprep.subr.bf16.mxu0 0
          %1280 = vmatpush1.bf16.msra.mxu0 0
          %1281 = vmatprep.subr.bf16.mxu0 0
          %1282 = vmatpush1.bf16.msra.mxu0 0
          %1283 = vmatprep.subr.bf16.mxu0 0
          %1284 = vmatpush1.bf16.msra.mxu0 0
          %1285 = vmatprep.subr.bf16.mxu0 0
          %1286 = vmatpush1.bf16.msra.mxu0 0
          %1287 = vmatprep.subr.bf16.mxu0 0
          %1288 = vmatpush1.bf16.msra.mxu0 0
          %1289 = vmatprep.subr.bf16.mxu0 0
          %1290 = vmatpush1.bf16.msra.mxu0 0
          %1291 = vmatprep.mubr.bf16.mxu0 0
          %1292 = vmatmul.mubr.bf16.gmra.mrb[0].mxu0 %v1057
          %v1293 = vpop.f32.mrb[0].mxu0
          %v1294 = vadd.f32 0.0, %v1293
          %v1295 = vpop.f32.mrb[0].mxu0
          %v1296 = vpop.f32.mrb[0].mxu0
          %v1297 = vpop.f32.mrb[0].mxu0
          %1298 = vdwg.mxu0
          %v1299 = vadd.f32 %v1054, %v1253
          %v1300 = vxor.u32 %v1299, 2147483648
          %v1301 = vmul.f32 %v1300, 1.442695
          %v1302 = vpow.pop %v1301
          %v1303 = vadd.f32 %v1302, 1.0
          %v1304 = vrcp.pop %v1303
          %v1305 = vmul.f32 1.0, %v1304
          %v1306 = vadd.f32 %v1055, %v1255
          %v1307 = vxor.u32 %v1306, 2147483648
          %v1308 = vmul.f32 %v1307, 1.442695
          %v1309 = vpow.pop %v1308
          %v1310 = vadd.f32 %v1309, 1.0
          %v1311 = vrcp.pop %v1310
          %v1312 = vmul.f32 1.0, %v1311
          %v1313 = vadd.f32 %v1294, %v508
          %v1314 = vmul.f32 %v1305, %v1313
          %v1315 = vadd.f32 %v1056, %v1314
          %v1316 = vtanh.pop %v1315
          %v1317 = vsub.f32 1.0, %v1312
          %v1318 = vmul.f32 %v1317, %v1316
          %v1319 = vmul.f32 %v1312, %v1048
          %v1320 = vadd.f32 %v1318, %v1319
          %s1321 = sadd.s32 %s502, 2
          %s1322 = smul.u32 %s1321, 8
          %s1323 = scalar_lea.vmem [#allocation3], %s1322
          %1324 = vst [vmem:[%s1323] sm:$0xff] %v1320
          %s1325 = scalar_lea.vmem %s266, 72 [#allocation4]
          %v1326 = vld [vmem:[%s1325] sm:$0xff]
          %v1327 = vld [vmem:[%s1325 + $0x8] sm:$0xff]
          %v1328 = vld [vmem:[%s1325 + $0x10] sm:$0xff]
          %v1329 = vpack.c.bf16 %v1320, %v1320
          %v1330 = vld [vmem:[#allocation7] sm:$0xff]
          %v1331 = vld [vmem:[#allocation7 + $0x8] sm:$0xf]
          %v1332 = vld [vmem:[#allocation7 + $0xc] sm:$0xff]
          %v1333 = vld [vmem:[#allocation7 + $0x14] sm:$0xf]
          %v1334 = vld [vmem:[#allocation7 + $0x18] sm:$0xff]
          %v1335 = vld [vmem:[#allocation7 + $0x20] sm:$0xf]
          %v1336 = vld [vmem:[#allocation7 + $0x24] sm:$0xff]
          %v1337 = vld [vmem:[#allocation7 + $0x2c] sm:$0xf]
          %v1338 = vld [vmem:[#allocation7 + $0x30] sm:$0xff]
          %v1339 = vld [vmem:[#allocation7 + $0x38] sm:$0xf]
          %v1340 = vld [vmem:[#allocation7 + $0x3c] sm:$0xff]
          %v1341 = vld [vmem:[#allocation7 + $0x44] sm:$0xf]
          %v1342 = vld [vmem:[#allocation7 + $0x48] sm:$0xff]
          %v1343 = vld [vmem:[#allocation7 + $0x50] sm:$0xf]
          %v1344 = vld [vmem:[#allocation7 + $0x54] sm:$0xff]
          %v1345 = vld [vmem:[#allocation7 + $0x5c] sm:$0xf]
          %v1346 = vld [vmem:[#allocation7 + $0x60] sm:$0xff]
          %v1347 = vld [vmem:[#allocation7 + $0x68] sm:$0xf]
          %v1348 = vld [vmem:[#allocation7 + $0x6c] sm:$0xff]
          %v1349 = vld [vmem:[#allocation7 + $0x74] sm:$0xf]
          %v1350 = vld [vmem:[#allocation7 + $0x78] sm:$0xff]
          %v1351 = vld [vmem:[#allocation7 + $0x80] sm:$0xf]
          %v1352 = vld [vmem:[#allocation7 + $0x84] sm:$0xff]
          %v1353 = vld [vmem:[#allocation7 + $0x8c] sm:$0xf]
          %v1354 = vld [vmem:[#allocation7 + $0x90] sm:$0xff]
          %v1355 = vld [vmem:[#allocation7 + $0x98] sm:$0xf]
          %v1356 = vld [vmem:[#allocation7 + $0x9c] sm:$0xff]
          %v1357 = vld [vmem:[#allocation7 + $0xa4] sm:$0xf]
          %v1358 = vld [vmem:[#allocation7 + $0xa8] sm:$0xff]
          %v1359 = vld [vmem:[#allocation7 + $0xb0] sm:$0xf]
          %v1360 = vld [vmem:[#allocation7 + $0xb4] sm:$0xff]
          %v1361 = vld [vmem:[#allocation7 + $0xbc] sm:$0xf]
          %v1394 = vunpack.c.l.b16 %v1330
          %v1395 = vunpack.c.h.b16 %v1330
          %v1396 = vunpack.c.l.b16 %v1331
          %v1397 = vunpack.c.l.b16 %v1332
          %v1398 = vunpack.c.h.b16 %v1332
          %v1399 = vunpack.c.l.b16 %v1333
          %v1400 = vunpack.c.l.b16 %v1334
          %v1401 = vunpack.c.h.b16 %v1334
          %v1402 = vunpack.c.l.b16 %v1335
          %v1403 = vunpack.c.l.b16 %v1336
          %v1404 = vunpack.c.h.b16 %v1336
          %v1405 = vunpack.c.l.b16 %v1337
          %v1406 = vunpack.c.l.b16 %v1338
          %v1407 = vunpack.c.h.b16 %v1338
          %v1408 = vunpack.c.l.b16 %v1339
          %v1409 = vunpack.c.l.b16 %v1340
          %v1410 = vunpack.c.h.b16 %v1340
          %v1411 = vunpack.c.l.b16 %v1341
          %v1412 = vunpack.c.l.b16 %v1342
          %v1413 = vunpack.c.h.b16 %v1342
          %v1414 = vunpack.c.l.b16 %v1343
          %v1415 = vunpack.c.l.b16 %v1344
          %v1416 = vunpack.c.h.b16 %v1344
          %v1417 = vunpack.c.l.b16 %v1345
          %v1418 = vunpack.c.l.b16 %v1346
          %v1419 = vunpack.c.h.b16 %v1346
          %v1420 = vunpack.c.l.b16 %v1347
          %v1421 = vunpack.c.l.b16 %v1348
          %v1422 = vunpack.c.h.b16 %v1348
          %v1423 = vunpack.c.l.b16 %v1349
          %v1424 = vunpack.c.l.b16 %v1350
          %v1425 = vunpack.c.h.b16 %v1350
          %v1426 = vunpack.c.l.b16 %v1351
          %v1427 = vunpack.c.l.b16 %v1352
          %v1428 = vunpack.c.h.b16 %v1352
          %v1429 = vunpack.c.l.b16 %v1353
          %v1430 = vunpack.c.l.b16 %v1354
          %v1431 = vunpack.c.h.b16 %v1354
          %v1432 = vunpack.c.l.b16 %v1355
          %v1433 = vunpack.c.l.b16 %v1356
          %v1434 = vunpack.c.h.b16 %v1356
          %v1435 = vunpack.c.l.b16 %v1357
          %v1436 = vunpack.c.l.b16 %v1358
          %v1437 = vunpack.c.h.b16 %v1358
          %v1438 = vunpack.c.l.b16 %v1359
          %v1439 = vunpack.c.l.b16 %v1360
          %v1440 = vunpack.c.h.b16 %v1360
          %v1441 = vunpack.c.l.b16 %v1361
          %v1442 = vpack.c.b16 %v1397, %v1394
          %v1443 = vpack.c.b16 %v1398, %v1395
          %v1444 = vpack.c.b16 %v1399, %v1396
          %v1445 = vpack.c.b16 %v1403, %v1400
          %v1446 = vpack.c.b16 %v1404, %v1401
          %v1447 = vpack.c.b16 %v1405, %v1402
          %v1448 = vpack.c.b16 %v1409, %v1406
          %v1449 = vpack.c.b16 %v1410, %v1407
          %v1450 = vpack.c.b16 %v1411, %v1408
          %v1451 = vpack.c.b16 %v1415, %v1412
          %v1452 = vpack.c.b16 %v1416, %v1413
          %v1453 = vpack.c.b16 %v1417, %v1414
          %v1454 = vpack.c.b16 %v1421, %v1418
          %v1455 = vpack.c.b16 %v1422, %v1419
          %v1456 = vpack.c.b16 %v1423, %v1420
          %v1457 = vpack.c.b16 %v1427, %v1424
          %v1458 = vpack.c.b16 %v1428, %v1425
          %v1459 = vpack.c.b16 %v1429, %v1426
          %v1460 = vpack.c.b16 %v1433, %v1430
          %v1461 = vpack.c.b16 %v1434, %v1431
          %v1462 = vpack.c.b16 %v1435, %v1432
          %v1463 = vpack.c.b16 %v1439, %v1436
          %v1464 = vpack.c.b16 %v1440, %v1437
          %v1465 = vpack.c.b16 %v1441, %v1438
          %1490 = vmatprep.subr.bf16.mxu0 %v1443
          %1491 = vmatpush1.bf16.msra.mxu0 %v1442
          %1492 = vmatprep.subr.bf16.mxu0 %v1446
          %1493 = vmatpush1.bf16.msra.mxu0 %v1445
          %1494 = vmatprep.subr.bf16.mxu0 %v1449
          %1495 = vmatpush1.bf16.msra.mxu0 %v1448
          %1496 = vmatprep.subr.bf16.mxu0 %v1452
          %1497 = vmatpush1.bf16.msra.mxu0 %v1451
          %1498 = vmatprep.subr.bf16.mxu0 %v1455
          %1499 = vmatpush1.bf16.msra.mxu0 %v1454
          %1500 = vmatprep.subr.bf16.mxu0 %v1458
          %1501 = vmatpush1.bf16.msra.mxu0 %v1457
          %1502 = vmatprep.subr.bf16.mxu0 %v1461
          %1503 = vmatpush1.bf16.msra.mxu0 %v1460
          %1504 = vmatprep.subr.bf16.mxu0 %v1464
          %1505 = vmatpush1.bf16.msra.mxu0 %v1463
          %1506 = vmatprep.subr.bf16.mxu0 0
          %1507 = vmatpush1.bf16.msra.mxu0 0
          %1508 = vmatprep.subr.bf16.mxu0 0
          %1509 = vmatpush1.bf16.msra.mxu0 0
          %1510 = vmatprep.subr.bf16.mxu0 0
          %1511 = vmatpush1.bf16.msra.mxu0 0
          %1512 = vmatprep.subr.bf16.mxu0 0
          %1513 = vmatpush1.bf16.msra.mxu0 0
          %1514 = vmatprep.subr.bf16.mxu0 0
          %1515 = vmatpush1.bf16.msra.mxu0 0
          %1516 = vmatprep.subr.bf16.mxu0 0
          %1517 = vmatpush1.bf16.msra.mxu0 0
          %1518 = vmatprep.subr.bf16.mxu0 0
          %1519 = vmatpush1.bf16.msra.mxu0 0
          %1520 = vmatprep.subr.bf16.mxu0 0
          %1521 = vmatpush1.bf16.msra.mxu0 0
          %1522 = vmatprep.mubr.bf16.mxu0 0
          %1523 = vmatmul.mubr.bf16.gmra.mrb[0].mxu0 %v1329
          %v1524 = vpop.f32.mrb[0].mxu0
          %v1525 = vadd.f32 0.0, %v1524
          %v1526 = vpop.f32.mrb[0].mxu0
          %v1527 = vadd.f32 0.0, %v1526
          %v1528 = vpop.f32.mrb[0].mxu0
          %v1529 = vpop.f32.mrb[0].mxu0
          %1530 = vdwg.mxu0
          %1531 = vmatprep.subr.bf16.mxu0 0
          %1532 = vmatpush1.bf16.msra.mxu0 %v1444
          %1533 = vmatprep.subr.bf16.mxu0 0
          %1534 = vmatpush1.bf16.msra.mxu0 %v1447
          %1535 = vmatprep.subr.bf16.mxu0 0
          %1536 = vmatpush1.bf16.msra.mxu0 %v1450
          %1537 = vmatprep.subr.bf16.mxu0 0
          %1538 = vmatpush1.bf16.msra.mxu0 %v1453
          %1539 = vmatprep.subr.bf16.mxu0 0
          %1540 = vmatpush1.bf16.msra.mxu0 %v1456
          %1541 = vmatprep.subr.bf16.mxu0 0
          %1542 = vmatpush1.bf16.msra.mxu0 %v1459
          %1543 = vmatprep.subr.bf16.mxu0 0
          %1544 = vmatpush1.bf16.msra.mxu0 %v1462
          %1545 = vmatprep.subr.bf16.mxu0 0
          %1546 = vmatpush1.bf16.msra.mxu0 %v1465
          %1547 = vmatprep.subr.bf16.mxu0 0
          %1548 = vmatpush1.bf16.msra.mxu0 0
          %1549 = vmatprep.subr.bf16.mxu0 0
          %1550 = vmatpush1.bf16.msra.mxu0 0
          %1551 = vmatprep.subr.bf16.mxu0 0
          %1552 = vmatpush1.bf16.msra.mxu0 0
          %1553 = vmatprep.subr.bf16.mxu0 0
          %1554 = vmatpush1.bf16.msra.mxu0 0
          %1555 = vmatprep.subr.bf16.mxu0 0
          %1556 = vmatpush1.bf16.msra.mxu0 0
          %1557 = vmatprep.subr.bf16.mxu0 0
          %1558 = vmatpush1.bf16.msra.mxu0 0
          %1559 = vmatprep.subr.bf16.mxu0 0
          %1560 = vmatpush1.bf16.msra.mxu0 0
          %1561 = vmatprep.subr.bf16.mxu0 0
          %1562 = vmatpush1.bf16.msra.mxu0 0
          %1563 = vmatprep.mubr.bf16.mxu0 0
          %1564 = vmatmul.mubr.bf16.gmra.mrb[0].mxu0 %v1329
          %v1565 = vpop.f32.mrb[0].mxu0
          %v1566 = vadd.f32 0.0, %v1565
          %v1567 = vpop.f32.mrb[0].mxu0
          %v1568 = vpop.f32.mrb[0].mxu0
          %v1569 = vpop.f32.mrb[0].mxu0
          %1570 = vdwg.mxu0
          %v1571 = vadd.f32 %v1326, %v1525
          %v1572 = vxor.u32 %v1571, 2147483648
          %v1573 = vmul.f32 %v1572, 1.442695
          %v1574 = vpow.pop %v1573
          %v1575 = vadd.f32 %v1574, 1.0
          %v1576 = vrcp.pop %v1575
          %v1577 = vmul.f32 1.0, %v1576
          %v1578 = vadd.f32 %v1327, %v1527
          %v1579 = vxor.u32 %v1578, 2147483648
          %v1580 = vmul.f32 %v1579, 1.442695
          %v1581 = vpow.pop %v1580
          %v1582 = vadd.f32 %v1581, 1.0
          %v1583 = vrcp.pop %v1582
          %v1584 = vmul.f32 1.0, %v1583
          %v1585 = vadd.f32 %v1566, %v508
          %v1586 = vmul.f32 %v1577, %v1585
          %v1587 = vadd.f32 %v1328, %v1586
          %v1588 = vtanh.pop %v1587
          %v1589 = vsub.f32 1.0, %v1584
          %v1590 = vmul.f32 %v1589, %v1588
          %v1591 = vmul.f32 %v1584, %v1320
          %v1592 = vadd.f32 %v1590, %v1591
          %s1593 = sadd.s32 %s502, 3
          %s1594 = smul.u32 %s1593, 8
          %s1595 = scalar_lea.vmem [#allocation3], %s1594
          %1596 = vst [vmem:[%s1595] sm:$0xff] %v1592
          %s1597 = scalar_lea.vmem %s266, 96 [#allocation4]
          %v1598 = vld [vmem:[%s1597] sm:$0xff]
          %v1599 = vld [vmem:[%s1597 + $0x8] sm:$0xff]
          %v1600 = vld [vmem:[%s1597 + $0x10] sm:$0xff]
          %v1601 = vpack.c.bf16 %v1592, %v1592
          %v1602 = vld [vmem:[#allocation7] sm:$0xff]
          %v1603 = vld [vmem:[#allocation7 + $0x8] sm:$0xf]
          %v1604 = vld [vmem:[#allocation7 + $0xc] sm:$0xff]
          %v1605 = vld [vmem:[#allocation7 + $0x14] sm:$0xf]
          %v1606 = vld [vmem:[#allocation7 + $0x18] sm:$0xff]
          %v1607 = vld [vmem:[#allocation7 + $0x20] sm:$0xf]
          %v1608 = vld [vmem:[#allocation7 + $0x24] sm:$0xff]
          %v1609 = vld [vmem:[#allocation7 + $0x2c] sm:$0xf]
          %v1610 = vld [vmem:[#allocation7 + $0x30] sm:$0xff]
          %v1611 = vld [vmem:[#allocation7 + $0x38] sm:$0xf]
          %v1612 = vld [vmem:[#allocation7 + $0x3c] sm:$0xff]
          %v1613 = vld [vmem:[#allocation7 + $0x44] sm:$0xf]
          %v1614 = vld [vmem:[#allocation7 + $0x48] sm:$0xff]
          %v1615 = vld [vmem:[#allocation7 + $0x50] sm:$0xf]
          %v1616 = vld [vmem:[#allocation7 + $0x54] sm:$0xff]
          %v1617 = vld [vmem:[#allocation7 + $0x5c] sm:$0xf]
          %v1618 = vld [vmem:[#allocation7 + $0x60] sm:$0xff]
          %v1619 = vld [vmem:[#allocation7 + $0x68] sm:$0xf]
          %v1620 = vld [vmem:[#allocation7 + $0x6c] sm:$0xff]
          %v1621 = vld [vmem:[#allocation7 + $0x74] sm:$0xf]
          %v1622 = vld [vmem:[#allocation7 + $0x78] sm:$0xff]
          %v1623 = vld [vmem:[#allocation7 + $0x80] sm:$0xf]
          %v1624 = vld [vmem:[#allocation7 + $0x84] sm:$0xff]
          %v1625 = vld [vmem:[#allocation7 + $0x8c] sm:$0xf]
          %v1626 = vld [vmem:[#allocation7 + $0x90] sm:$0xff]
          %v1627 = vld [vmem:[#allocation7 + $0x98] sm:$0xf]
          %v1628 = vld [vmem:[#allocation7 + $0x9c] sm:$0xff]
          %v1629 = vld [vmem:[#allocation7 + $0xa4] sm:$0xf]
          %v1630 = vld [vmem:[#allocation7 + $0xa8] sm:$0xff]
          %v1631 = vld [vmem:[#allocation7 + $0xb0] sm:$0xf]
          %v1632 = vld [vmem:[#allocation7 + $0xb4] sm:$0xff]
          %v1633 = vld [vmem:[#allocation7 + $0xbc] sm:$0xf]
          %v1666 = vunpack.c.l.b16 %v1602
          %v1667 = vunpack.c.h.b16 %v1602
          %v1668 = vunpack.c.l.b16 %v1603
          %v1669 = vunpack.c.l.b16 %v1604
          %v1670 = vunpack.c.h.b16 %v1604
          %v1671 = vunpack.c.l.b16 %v1605
          %v1672 = vunpack.c.l.b16 %v1606
          %v1673 = vunpack.c.h.b16 %v1606
          %v1674 = vunpack.c.l.b16 %v1607
          %v1675 = vunpack.c.l.b16 %v1608
          %v1676 = vunpack.c.h.b16 %v1608
          %v1677 = vunpack.c.l.b16 %v1609
          %v1678 = vunpack.c.l.b16 %v1610
          %v1679 = vunpack.c.h.b16 %v1610
          %v1680 = vunpack.c.l.b16 %v1611
          %v1681 = vunpack.c.l.b16 %v1612
          %v1682 = vunpack.c.h.b16 %v1612
          %v1683 = vunpack.c.l.b16 %v1613
          %v1684 = vunpack.c.l.b16 %v1614
          %v1685 = vunpack.c.h.b16 %v1614
          %v1686 = vunpack.c.l.b16 %v1615
          %v1687 = vunpack.c.l.b16 %v1616
          %v1688 = vunpack.c.h.b16 %v1616
          %v1689 = vunpack.c.l.b16 %v1617
          %v1690 = vunpack.c.l.b16 %v1618
          %v1691 = vunpack.c.h.b16 %v1618
          %v1692 = vunpack.c.l.b16 %v1619
          %v1693 = vunpack.c.l.b16 %v1620
          %v1694 = vunpack.c.h.b16 %v1620
          %v1695 = vunpack.c.l.b16 %v1621
          %v1696 = vunpack.c.l.b16 %v1622
          %v1697 = vunpack.c.h.b16 %v1622
          %v1698 = vunpack.c.l.b16 %v1623
          %v1699 = vunpack.c.l.b16 %v1624
          %v1700 = vunpack.c.h.b16 %v1624
          %v1701 = vunpack.c.l.b16 %v1625
          %v1702 = vunpack.c.l.b16 %v1626
          %v1703 = vunpack.c.h.b16 %v1626
          %v1704 = vunpack.c.l.b16 %v1627
          %v1705 = vunpack.c.l.b16 %v1628
          %v1706 = vunpack.c.h.b16 %v1628
          %v1707 = vunpack.c.l.b16 %v1629
          %v1708 = vunpack.c.l.b16 %v1630
          %v1709 = vunpack.c.h.b16 %v1630
          %v1710 = vunpack.c.l.b16 %v1631
          %v1711 = vunpack.c.l.b16 %v1632
          %v1712 = vunpack.c.h.b16 %v1632
          %v1713 = vunpack.c.l.b16 %v1633
          %v1714 = vpack.c.b16 %v1669, %v1666
          %v1715 = vpack.c.b16 %v1670, %v1667
          %v1716 = vpack.c.b16 %v1671, %v1668
          %v1717 = vpack.c.b16 %v1675, %v1672
          %v1718 = vpack.c.b16 %v1676, %v1673
          %v1719 = vpack.c.b16 %v1677, %v1674
          %v1720 = vpack.c.b16 %v1681, %v1678
          %v1721 = vpack.c.b16 %v1682, %v1679
          %v1722 = vpack.c.b16 %v1683, %v1680
          %v1723 = vpack.c.b16 %v1687, %v1684
          %v1724 = vpack.c.b16 %v1688, %v1685
          %v1725 = vpack.c.b16 %v1689, %v1686
          %v1726 = vpack.c.b16 %v1693, %v1690
          %v1727 = vpack.c.b16 %v1694, %v1691
          %v1728 = vpack.c.b16 %v1695, %v1692
          %v1729 = vpack.c.b16 %v1699, %v1696
          %v1730 = vpack.c.b16 %v1700, %v1697
          %v1731 = vpack.c.b16 %v1701, %v1698
          %v1732 = vpack.c.b16 %v1705, %v1702
          %v1733 = vpack.c.b16 %v1706, %v1703
          %v1734 = vpack.c.b16 %v1707, %v1704
          %v1735 = vpack.c.b16 %v1711, %v1708
          %v1736 = vpack.c.b16 %v1712, %v1709
          %v1737 = vpack.c.b16 %v1713, %v1710
          %1762 = vmatprep.subr.bf16.mxu0 %v1715
          %1763 = vmatpush1.bf16.msra.mxu0 %v1714
          %1764 = vmatprep.subr.bf16.mxu0 %v1718
          %1765 = vmatpush1.bf16.msra.mxu0 %v1717
          %1766 = vmatprep.subr.bf16.mxu0 %v1721
          %1767 = vmatpush1.bf16.msra.mxu0 %v1720
          %1768 = vmatprep.subr.bf16.mxu0 %v1724
          %1769 = vmatpush1.bf16.msra.mxu0 %v1723
          %1770 = vmatprep.subr.bf16.mxu0 %v1727
          %1771 = vmatpush1.bf16.msra.mxu0 %v1726
          %1772 = vmatprep.subr.bf16.mxu0 %v1730
          %1773 = vmatpush1.bf16.msra.mxu0 %v1729
          %1774 = vmatprep.subr.bf16.mxu0 %v1733
          %1775 = vmatpush1.bf16.msra.mxu0 %v1732
          %1776 = vmatprep.subr.bf16.mxu0 %v1736
          %1777 = vmatpush1.bf16.msra.mxu0 %v1735
          %1778 = vmatprep.subr.bf16.mxu0 0
          %1779 = vmatpush1.bf16.msra.mxu0 0
          %1780 = vmatprep.subr.bf16.mxu0 0
          %1781 = vmatpush1.bf16.msra.mxu0 0
          %1782 = vmatprep.subr.bf16.mxu0 0
          %1783 = vmatpush1.bf16.msra.mxu0 0
          %1784 = vmatprep.subr.bf16.mxu0 0
          %1785 = vmatpush1.bf16.msra.mxu0 0
          %1786 = vmatprep.subr.bf16.mxu0 0
          %1787 = vmatpush1.bf16.msra.mxu0 0
          %1788 = vmatprep.subr.bf16.mxu0 0
          %1789 = vmatpush1.bf16.msra.mxu0 0
          %1790 = vmatprep.subr.bf16.mxu0 0
          %1791 = vmatpush1.bf16.msra.mxu0 0
          %1792 = vmatprep.subr.bf16.mxu0 0
          %1793 = vmatpush1.bf16.msra.mxu0 0
          %1794 = vmatprep.mubr.bf16.mxu0 0
          %1795 = vmatmul.mubr.bf16.gmra.mrb[0].mxu0 %v1601
          %v1796 = vpop.f32.mrb[0].mxu0
          %v1797 = vadd.f32 0.0, %v1796
          %v1798 = vpop.f32.mrb[0].mxu0
          %v1799 = vadd.f32 0.0, %v1798
          %v1800 = vpop.f32.mrb[0].mxu0
          %v1801 = vpop.f32.mrb[0].mxu0
          %1802 = vdwg.mxu0
          %1803 = vmatprep.subr.bf16.mxu0 0
          %1804 = vmatpush1.bf16.msra.mxu0 %v1716
          %1805 = vmatprep.subr.bf16.mxu0 0
          %1806 = vmatpush1.bf16.msra.mxu0 %v1719
          %1807 = vmatprep.subr.bf16.mxu0 0
          %1808 = vmatpush1.bf16.msra.mxu0 %v1722
          %1809 = vmatprep.subr.bf16.mxu0 0
          %1810 = vmatpush1.bf16.msra.mxu0 %v1725
          %1811 = vmatprep.subr.bf16.mxu0 0
          %1812 = vmatpush1.bf16.msra.mxu0 %v1728
          %1813 = vmatprep.subr.bf16.mxu0 0
          %1814 = vmatpush1.bf16.msra.mxu0 %v1731
          %1815 = vmatprep.subr.bf16.mxu0 0
          %1816 = vmatpush1.bf16.msra.mxu0 %v1734
          %1817 = vmatprep.subr.bf16.mxu0 0
          %1818 = vmatpush1.bf16.msra.mxu0 %v1737
          %1819 = vmatprep.subr.bf16.mxu0 0
          %1820 = vmatpush1.bf16.msra.mxu0 0
          %1821 = vmatprep.subr.bf16.mxu0 0
          %1822 = vmatpush1.bf16.msra.mxu0 0
          %1823 = vmatprep.subr.bf16.mxu0 0
          %1824 = vmatpush1.bf16.msra.mxu0 0
          %1825 = vmatprep.subr.bf16.mxu0 0
          %1826 = vmatpush1.bf16.msra.mxu0 0
          %1827 = vmatprep.subr.bf16.mxu0 0
          %1828 = vmatpush1.bf16.msra.mxu0 0
          %1829 = vmatprep.subr.bf16.mxu0 0
          %1830 = vmatpush1.bf16.msra.mxu0 0
          %1831 = vmatprep.subr.bf16.mxu0 0
          %1832 = vmatpush1.bf16.msra.mxu0 0
          %1833 = vmatprep.subr.bf16.mxu0 0
          %1834 = vmatpush1.bf16.msra.mxu0 0
          %1835 = vmatprep.mubr.bf16.mxu0 0
          %1836 = vmatmul.mubr.bf16.gmra.mrb[0].mxu0 %v1601
          %v1837 = vpop.f32.mrb[0].mxu0
          %v1838 = vadd.f32 0.0, %v1837
          %v1839 = vpop.f32.mrb[0].mxu0
          %v1840 = vpop.f32.mrb[0].mxu0
          %v1841 = vpop.f32.mrb[0].mxu0
          %1842 = vdwg.mxu0
          %v1843 = vadd.f32 %v1598, %v1797
          %v1844 = vxor.u32 %v1843, 2147483648
          %v1845 = vmul.f32 %v1844, 1.442695
          %v1846 = vpow.pop %v1845
          %v1847 = vadd.f32 %v1846, 1.0
          %v1848 = vrcp.pop %v1847
          %v1849 = vmul.f32 1.0, %v1848
          %v1850 = vadd.f32 %v1599, %v1799
          %v1851 = vxor.u32 %v1850, 2147483648
          %v1852 = vmul.f32 %v1851, 1.442695
          %v1853 = vpow.pop %v1852
          %v1854 = vadd.f32 %v1853, 1.0
          %v1855 = vrcp.pop %v1854
          %v1856 = vmul.f32 1.0, %v1855
          %v1857 = vadd.f32 %v1838, %v508
          %v1858 = vmul.f32 %v1849, %v1857
          %v1859 = vadd.f32 %v1600, %v1858
          %v1860 = vtanh.pop %v1859
          %v1861 = vsub.f32 1.0, %v1856
          %v1862 = vmul.f32 %v1861, %v1860
          %v1863 = vmul.f32 %v1856, %v1592
          %v1864 = vadd.f32 %v1862, %v1863
          %s1865 = sadd.s32 %s502, 4
          %s1866 = smul.u32 %s1865, 8
          %s1867 = scalar_lea.vmem [#allocation3], %s1866
          %1868 = vst [vmem:[%s1867] sm:$0xff] %v1864
          %s1869 = scalar_lea.vmem %s266, 120 [#allocation4]
          %v1870 = vld [vmem:[%s1869] sm:$0xff]
          %v1871 = vld [vmem:[%s1869 + $0x8] sm:$0xff]
          %v1872 = vld [vmem:[%s1869 + $0x10] sm:$0xff]
          %v1873 = vpack.c.bf16 %v1864, %v1864
          %v1874 = vld [vmem:[#allocation7] sm:$0xff]
          %v1875 = vld [vmem:[#allocation7 + $0x8] sm:$0xf]
          %v1876 = vld [vmem:[#allocation7 + $0xc] sm:$0xff]
          %v1877 = vld [vmem:[#allocation7 + $0x14] sm:$0xf]
          %v1878 = vld [vmem:[#allocation7 + $0x18] sm:$0xff]
          %v1879 = vld [vmem:[#allocation7 + $0x20] sm:$0xf]
          %v1880 = vld [vmem:[#allocation7 + $0x24] sm:$0xff]
          %v1881 = vld [vmem:[#allocation7 + $0x2c] sm:$0xf]
          %v1882 = vld [vmem:[#allocation7 + $0x30] sm:$0xff]
          %v1883 = vld [vmem:[#allocation7 + $0x38] sm:$0xf]
          %v1884 = vld [vmem:[#allocation7 + $0x3c] sm:$0xff]
          %v1885 = vld [vmem:[#allocation7 + $0x44] sm:$0xf]
          %v1886 = vld [vmem:[#allocation7 + $0x48] sm:$0xff]
          %v1887 = vld [vmem:[#allocation7 + $0x50] sm:$0xf]
          %v1888 = vld [vmem:[#allocation7 + $0x54] sm:$0xff]
          %v1889 = vld [vmem:[#allocation7 + $0x5c] sm:$0xf]
          %v1890 = vld [vmem:[#allocation7 + $0x60] sm:$0xff]
          %v1891 = vld [vmem:[#allocation7 + $0x68] sm:$0xf]
          %v1892 = vld [vmem:[#allocation7 + $0x6c] sm:$0xff]
          %v1893 = vld [vmem:[#allocation7 + $0x74] sm:$0xf]
          %v1894 = vld [vmem:[#allocation7 + $0x78] sm:$0xff]
          %v1895 = vld [vmem:[#allocation7 + $0x80] sm:$0xf]
          %v1896 = vld [vmem:[#allocation7 + $0x84] sm:$0xff]
          %v1897 = vld [vmem:[#allocation7 + $0x8c] sm:$0xf]
          %v1898 = vld [vmem:[#allocation7 + $0x90] sm:$0xff]
          %v1899 = vld [vmem:[#allocation7 + $0x98] sm:$0xf]
          %v1900 = vld [vmem:[#allocation7 + $0x9c] sm:$0xff]
          %v1901 = vld [vmem:[#allocation7 + $0xa4] sm:$0xf]
          %v1902 = vld [vmem:[#allocation7 + $0xa8] sm:$0xff]
          %v1903 = vld [vmem:[#allocation7 + $0xb0] sm:$0xf]
          %v1904 = vld [vmem:[#allocation7 + $0xb4] sm:$0xff]
          %v1905 = vld [vmem:[#allocation7 + $0xbc] sm:$0xf]
          %v1938 = vunpack.c.l.b16 %v1874
          %v1939 = vunpack.c.h.b16 %v1874
          %v1940 = vunpack.c.l.b16 %v1875
          %v1941 = vunpack.c.l.b16 %v1876
          %v1942 = vunpack.c.h.b16 %v1876
          %v1943 = vunpack.c.l.b16 %v1877
          %v1944 = vunpack.c.l.b16 %v1878
          %v1945 = vunpack.c.h.b16 %v1878
          %v1946 = vunpack.c.l.b16 %v1879
          %v1947 = vunpack.c.l.b16 %v1880
          %v1948 = vunpack.c.h.b16 %v1880
          %v1949 = vunpack.c.l.b16 %v1881
          %v1950 = vunpack.c.l.b16 %v1882
          %v1951 = vunpack.c.h.b16 %v1882
          %v1952 = vunpack.c.l.b16 %v1883
          %v1953 = vunpack.c.l.b16 %v1884
          %v1954 = vunpack.c.h.b16 %v1884
          %v1955 = vunpack.c.l.b16 %v1885
          %v1956 = vunpack.c.l.b16 %v1886
          %v1957 = vunpack.c.h.b16 %v1886
          %v1958 = vunpack.c.l.b16 %v1887
          %v1959 = vunpack.c.l.b16 %v1888
          %v1960 = vunpack.c.h.b16 %v1888
          %v1961 = vunpack.c.l.b16 %v1889
          %v1962 = vunpack.c.l.b16 %v1890
          %v1963 = vunpack.c.h.b16 %v1890
          %v1964 = vunpack.c.l.b16 %v1891
          %v1965 = vunpack.c.l.b16 %v1892
          %v1966 = vunpack.c.h.b16 %v1892
          %v1967 = vunpack.c.l.b16 %v1893
          %v1968 = vunpack.c.l.b16 %v1894
          %v1969 = vunpack.c.h.b16 %v1894
          %v1970 = vunpack.c.l.b16 %v1895
          %v1971 = vunpack.c.l.b16 %v1896
          %v1972 = vunpack.c.h.b16 %v1896
          %v1973 = vunpack.c.l.b16 %v1897
          %v1974 = vunpack.c.l.b16 %v1898
          %v1975 = vunpack.c.h.b16 %v1898
          %v1976 = vunpack.c.l.b16 %v1899
          %v1977 = vunpack.c.l.b16 %v1900
          %v1978 = vunpack.c.h.b16 %v1900
          %v1979 = vunpack.c.l.b16 %v1901
          %v1980 = vunpack.c.l.b16 %v1902
          %v1981 = vunpack.c.h.b16 %v1902
          %v1982 = vunpack.c.l.b16 %v1903
          %v1983 = vunpack.c.l.b16 %v1904
          %v1984 = vunpack.c.h.b16 %v1904
          %v1985 = vunpack.c.l.b16 %v1905
          %v1986 = vpack.c.b16 %v1941, %v1938
          %v1987 = vpack.c.b16 %v1942, %v1939
          %v1988 = vpack.c.b16 %v1943, %v1940
          %v1989 = vpack.c.b16 %v1947, %v1944
          %v1990 = vpack.c.b16 %v1948, %v1945
          %v1991 = vpack.c.b16 %v1949, %v1946
          %v1992 = vpack.c.b16 %v1953, %v1950
          %v1993 = vpack.c.b16 %v1954, %v1951
          %v1994 = vpack.c.b16 %v1955, %v1952
          %v1995 = vpack.c.b16 %v1959, %v1956
          %v1996 = vpack.c.b16 %v1960, %v1957
          %v1997 = vpack.c.b16 %v1961, %v1958
          %v1998 = vpack.c.b16 %v1965, %v1962
          %v1999 = vpack.c.b16 %v1966, %v1963
          %v2000 = vpack.c.b16 %v1967, %v1964
          %v2001 = vpack.c.b16 %v1971, %v1968
          %v2002 = vpack.c.b16 %v1972, %v1969
          %v2003 = vpack.c.b16 %v1973, %v1970
          %v2004 = vpack.c.b16 %v1977, %v1974
          %v2005 = vpack.c.b16 %v1978, %v1975
          %v2006 = vpack.c.b16 %v1979, %v1976
          %v2007 = vpack.c.b16 %v1983, %v1980
          %v2008 = vpack.c.b16 %v1984, %v1981
          %v2009 = vpack.c.b16 %v1985, %v1982
          %2034 = vmatprep.subr.bf16.mxu0 %v1987
          %2035 = vmatpush1.bf16.msra.mxu0 %v1986
          %2036 = vmatprep.subr.bf16.mxu0 %v1990
          %2037 = vmatpush1.bf16.msra.mxu0 %v1989
          %2038 = vmatprep.subr.bf16.mxu0 %v1993
          %2039 = vmatpush1.bf16.msra.mxu0 %v1992
          %2040 = vmatprep.subr.bf16.mxu0 %v1996
          %2041 = vmatpush1.bf16.msra.mxu0 %v1995
          %2042 = vmatprep.subr.bf16.mxu0 %v1999
          %2043 = vmatpush1.bf16.msra.mxu0 %v1998
          %2044 = vmatprep.subr.bf16.mxu0 %v2002
          %2045 = vmatpush1.bf16.msra.mxu0 %v2001
          %2046 = vmatprep.subr.bf16.mxu0 %v2005
          %2047 = vmatpush1.bf16.msra.mxu0 %v2004
          %2048 = vmatprep.subr.bf16.mxu0 %v2008
          %2049 = vmatpush1.bf16.msra.mxu0 %v2007
          %2050 = vmatprep.subr.bf16.mxu0 0
          %2051 = vmatpush1.bf16.msra.mxu0 0
          %2052 = vmatprep.subr.bf16.mxu0 0
          %2053 = vmatpush1.bf16.msra.mxu0 0
          %2054 = vmatprep.subr.bf16.mxu0 0
          %2055 = vmatpush1.bf16.msra.mxu0 0
          %2056 = vmatprep.subr.bf16.mxu0 0
          %2057 = vmatpush1.bf16.msra.mxu0 0
          %2058 = vmatprep.subr.bf16.mxu0 0
          %2059 = vmatpush1.bf16.msra.mxu0 0
          %2060 = vmatprep.subr.bf16.mxu0 0
          %2061 = vmatpush1.bf16.msra.mxu0 0
          %2062 = vmatprep.subr.bf16.mxu0 0
          %2063 = vmatpush1.bf16.msra.mxu0 0
          %2064 = vmatprep.subr.bf16.mxu0 0
          %2065 = vmatpush1.bf16.msra.mxu0 0
          %2066 = vmatprep.mubr.bf16.mxu0 0
          %2067 = vmatmul.mubr.bf16.gmra.mrb[0].mxu0 %v1873
          %v2068 = vpop.f32.mrb[0].mxu0
          %v2069 = vadd.f32 0.0, %v2068
          %v2070 = vpop.f32.mrb[0].mxu0
          %v2071 = vadd.f32 0.0, %v2070
          %v2072 = vpop.f32.mrb[0].mxu0
          %v2073 = vpop.f32.mrb[0].mxu0
          %2074 = vdwg.mxu0
          %2075 = vmatprep.subr.bf16.mxu0 0
          %2076 = vmatpush1.bf16.msra.mxu0 %v1988
          %2077 = vmatprep.subr.bf16.mxu0 0
          %2078 = vmatpush1.bf16.msra.mxu0 %v1991
          %2079 = vmatprep.subr.bf16.mxu0 0
          %2080 = vmatpush1.bf16.msra.mxu0 %v1994
          %2081 = vmatprep.subr.bf16.mxu0 0
          %2082 = vmatpush1.bf16.msra.mxu0 %v1997
          %2083 = vmatprep.subr.bf16.mxu0 0
          %2084 = vmatpush1.bf16.msra.mxu0 %v2000
          %2085 = vmatprep.subr.bf16.mxu0 0
          %2086 = vmatpush1.bf16.msra.mxu0 %v2003
          %2087 = vmatprep.subr.bf16.mxu0 0
          %2088 = vmatpush1.bf16.msra.mxu0 %v2006
          %2089 = vmatprep.subr.bf16.mxu0 0
          %2090 = vmatpush1.bf16.msra.mxu0 %v2009
          %2091 = vmatprep.subr.bf16.mxu0 0
          %2092 = vmatpush1.bf16.msra.mxu0 0
          %2093 = vmatprep.subr.bf16.mxu0 0
          %2094 = vmatpush1.bf16.msra.mxu0 0
          %2095 = vmatprep.subr.bf16.mxu0 0
          %2096 = vmatpush1.bf16.msra.mxu0 0
          %2097 = vmatprep.subr.bf16.mxu0 0
          %2098 = vmatpush1.bf16.msra.mxu0 0
          %2099 = vmatprep.subr.bf16.mxu0 0
          %2100 = vmatpush1.bf16.msra.mxu0 0
          %2101 = vmatprep.subr.bf16.mxu0 0
          %2102 = vmatpush1.bf16.msra.mxu0 0
          %2103 = vmatprep.subr.bf16.mxu0 0
          %2104 = vmatpush1.bf16.msra.mxu0 0
          %2105 = vmatprep.subr.bf16.mxu0 0
          %2106 = vmatpush1.bf16.msra.mxu0 0
          %2107 = vmatprep.mubr.bf16.mxu0 0
          %2108 = vmatmul.mubr.bf16.gmra.mrb[0].mxu0 %v1873
          %v2109 = vpop.f32.mrb[0].mxu0
          %v2110 = vadd.f32 0.0, %v2109
          %v2111 = vpop.f32.mrb[0].mxu0
          %v2112 = vpop.f32.mrb[0].mxu0
          %v2113 = vpop.f32.mrb[0].mxu0
          %2114 = vdwg.mxu0
          %v2115 = vadd.f32 %v1870, %v2069
          %v2116 = vxor.u32 %v2115, 2147483648
          %v2117 = vmul.f32 %v2116, 1.442695
          %v2118 = vpow.pop %v2117
          %v2119 = vadd.f32 %v2118, 1.0
          %v2120 = vrcp.pop %v2119
          %v2121 = vmul.f32 1.0, %v2120
          %v2122 = vadd.f32 %v1871, %v2071
          %v2123 = vxor.u32 %v2122, 2147483648
          %v2124 = vmul.f32 %v2123, 1.442695
          %v2125 = vpow.pop %v2124
          %v2126 = vadd.f32 %v2125, 1.0
          %v2127 = vrcp.pop %v2126
          %v2128 = vmul.f32 1.0, %v2127
          %v2129 = vadd.f32 %v2110, %v508
          %v2130 = vmul.f32 %v2121, %v2129
          %v2131 = vadd.f32 %v1872, %v2130
          %v2132 = vtanh.pop %v2131
          %v2133 = vsub.f32 1.0, %v2128
          %v2134 = vmul.f32 %v2133, %v2132
          %v2135 = vmul.f32 %v2128, %v1864
          %v2136 = vadd.f32 %v2134, %v2135
          %s2137 = sadd.s32 %s502, 5
          %s2138 = smul.u32 %s2137, 8
          %s2139 = scalar_lea.vmem [#allocation3], %s2138
          %2140 = vst [vmem:[%s2139] sm:$0xff] %v2136
          %s2141 = scalar_lea.vmem %s266, 144 [#allocation4]
          %v2142 = vld [vmem:[%s2141] sm:$0xff]
          %v2143 = vld [vmem:[%s2141 + $0x8] sm:$0xff]
          %v2144 = vld [vmem:[%s2141 + $0x10] sm:$0xff]
          %v2145 = vpack.c.bf16 %v2136, %v2136
          %v2146 = vld [vmem:[#allocation7] sm:$0xff]
          %v2147 = vld [vmem:[#allocation7 + $0x8] sm:$0xf]
          %v2148 = vld [vmem:[#allocation7 + $0xc] sm:$0xff]
          %v2149 = vld [vmem:[#allocation7 + $0x14] sm:$0xf]
          %v2150 = vld [vmem:[#allocation7 + $0x18] sm:$0xff]
          %v2151 = vld [vmem:[#allocation7 + $0x20] sm:$0xf]
          %v2152 = vld [vmem:[#allocation7 + $0x24] sm:$0xff]
          %v2153 = vld [vmem:[#allocation7 + $0x2c] sm:$0xf]
          %v2154 = vld [vmem:[#allocation7 + $0x30] sm:$0xff]
          %v2155 = vld [vmem:[#allocation7 + $0x38] sm:$0xf]
          %v2156 = vld [vmem:[#allocation7 + $0x3c] sm:$0xff]
          %v2157 = vld [vmem:[#allocation7 + $0x44] sm:$0xf]
          %v2158 = vld [vmem:[#allocation7 + $0x48] sm:$0xff]
          %v2159 = vld [vmem:[#allocation7 + $0x50] sm:$0xf]
          %v2160 = vld [vmem:[#allocation7 + $0x54] sm:$0xff]
          %v2161 = vld [vmem:[#allocation7 + $0x5c] sm:$0xf]
          %v2162 = vld [vmem:[#allocation7 + $0x60] sm:$0xff]
          %v2163 = vld [vmem:[#allocation7 + $0x68] sm:$0xf]
          %v2164 = vld [vmem:[#allocation7 + $0x6c] sm:$0xff]
          %v2165 = vld [vmem:[#allocation7 + $0x74] sm:$0xf]
          %v2166 = vld [vmem:[#allocation7 + $0x78] sm:$0xff]
          %v2167 = vld [vmem:[#allocation7 + $0x80] sm:$0xf]
          %v2168 = vld [vmem:[#allocation7 + $0x84] sm:$0xff]
          %v2169 = vld [vmem:[#allocation7 + $0x8c] sm:$0xf]
          %v2170 = vld [vmem:[#allocation7 + $0x90] sm:$0xff]
          %v2171 = vld [vmem:[#allocation7 + $0x98] sm:$0xf]
          %v2172 = vld [vmem:[#allocation7 + $0x9c] sm:$0xff]
          %v2173 = vld [vmem:[#allocation7 + $0xa4] sm:$0xf]
          %v2174 = vld [vmem:[#allocation7 + $0xa8] sm:$0xff]
          %v2175 = vld [vmem:[#allocation7 + $0xb0] sm:$0xf]
          %v2176 = vld [vmem:[#allocation7 + $0xb4] sm:$0xff]
          %v2177 = vld [vmem:[#allocation7 + $0xbc] sm:$0xf]
          %v2210 = vunpack.c.l.b16 %v2146
          %v2211 = vunpack.c.h.b16 %v2146
          %v2212 = vunpack.c.l.b16 %v2147
          %v2213 = vunpack.c.l.b16 %v2148
          %v2214 = vunpack.c.h.b16 %v2148
          %v2215 = vunpack.c.l.b16 %v2149
          %v2216 = vunpack.c.l.b16 %v2150
          %v2217 = vunpack.c.h.b16 %v2150
          %v2218 = vunpack.c.l.b16 %v2151
          %v2219 = vunpack.c.l.b16 %v2152
          %v2220 = vunpack.c.h.b16 %v2152
          %v2221 = vunpack.c.l.b16 %v2153
          %v2222 = vunpack.c.l.b16 %v2154
          %v2223 = vunpack.c.h.b16 %v2154
          %v2224 = vunpack.c.l.b16 %v2155
          %v2225 = vunpack.c.l.b16 %v2156
          %v2226 = vunpack.c.h.b16 %v2156
          %v2227 = vunpack.c.l.b16 %v2157
          %v2228 = vunpack.c.l.b16 %v2158
          %v2229 = vunpack.c.h.b16 %v2158
          %v2230 = vunpack.c.l.b16 %v2159
          %v2231 = vunpack.c.l.b16 %v2160
          %v2232 = vunpack.c.h.b16 %v2160
          %v2233 = vunpack.c.l.b16 %v2161
          %v2234 = vunpack.c.l.b16 %v2162
          %v2235 = vunpack.c.h.b16 %v2162
          %v2236 = vunpack.c.l.b16 %v2163
          %v2237 = vunpack.c.l.b16 %v2164
          %v2238 = vunpack.c.h.b16 %v2164
          %v2239 = vunpack.c.l.b16 %v2165
          %v2240 = vunpack.c.l.b16 %v2166
          %v2241 = vunpack.c.h.b16 %v2166
          %v2242 = vunpack.c.l.b16 %v2167
          %v2243 = vunpack.c.l.b16 %v2168
          %v2244 = vunpack.c.h.b16 %v2168
          %v2245 = vunpack.c.l.b16 %v2169
          %v2246 = vunpack.c.l.b16 %v2170
          %v2247 = vunpack.c.h.b16 %v2170
          %v2248 = vunpack.c.l.b16 %v2171
          %v2249 = vunpack.c.l.b16 %v2172
          %v2250 = vunpack.c.h.b16 %v2172
          %v2251 = vunpack.c.l.b16 %v2173
          %v2252 = vunpack.c.l.b16 %v2174
          %v2253 = vunpack.c.h.b16 %v2174
          %v2254 = vunpack.c.l.b16 %v2175
          %v2255 = vunpack.c.l.b16 %v2176
          %v2256 = vunpack.c.h.b16 %v2176
          %v2257 = vunpack.c.l.b16 %v2177
          %v2258 = vpack.c.b16 %v2213, %v2210
          %v2259 = vpack.c.b16 %v2214, %v2211
          %v2260 = vpack.c.b16 %v2215, %v2212
          %v2261 = vpack.c.b16 %v2219, %v2216
          %v2262 = vpack.c.b16 %v2220, %v2217
          %v2263 = vpack.c.b16 %v2221, %v2218
          %v2264 = vpack.c.b16 %v2225, %v2222
          %v2265 = vpack.c.b16 %v2226, %v2223
          %v2266 = vpack.c.b16 %v2227, %v2224
          %v2267 = vpack.c.b16 %v2231, %v2228
          %v2268 = vpack.c.b16 %v2232, %v2229
          %v2269 = vpack.c.b16 %v2233, %v2230
          %v2270 = vpack.c.b16 %v2237, %v2234
          %v2271 = vpack.c.b16 %v2238, %v2235
          %v2272 = vpack.c.b16 %v2239, %v2236
          %v2273 = vpack.c.b16 %v2243, %v2240
          %v2274 = vpack.c.b16 %v2244, %v2241
          %v2275 = vpack.c.b16 %v2245, %v2242
          %v2276 = vpack.c.b16 %v2249, %v2246
          %v2277 = vpack.c.b16 %v2250, %v2247
          %v2278 = vpack.c.b16 %v2251, %v2248
          %v2279 = vpack.c.b16 %v2255, %v2252
          %v2280 = vpack.c.b16 %v2256, %v2253
          %v2281 = vpack.c.b16 %v2257, %v2254
          %2306 = vmatprep.subr.bf16.mxu0 %v2259
          %2307 = vmatpush1.bf16.msra.mxu0 %v2258
          %2308 = vmatprep.subr.bf16.mxu0 %v2262
          %2309 = vmatpush1.bf16.msra.mxu0 %v2261
          %2310 = vmatprep.subr.bf16.mxu0 %v2265
          %2311 = vmatpush1.bf16.msra.mxu0 %v2264
          %2312 = vmatprep.subr.bf16.mxu0 %v2268
          %2313 = vmatpush1.bf16.msra.mxu0 %v2267
          %2314 = vmatprep.subr.bf16.mxu0 %v2271
          %2315 = vmatpush1.bf16.msra.mxu0 %v2270
          %2316 = vmatprep.subr.bf16.mxu0 %v2274
          %2317 = vmatpush1.bf16.msra.mxu0 %v2273
          %2318 = vmatprep.subr.bf16.mxu0 %v2277
          %2319 = vmatpush1.bf16.msra.mxu0 %v2276
          %2320 = vmatprep.subr.bf16.mxu0 %v2280
          %2321 = vmatpush1.bf16.msra.mxu0 %v2279
          %2322 = vmatprep.subr.bf16.mxu0 0
          %2323 = vmatpush1.bf16.msra.mxu0 0
          %2324 = vmatprep.subr.bf16.mxu0 0
          %2325 = vmatpush1.bf16.msra.mxu0 0
          %2326 = vmatprep.subr.bf16.mxu0 0
          %2327 = vmatpush1.bf16.msra.mxu0 0
          %2328 = vmatprep.subr.bf16.mxu0 0
          %2329 = vmatpush1.bf16.msra.mxu0 0
          %2330 = vmatprep.subr.bf16.mxu0 0
          %2331 = vmatpush1.bf16.msra.mxu0 0
          %2332 = vmatprep.subr.bf16.mxu0 0
          %2333 = vmatpush1.bf16.msra.mxu0 0
          %2334 = vmatprep.subr.bf16.mxu0 0
          %2335 = vmatpush1.bf16.msra.mxu0 0
          %2336 = vmatprep.subr.bf16.mxu0 0
          %2337 = vmatpush1.bf16.msra.mxu0 0
          %2338 = vmatprep.mubr.bf16.mxu0 0
          %2339 = vmatmul.mubr.bf16.gmra.mrb[0].mxu0 %v2145
          %v2340 = vpop.f32.mrb[0].mxu0
          %v2341 = vadd.f32 0.0, %v2340
          %v2342 = vpop.f32.mrb[0].mxu0
          %v2343 = vadd.f32 0.0, %v2342
          %v2344 = vpop.f32.mrb[0].mxu0
          %v2345 = vpop.f32.mrb[0].mxu0
          %2346 = vdwg.mxu0
          %2347 = vmatprep.subr.bf16.mxu0 0
          %2348 = vmatpush1.bf16.msra.mxu0 %v2260
          %2349 = vmatprep.subr.bf16.mxu0 0
          %2350 = vmatpush1.bf16.msra.mxu0 %v2263
          %2351 = vmatprep.subr.bf16.mxu0 0
          %2352 = vmatpush1.bf16.msra.mxu0 %v2266
          %2353 = vmatprep.subr.bf16.mxu0 0
          %2354 = vmatpush1.bf16.msra.mxu0 %v2269
          %2355 = vmatprep.subr.bf16.mxu0 0
          %2356 = vmatpush1.bf16.msra.mxu0 %v2272
          %2357 = vmatprep.subr.bf16.mxu0 0
          %2358 = vmatpush1.bf16.msra.mxu0 %v2275
          %2359 = vmatprep.subr.bf16.mxu0 0
          %2360 = vmatpush1.bf16.msra.mxu0 %v2278
          %2361 = vmatprep.subr.bf16.mxu0 0
          %2362 = vmatpush1.bf16.msra.mxu0 %v2281
          %2363 = vmatprep.subr.bf16.mxu0 0
          %2364 = vmatpush1.bf16.msra.mxu0 0
          %2365 = vmatprep.subr.bf16.mxu0 0
          %2366 = vmatpush1.bf16.msra.mxu0 0
          %2367 = vmatprep.subr.bf16.mxu0 0
          %2368 = vmatpush1.bf16.msra.mxu0 0
          %2369 = vmatprep.subr.bf16.mxu0 0
          %2370 = vmatpush1.bf16.msra.mxu0 0
          %2371 = vmatprep.subr.bf16.mxu0 0
          %2372 = vmatpush1.bf16.msra.mxu0 0
          %2373 = vmatprep.subr.bf16.mxu0 0
          %2374 = vmatpush1.bf16.msra.mxu0 0
          %2375 = vmatprep.subr.bf16.mxu0 0
          %2376 = vmatpush1.bf16.msra.mxu0 0
          %2377 = vmatprep.subr.bf16.mxu0 0
          %2378 = vmatpush1.bf16.msra.mxu0 0
          %2379 = vmatprep.mubr.bf16.mxu0 0
          %2380 = vmatmul.mubr.bf16.gmra.mrb[0].mxu0 %v2145
          %v2381 = vpop.f32.mrb[0].mxu0
          %v2382 = vadd.f32 0.0, %v2381
          %v2383 = vpop.f32.mrb[0].mxu0
          %v2384 = vpop.f32.mrb[0].mxu0
          %v2385 = vpop.f32.mrb[0].mxu0
          %2386 = vdwg.mxu0
          %v2387 = vadd.f32 %v2142, %v2341
          %v2388 = vxor.u32 %v2387, 2147483648
          %v2389 = vmul.f32 %v2388, 1.442695
          %v2390 = vpow.pop %v2389
          %v2391 = vadd.f32 %v2390, 1.0
          %v2392 = vrcp.pop %v2391
          %v2393 = vmul.f32 1.0, %v2392
          %v2394 = vadd.f32 %v2143, %v2343
          %v2395 = vxor.u32 %v2394, 2147483648
          %v2396 = vmul.f32 %v2395, 1.442695
          %v2397 = vpow.pop %v2396
          %v2398 = vadd.f32 %v2397, 1.0
          %v2399 = vrcp.pop %v2398
          %v2400 = vmul.f32 1.0, %v2399
          %v2401 = vadd.f32 %v2382, %v508
          %v2402 = vmul.f32 %v2393, %v2401
          %v2403 = vadd.f32 %v2144, %v2402
          %v2404 = vtanh.pop %v2403
          %v2405 = vsub.f32 1.0, %v2400
          %v2406 = vmul.f32 %v2405, %v2404
          %v2407 = vmul.f32 %v2400, %v2136
          %v2408 = vadd.f32 %v2406, %v2407
          %s2409 = sadd.s32 %s502, 6
          %s2410 = smul.u32 %s2409, 8
          %s2411 = scalar_lea.vmem [#allocation3], %s2410
          %2412 = vst [vmem:[%s2411] sm:$0xff] %v2408
          %s2413 = scalar_lea.vmem %s266, 168 [#allocation4]
          %v2414 = vld [vmem:[%s2413] sm:$0xff]
          %v2415 = vld [vmem:[%s2413 + $0x8] sm:$0xff]
          %v2416 = vld [vmem:[%s2413 + $0x10] sm:$0xff]
          %v2417 = vpack.c.bf16 %v2408, %v2408
          %v2418 = vld [vmem:[#allocation7] sm:$0xff]
          %v2419 = vld [vmem:[#allocation7 + $0x8] sm:$0xf]
          %v2420 = vld [vmem:[#allocation7 + $0xc] sm:$0xff]
          %v2421 = vld [vmem:[#allocation7 + $0x14] sm:$0xf]
          %v2422 = vld [vmem:[#allocation7 + $0x18] sm:$0xff]
          %v2423 = vld [vmem:[#allocation7 + $0x20] sm:$0xf]
          %v2424 = vld [vmem:[#allocation7 + $0x24] sm:$0xff]
          %v2425 = vld [vmem:[#allocation7 + $0x2c] sm:$0xf]
          %v2426 = vld [vmem:[#allocation7 + $0x30] sm:$0xff]
          %v2427 = vld [vmem:[#allocation7 + $0x38] sm:$0xf]
          %v2428 = vld [vmem:[#allocation7 + $0x3c] sm:$0xff]
          %v2429 = vld [vmem:[#allocation7 + $0x44] sm:$0xf]
          %v2430 = vld [vmem:[#allocation7 + $0x48] sm:$0xff]
          %v2431 = vld [vmem:[#allocation7 + $0x50] sm:$0xf]
          %v2432 = vld [vmem:[#allocation7 + $0x54] sm:$0xff]
          %v2433 = vld [vmem:[#allocation7 + $0x5c] sm:$0xf]
          %v2434 = vld [vmem:[#allocation7 + $0x60] sm:$0xff]
          %v2435 = vld [vmem:[#allocation7 + $0x68] sm:$0xf]
          %v2436 = vld [vmem:[#allocation7 + $0x6c] sm:$0xff]
          %v2437 = vld [vmem:[#allocation7 + $0x74] sm:$0xf]
          %v2438 = vld [vmem:[#allocation7 + $0x78] sm:$0xff]
          %v2439 = vld [vmem:[#allocation7 + $0x80] sm:$0xf]
          %v2440 = vld [vmem:[#allocation7 + $0x84] sm:$0xff]
          %v2441 = vld [vmem:[#allocation7 + $0x8c] sm:$0xf]
          %v2442 = vld [vmem:[#allocation7 + $0x90] sm:$0xff]
          %v2443 = vld [vmem:[#allocation7 + $0x98] sm:$0xf]
          %v2444 = vld [vmem:[#allocation7 + $0x9c] sm:$0xff]
          %v2445 = vld [vmem:[#allocation7 + $0xa4] sm:$0xf]
          %v2446 = vld [vmem:[#allocation7 + $0xa8] sm:$0xff]
          %v2447 = vld [vmem:[#allocation7 + $0xb0] sm:$0xf]
          %v2448 = vld [vmem:[#allocation7 + $0xb4] sm:$0xff]
          %v2449 = vld [vmem:[#allocation7 + $0xbc] sm:$0xf]
          %v2482 = vunpack.c.l.b16 %v2418
          %v2483 = vunpack.c.h.b16 %v2418
          %v2484 = vunpack.c.l.b16 %v2419
          %v2485 = vunpack.c.l.b16 %v2420
          %v2486 = vunpack.c.h.b16 %v2420
          %v2487 = vunpack.c.l.b16 %v2421
          %v2488 = vunpack.c.l.b16 %v2422
          %v2489 = vunpack.c.h.b16 %v2422
          %v2490 = vunpack.c.l.b16 %v2423
          %v2491 = vunpack.c.l.b16 %v2424
          %v2492 = vunpack.c.h.b16 %v2424
          %v2493 = vunpack.c.l.b16 %v2425
          %v2494 = vunpack.c.l.b16 %v2426
          %v2495 = vunpack.c.h.b16 %v2426
          %v2496 = vunpack.c.l.b16 %v2427
          %v2497 = vunpack.c.l.b16 %v2428
          %v2498 = vunpack.c.h.b16 %v2428
          %v2499 = vunpack.c.l.b16 %v2429
          %v2500 = vunpack.c.l.b16 %v2430
          %v2501 = vunpack.c.h.b16 %v2430
          %v2502 = vunpack.c.l.b16 %v2431
          %v2503 = vunpack.c.l.b16 %v2432
          %v2504 = vunpack.c.h.b16 %v2432
          %v2505 = vunpack.c.l.b16 %v2433
          %v2506 = vunpack.c.l.b16 %v2434
          %v2507 = vunpack.c.h.b16 %v2434
          %v2508 = vunpack.c.l.b16 %v2435
          %v2509 = vunpack.c.l.b16 %v2436
          %v2510 = vunpack.c.h.b16 %v2436
          %v2511 = vunpack.c.l.b16 %v2437
          %v2512 = vunpack.c.l.b16 %v2438
          %v2513 = vunpack.c.h.b16 %v2438
          %v2514 = vunpack.c.l.b16 %v2439
          %v2515 = vunpack.c.l.b16 %v2440
          %v2516 = vunpack.c.h.b16 %v2440
          %v2517 = vunpack.c.l.b16 %v2441
          %v2518 = vunpack.c.l.b16 %v2442
          %v2519 = vunpack.c.h.b16 %v2442
          %v2520 = vunpack.c.l.b16 %v2443
          %v2521 = vunpack.c.l.b16 %v2444
          %v2522 = vunpack.c.h.b16 %v2444
          %v2523 = vunpack.c.l.b16 %v2445
          %v2524 = vunpack.c.l.b16 %v2446
          %v2525 = vunpack.c.h.b16 %v2446
          %v2526 = vunpack.c.l.b16 %v2447
          %v2527 = vunpack.c.l.b16 %v2448
          %v2528 = vunpack.c.h.b16 %v2448
          %v2529 = vunpack.c.l.b16 %v2449
          %v2530 = vpack.c.b16 %v2485, %v2482
          %v2531 = vpack.c.b16 %v2486, %v2483
          %v2532 = vpack.c.b16 %v2487, %v2484
          %v2533 = vpack.c.b16 %v2491, %v2488
          %v2534 = vpack.c.b16 %v2492, %v2489
          %v2535 = vpack.c.b16 %v2493, %v2490
          %v2536 = vpack.c.b16 %v2497, %v2494
          %v2537 = vpack.c.b16 %v2498, %v2495
          %v2538 = vpack.c.b16 %v2499, %v2496
          %v2539 = vpack.c.b16 %v2503, %v2500
          %v2540 = vpack.c.b16 %v2504, %v2501
          %v2541 = vpack.c.b16 %v2505, %v2502
          %v2542 = vpack.c.b16 %v2509, %v2506
          %v2543 = vpack.c.b16 %v2510, %v2507
          %v2544 = vpack.c.b16 %v2511, %v2508
          %v2545 = vpack.c.b16 %v2515, %v2512
          %v2546 = vpack.c.b16 %v2516, %v2513
          %v2547 = vpack.c.b16 %v2517, %v2514
          %v2548 = vpack.c.b16 %v2521, %v2518
          %v2549 = vpack.c.b16 %v2522, %v2519
          %v2550 = vpack.c.b16 %v2523, %v2520
          %v2551 = vpack.c.b16 %v2527, %v2524
          %v2552 = vpack.c.b16 %v2528, %v2525
          %v2553 = vpack.c.b16 %v2529, %v2526
          %2578 = vmatprep.subr.bf16.mxu0 %v2531
          %2579 = vmatpush1.bf16.msra.mxu0 %v2530
          %2580 = vmatprep.subr.bf16.mxu0 %v2534
          %2581 = vmatpush1.bf16.msra.mxu0 %v2533
          %2582 = vmatprep.subr.bf16.mxu0 %v2537
          %2583 = vmatpush1.bf16.msra.mxu0 %v2536
          %2584 = vmatprep.subr.bf16.mxu0 %v2540
          %2585 = vmatpush1.bf16.msra.mxu0 %v2539
          %2586 = vmatprep.subr.bf16.mxu0 %v2543
          %2587 = vmatpush1.bf16.msra.mxu0 %v2542
          %2588 = vmatprep.subr.bf16.mxu0 %v2546
          %2589 = vmatpush1.bf16.msra.mxu0 %v2545
          %2590 = vmatprep.subr.bf16.mxu0 %v2549
          %2591 = vmatpush1.bf16.msra.mxu0 %v2548
          %2592 = vmatprep.subr.bf16.mxu0 %v2552
          %2593 = vmatpush1.bf16.msra.mxu0 %v2551
          %2594 = vmatprep.subr.bf16.mxu0 0
          %2595 = vmatpush1.bf16.msra.mxu0 0
          %2596 = vmatprep.subr.bf16.mxu0 0
          %2597 = vmatpush1.bf16.msra.mxu0 0
          %2598 = vmatprep.subr.bf16.mxu0 0
          %2599 = vmatpush1.bf16.msra.mxu0 0
          %2600 = vmatprep.subr.bf16.mxu0 0
          %2601 = vmatpush1.bf16.msra.mxu0 0
          %2602 = vmatprep.subr.bf16.mxu0 0
          %2603 = vmatpush1.bf16.msra.mxu0 0
          %2604 = vmatprep.subr.bf16.mxu0 0
          %2605 = vmatpush1.bf16.msra.mxu0 0
          %2606 = vmatprep.subr.bf16.mxu0 0
          %2607 = vmatpush1.bf16.msra.mxu0 0
          %2608 = vmatprep.subr.bf16.mxu0 0
          %2609 = vmatpush1.bf16.msra.mxu0 0
          %2610 = vmatprep.mubr.bf16.mxu0 0
          %2611 = vmatmul.mubr.bf16.gmra.mrb[0].mxu0 %v2417
          %v2612 = vpop.f32.mrb[0].mxu0
          %v2613 = vadd.f32 0.0, %v2612
          %v2614 = vpop.f32.mrb[0].mxu0
          %v2615 = vadd.f32 0.0, %v2614
          %v2616 = vpop.f32.mrb[0].mxu0
          %v2617 = vpop.f32.mrb[0].mxu0
          %2618 = vdwg.mxu0
          %2619 = vmatprep.subr.bf16.mxu0 0
          %2620 = vmatpush1.bf16.msra.mxu0 %v2532
          %2621 = vmatprep.subr.bf16.mxu0 0
          %2622 = vmatpush1.bf16.msra.mxu0 %v2535
          %2623 = vmatprep.subr.bf16.mxu0 0
          %2624 = vmatpush1.bf16.msra.mxu0 %v2538
          %2625 = vmatprep.subr.bf16.mxu0 0
          %2626 = vmatpush1.bf16.msra.mxu0 %v2541
          %2627 = vmatprep.subr.bf16.mxu0 0
          %2628 = vmatpush1.bf16.msra.mxu0 %v2544
          %2629 = vmatprep.subr.bf16.mxu0 0
          %2630 = vmatpush1.bf16.msra.mxu0 %v2547
          %2631 = vmatprep.subr.bf16.mxu0 0
          %2632 = vmatpush1.bf16.msra.mxu0 %v2550
          %2633 = vmatprep.subr.bf16.mxu0 0
          %2634 = vmatpush1.bf16.msra.mxu0 %v2553
          %2635 = vmatprep.subr.bf16.mxu0 0
          %2636 = vmatpush1.bf16.msra.mxu0 0
          %2637 = vmatprep.subr.bf16.mxu0 0
          %2638 = vmatpush1.bf16.msra.mxu0 0
          %2639 = vmatprep.subr.bf16.mxu0 0
          %2640 = vmatpush1.bf16.msra.mxu0 0
          %2641 = vmatprep.subr.bf16.mxu0 0
          %2642 = vmatpush1.bf16.msra.mxu0 0
          %2643 = vmatprep.subr.bf16.mxu0 0
          %2644 = vmatpush1.bf16.msra.mxu0 0
          %2645 = vmatprep.subr.bf16.mxu0 0
          %2646 = vmatpush1.bf16.msra.mxu0 0
          %2647 = vmatprep.subr.bf16.mxu0 0
          %2648 = vmatpush1.bf16.msra.mxu0 0
          %2649 = vmatprep.subr.bf16.mxu0 0
          %2650 = vmatpush1.bf16.msra.mxu0 0
          %2651 = vmatprep.mubr.bf16.mxu0 0
          %2652 = vmatmul.mubr.bf16.gmra.mrb[0].mxu0 %v2417
          %v2653 = vpop.f32.mrb[0].mxu0
          %v2654 = vadd.f32 0.0, %v2653
          %v2655 = vpop.f32.mrb[0].mxu0
          %v2656 = vpop.f32.mrb[0].mxu0
          %v2657 = vpop.f32.mrb[0].mxu0
          %2658 = vdwg.mxu0
          %v2659 = vadd.f32 %v2414, %v2613
          %v2660 = vxor.u32 %v2659, 2147483648
          %v2661 = vmul.f32 %v2660, 1.442695
          %v2662 = vpow.pop %v2661
          %v2663 = vadd.f32 %v2662, 1.0
          %v2664 = vrcp.pop %v2663
          %v2665 = vmul.f32 1.0, %v2664
          %v2666 = vadd.f32 %v2415, %v2615
          %v2667 = vxor.u32 %v2666, 2147483648
          %v2668 = vmul.f32 %v2667, 1.442695
          %v2669 = vpow.pop %v2668
          %v2670 = vadd.f32 %v2669, 1.0
          %v2671 = vrcp.pop %v2670
          %v2672 = vmul.f32 1.0, %v2671
          %v2673 = vadd.f32 %v2654, %v508
          %v2674 = vmul.f32 %v2665, %v2673
          %v2675 = vadd.f32 %v2416, %v2674
          %v2676 = vtanh.pop %v2675
          %v2677 = vsub.f32 1.0, %v2672
          %v2678 = vmul.f32 %v2677, %v2676
          %v2679 = vmul.f32 %v2672, %v2408
          %v2680 = vadd.f32 %v2678, %v2679
          %s2681 = sadd.s32 %s502, 7
          %s2682 = smul.u32 %s2681, 8
          %s2683 = scalar_lea.vmem [#allocation3], %s2682
          %2684 = vst [vmem:[%s2683] sm:$0xff] %v2680
          %2685 = vst [vmem:[#allocation2] sm:$0xff] %v2680
        $region64: #{tpu_custom_call.1} parent=39 // pred_fallthru
          _
        %s2686 = sand.u32 %s169, 1
        %s2687 = scalar_lea.sflag [#allocation6], %s2686
        %s2688 = sand.u32 %s169, 1
        %s2689 = smul.addr %s2688, 64
        %s2690 = scalar_lea.vmem [#allocation10], %s2689
        // Predicated region
        $region65: #{tpu_custom_call.1} parent=39 // pred_check
          %p2691 = pneg %p179
        $region66: #{tpu_custom_call.1} parent=39 // pred_check_branch
          %2693 = sbr.rel (%p2691) target = $region68
        $region67: #{tpu_custom_call.1} parent=39 // pred_region
          %p2694 = scmp.eq.s32.totalorder %s28, 0
          %s2695 = ssub.s32 %s27, 1
          %p2696 = scmp.gt.s32.totalorder %s2695, 0
          %s2697 = scalar_select %p2696, %s2695, 0
          %s2698 = scalar_select %p2694, %s2697, %s27
          %s2699 = ssub.s32 %s28, 1
          %s2700 = scalar_select %p2694, 0, %s2699
          %s2701 = smul.u32 8, %s2698
          %s2703 = ssub.s32 1024, 1024
          %2704 = vsyncadd %s2687, %s2703
          %s2705 = sadd.s32 %s2700, %s2701
          %s2706 = smul.addr %s2705, 128
          %s2707 = scalar_lea.hbm %s5, %s2706
          %s2708 = sshll.u32 %s2690, 4
          %s2709 = int_to_ptr.vmem [resolvable:$true] %s2708
          %2714 = dma.vmem_to_hbm [thread:$0]  %s2709, 1024, %s2707, %s2687, 128, 128, 8
        $region68: #{tpu_custom_call.1} parent=39 // pred_fallthru
          _
      $region40: #{tpu_custom_call.1} parent=5 // pred_fallthru
        _
      %p2715 = scmp.le.s32.totalorder 2, %s18
      // Predicated region
      $region69: #{tpu_custom_call.1} parent=5 // pred_check
        %p2716 = pneg %p2715
      $region70: #{tpu_custom_call.1} parent=5 // pred_check_branch
        %2718 = sbr.rel (%p2716) target = $region72
      $region71: #{tpu_custom_call.1} parent=5 // pred_region
        %s2719 = ssub.s32 %s18, 2
        // Predicated region
        $region73: #{tpu_custom_call.1} parent=71 // pred_check
          %p2720 = pneg %p185
        $region74: #{tpu_custom_call.1} parent=71 // pred_check_branch
          %2722 = sbr.rel (%p2720) target = $region76
        $region75: #{tpu_custom_call.1} parent=71 // pred_region
          %s2723 = sand.u32 %s170, 1
          %s2724 = scalar_lea.sflag [#allocation6], %s2723
          %s2725 = sand.u32 %s170, 1
          %s2726 = smul.addr %s2725, 64
          %s2727 = scalar_lea.vmem [#allocation10], %s2726
          %2728 = dma.done %s2724, 1024
        $region76: #{tpu_custom_call.1} parent=71 // pred_fallthru
          _
      $region72: #{tpu_custom_call.1} parent=5 // pred_fallthru
        _
    $region6: #{tpu_custom_call.1} parent=1 // loop_footer
      %s22 = sadd.s32 1, %s18
    $region7: #{tpu_custom_call.1} parent=1 // loop_footer_branch
      %17 = sbr.rel target = $region3
    $region8: #{tpu_custom_call.1} parent=1 // loop_exit
      _
    %2729 = vsyncpa [#allocation5], 1
    %s2730 = scalar_lea.sflag [#allocation5], 1
    %2731 = vsyncpa %s2730, 1
    %2732 = vsyncpa [#allocation8], 1
    %2733 = vsyncpa [#allocation6], 1
    %s2734 = scalar_lea.sflag [#allocation6], 1
    %2735 = vsyncpa %s2734, 1

</llo_original>
